<compile_context>
chip_gen: v7x
topology: tpu7x:2x2x1
jax: 0.10.0
libtpu: 0.0.40
codegen_flags: <defaults>
</compile_context>

<pallas_src>
import math
from functools import partial

import jax
import jax.numpy as jnp
from jax.experimental import pallas as pl
from jax.experimental.pallas import tpu as pltpu


# ---------------------------------------------------------------------------
# In-kernel helpers (traced inside the Pallas kernel body)
# ---------------------------------------------------------------------------
def _layer_norm(x, gamma, beta, eps=1e-3):
    # eps=1e-3 matches nn.LayerNorm(d_model, eps=0.001) in the reference module.
    mu = jnp.mean(x, axis=-1, keepdims=True)
    var = jnp.mean(jnp.square(x - mu), axis=-1, keepdims=True)
    return (x - mu) * jax.lax.rsqrt(var + eps) * gamma + beta


def _mha(xq, xkv_b, mask_i8, wq, wk, wv, fw, fb, n_heads, depth):
    """Multi-head attention.

    xq: (Tq, D) f32 query rows (residual path stays f32)
    xkv_b: (Tk, D) bf16 key/value rows (already bf16 straight from HBM)
    mask_i8: (Tq, Tk) int8 (nonzero = keep)
    wq/wk/wv/fw: (D, D) bf16 (wq pre-scaled by 1/sqrt(d_model));  fb: (1, D) f32
    returns ((Tq, D) f32, (H, Tq, Tk) f32)
    """
    Tq, D = xq.shape
    Tk = xkv_b.shape[0]

    xq_b = xq.astype(jnp.bfloat16)

    # bf16 MXU projections (contraction over full D), f32 accumulation.
    q = jnp.dot(xq_b, wq, preferred_element_type=jnp.float32)   # scale folded in wq
    k = jnp.dot(xkv_b, wk, preferred_element_type=jnp.float32)
    v = jnp.dot(xkv_b, wv, preferred_element_type=jnp.float32)

    # Split heads: (T, D) -> (H, T, depth) for the leading-batch einsums.
    qh = q.reshape(Tq, n_heads, depth).swapaxes(0, 1).astype(jnp.bfloat16)
    kh = k.reshape(Tk, n_heads, depth).swapaxes(0, 1).astype(jnp.bfloat16)
    vh = v.reshape(Tk, n_heads, depth).swapaxes(0, 1).astype(jnp.bfloat16)

    s = jnp.einsum("hqd,hkd->hqk", qh, kh,
                   preferred_element_type=jnp.float32)           # (H, Tq, Tk) f32
    keep = (mask_i8 != 0)[None, :, :]
    s = jnp.where(keep, s, -1e9)
    attn = jax.nn.softmax(s, axis=-1)        # f32; nn.Dropout(attn) is identity

    ctx = jnp.einsum("hqk,hkd->hqd", attn.astype(jnp.bfloat16), vh,
                     preferred_element_type=jnp.float32)         # (H, Tq, depth)
    x = ctx.swapaxes(0, 1).reshape(Tq, D)                        # (Tq, D) f32
    x = jnp.dot(x.astype(jnp.bfloat16), fw,
                preferred_element_type=jnp.float32) + fb
    return x, attn


# ---------------------------------------------------------------------------
# Pallas kernel: one (batch, query-tile) step of the decoder layer
# ---------------------------------------------------------------------------
def decoder_layer_kernel(
    tgtq_ref, tgtkv_ref, tmask_ref, src_ref, smask_ref,
    sa_wq, sa_wk, sa_wv, sa_fw, sa_fb,
    ca_wq, ca_wk, ca_wv, ca_fw, ca_fb,
    f1w, f1b, f2w, f2b,
    g1, b1, g2, b2, g3, b3,
    out_ref, attn_ref,
    *, n_heads, depth,
):
    xq = tgtq_ref[0]        # (TQ, D) f32  query rows of this tile (original tgt)
    xkv = tgtkv_ref[0]      # (T, D)  bf16 full tgt (self-attention K/V)
    src = src_ref[0]        # (S, D)  bf16
    tmask = tmask_ref[0]    # (TQ, T) int8
    smask = smask_ref[0]    # (TQ, S) int8

    # --- self attention + residual + norm1 ---
    sa, _ = _mha(xq, xkv, tmask,
                 sa_wq[...], sa_wk[...], sa_wv[...], sa_fw[...], sa_fb[...],
                 n_heads, depth)
    x = _layer_norm(xq + sa, g1[...], b1[...])

    # --- cross attention + residual + norm2 ---
    ca, attn = _mha(x, src, smask,
                    ca_wq[...], ca_wk[...], ca_wv[...], ca_fw[...], ca_fb[...],
                    n_heads, depth)
    x = _layer_norm(x + ca, g2[...], b2[...])

    # --- position-wise feed-forward + residual + norm3 ---
    h = jnp.dot(x.astype(jnp.bfloat16), f1w[...],
                preferred_element_type=jnp.float32) + f1b[...]
    h = jnp.maximum(h, 0.0)                                  # ReLU
    ff = jnp.dot(h.astype(jnp.bfloat16), f2w[...],
                 preferred_element_type=jnp.float32) + f2b[...]
    x = _layer_norm(x + ff, g3[...], b3[...])

    out_ref[0] = x
    attn_ref[0] = attn.astype(attn_ref.dtype)                # bf16 writeback


# ---------------------------------------------------------------------------
# Wrapper
# ---------------------------------------------------------------------------
def decoder_layer(tgt, tgt_mask, src, src_mask, weights, n_heads,
                  attn_dtype=jnp.bfloat16):
    B, T, D = tgt.shape
    S = src.shape[1]
    H = n_heads
    depth = D // n_heads
    F = weights[10].shape[1]
    inv_scale = 1.0 / math.sqrt(D)   # module uses sqrt(d_model), not sqrt(depth)

    # Query tiling: 128-row tiles; pad T up to a multiple of 128 when T >= 128
    # (padded rows/cols carry zero mask entries, outputs are sliced back).
    if T >= 128:
        TQ = 128
        T_pad = pl.cdiv(T, TQ) * TQ
    else:
        TQ = T
        T_pad = T
    NQ = T_pad // TQ

    if T_pad != T:
        pad = T_pad - T
        tgt_p = jnp.pad(tgt, ((0, 0), (0, pad), (0, 0)))
        tgt_mask_p = jnp.pad(tgt_mask, ((0, 0), (0, pad), (0, pad)))
        src_mask_p = jnp.pad(src_mask, ((0, 0), (0, pad), (0, 0)))
    else:
        tgt_p, tgt_mask_p, src_mask_p = tgt, tgt_mask, src_mask

    tgt_p = tgt_p.astype(jnp.float32)          # f32 query tiles (residual path)
    tgt_kv = tgt_p.astype(jnp.bfloat16)        # bf16 K/V copy (half the DMA)
    src_kv = src.astype(jnp.bfloat16)
    tmask_i8 = (tgt_mask_p != 0).astype(jnp.int8)
    smask_i8 = (src_mask_p != 0).astype(jnp.int8)

    (sa_wq, sa_wk, sa_wv, sa_fw, sa_fb,
     ca_wq, ca_wk, ca_wv, ca_fw, ca_fb,
     f1w, f1b, f2w, f2b,
     g1, b1, g2, b2, g3, b3) = weights

    bf = lambda a: a.astype(jnp.bfloat16)
    f32 = lambda a: a.astype(jnp.float32)
    # Fold 1/sqrt(d_model) into wq (f32 scale, then bf16 cast).
    w = [
        bf(sa_wq * inv_scale), bf(sa_wk), bf(sa_wv), bf(sa_fw), f32(sa_fb),
        bf(ca_wq * inv_scale), bf(ca_wk), bf(ca_wv), bf(ca_fw), f32(ca_fb),
        bf(f1w), f32(f1b), bf(f2w), f32(f2b),
        f32(g1), f32(b1), f32(g2), f32(b2), f32(g3), f32(b3),
    ]

    def full_spec(shape):
        nd = len(shape)
        return pl.BlockSpec(shape, lambda b, q, _nd=nd: (0,) * _nd)

    in_specs = [
        pl.BlockSpec((1, TQ, D), lambda b, q: (b, q, 0)),       # tgt query tile (f32)
        pl.BlockSpec((1, T_pad, D), lambda b, q: (b, 0, 0)),    # full tgt K/V (bf16)
        pl.BlockSpec((1, TQ, T_pad), lambda b, q: (b, q, 0)),   # tgt_mask tile (int8)
        pl.BlockSpec((1, S, D), lambda b, q: (b, 0, 0)),        # src K/V (bf16)
        pl.BlockSpec((1, TQ, S), lambda b, q: (b, q, 0)),       # src_mask tile (int8)
    ] + [full_spec(wi.shape) for wi in w]

    out_specs = [
        pl.BlockSpec((1, TQ, D), lambda b, q: (b, q, 0)),
        pl.BlockSpec((1, H, TQ, S), lambda b, q: (b, 0, q, 0)),
    ]
    out_shape = [
        jax.ShapeDtypeStruct((B, T_pad, D), jnp.float32),
        jax.ShapeDtypeStruct((B, H, T_pad, S), attn_dtype),
    ]

    # Cost hint for XLA's scheduler (2*MACs per matmul, exp count, HBM bytes).
    flops = B * (
        8 * T_pad * D * D + 4 * T_pad * T_pad * D               # self-attention
        + 4 * T_pad * D * D + 4 * S * D * D + 4 * T_pad * S * D  # cross-attention
        + 4 * T_pad * D * F)                                     # FFN
    transcendentals = B * H * T_pad * (T_pad + S)
    tensor_inputs = [tgt_p, tgt_kv, tmask_i8, src_kv, smask_i8] + w
    bytes_accessed = sum(int(a.size) * a.dtype.itemsize for a in tensor_inputs)
    bytes_accessed += B * T_pad * D * 4
    bytes_accessed += B * H * T_pad * S * jnp.dtype(attn_dtype).itemsize

    kernel = partial(decoder_layer_kernel, n_heads=n_heads, depth=depth)

    out, attn = pl.pallas_call(
        kernel,
        grid=(B, NQ),
        in_specs=in_specs,
        out_specs=out_specs,
        out_shape=out_shape,
        compiler_params=pltpu.CompilerParams(
            dimension_semantics=("parallel", "parallel"),
            vmem_limit_bytes=48 * 1024 * 1024),
        cost_estimate=pl.CostEstimate(
            flops=int(flops),
            transcendentals=int(transcendentals),
            bytes_accessed=int(bytes_accessed)),
    )(tgt_p, tgt_kv, tmask_i8, src_kv, smask_i8, *w)

    if T_pad != T:
        out = out[:, :T]
        attn = attn[:, :, :T]
    return out, attn


# ---------------------------------------------------------------------------
# Deterministic parameter construction (shapes mirror the PyTorch module)
# ---------------------------------------------------------------------------
def make_params(key, d_model, d_ff):
    ks = jax.random.split(key, 12)
    n = lambda k, shape: (0.02 * jax.random.normal(k, shape)).astype(jnp.float32)
    D, F = d_model, d_ff
    params = [
        # self-attention: wq, wk, wv (in,out), fc weight (in,out), fc bias (1,D)
        n(ks[0], (D, D)), n(ks[1], (D, D)), n(ks[2], (D, D)),
        n(ks[3], (D, D)), jnp.zeros((1, D), jnp.float32),
        # cross-attention
        n(ks[4], (D, D)), n(ks[5], (D, D)), n(ks[6], (D, D)),
        n(ks[7], (D, D)), jnp.zeros((1, D), jnp.float32),
        # FFN: fc_1 (D,F)+bias, fc_2 (F,D)+bias
        n(ks[8], (D, F)), jnp.zeros((1, F), jnp.float32),
        n(ks[9], (F, D)), jnp.zeros((1, D), jnp.float32),
        # LayerNorm 1/2/3: gamma, beta
        jnp.ones((1, D), jnp.float32), jnp.zeros((1, D), jnp.float32),
        jnp.ones((1, D), jnp.float32), jnp.zeros((1, D), jnp.float32),
        jnp.ones((1, D), jnp.float32), jnp.zeros((1, D), jnp.float32),
    ]
    return params


if __name__ == "__main__":
    B, T, S, D, H, F = 2, 8, 8, 32, 4, 64

    key = jax.random.PRNGKey(0)
    k_tgt, k_src, k_par = jax.random.split(key, 3)

    tgt = jax.random.normal(k_tgt, (B, T, D), dtype=jnp.float32)
    src = jax.random.normal(k_src, (B, S, D), dtype=jnp.float32)
    # causal mask for self-attention, all-ones (no padding) for cross-attention
    tgt_mask = jnp.broadcast_to(jnp.tril(jnp.ones((T, T), jnp.float32)), (B, T, T))
    src_mask = jnp.ones((B, T, S), jnp.float32)

    weights = make_params(k_par, D, F)

    out, attn = decoder_layer(tgt, tgt_mask, src, src_mask, weights, n_heads=H)
    jax.block_until_ready((out, attn))

    assert out.shape == (B, T, D) and attn.shape == (B, H, T, S)
    assert bool(jnp.isfinite(out).all()) and bool(jnp.isfinite(attn.astype(jnp.float32)).all())
    print("KERNEL_OK")
</pallas_src>

<mosaic_0001>
module attributes {stable_mosaic.version = 11 : i64} {
  func.func @decoder_layer_kernel(%arg0: i32, %arg1: i32, %arg2: memref<1x8x32xf32, #tpu.memory_space<vmem>>, %arg3: memref<1x8x32xbf16, #tpu.memory_space<vmem>>, %arg4: memref<1x8x8xi8, #tpu.memory_space<vmem>>, %arg5: memref<1x8x32xbf16, #tpu.memory_space<vmem>>, %arg6: memref<1x8x8xi8, #tpu.memory_space<vmem>>, %arg7: memref<32x32xbf16, #tpu.memory_space<vmem>>, %arg8: memref<32x32xbf16, #tpu.memory_space<vmem>>, %arg9: memref<32x32xbf16, #tpu.memory_space<vmem>>, %arg10: memref<32x32xbf16, #tpu.memory_space<vmem>>, %arg11: memref<1x32xf32, #tpu.memory_space<vmem>>, %arg12: memref<32x32xbf16, #tpu.memory_space<vmem>>, %arg13: memref<32x32xbf16, #tpu.memory_space<vmem>>, %arg14: memref<32x32xbf16, #tpu.memory_space<vmem>>, %arg15: memref<32x32xbf16, #tpu.memory_space<vmem>>, %arg16: memref<1x32xf32, #tpu.memory_space<vmem>>, %arg17: memref<32x64xbf16, #tpu.memory_space<vmem>>, %arg18: memref<1x64xf32, #tpu.memory_space<vmem>>, %arg19: memref<64x32xbf16, #tpu.memory_space<vmem>>, %arg20: memref<1x32xf32, #tpu.memory_space<vmem>>, %arg21: memref<1x32xf32, #tpu.memory_space<vmem>>, %arg22: memref<1x32xf32, #tpu.memory_space<vmem>>, %arg23: memref<1x32xf32, #tpu.memory_space<vmem>>, %arg24: memref<1x32xf32, #tpu.memory_space<vmem>>, %arg25: memref<1x32xf32, #tpu.memory_space<vmem>>, %arg26: memref<1x32xf32, #tpu.memory_space<vmem>>, %arg27: memref<1x8x32xf32, #tpu.memory_space<vmem>>, %arg28: memref<1x4x8x8xbf16, #tpu.memory_space<vmem>>) attributes {dimension_semantics = [#tpu.dimension_semantics<parallel>, #tpu.dimension_semantics<parallel>], iteration_bounds = array<i64: 2, 1>, scalar_prefetch = 0 : i64, scratch_operands = 0 : i64, tpu.core_type = #tpu.core_type<tc>, window_params = [{transform_indices = @transform_0, window_bounds = array<i64: 1, 8, 32>}, {transform_indices = @transform_1, window_bounds = array<i64: 1, 8, 32>}, {transform_indices = @transform_2, window_bounds = array<i64: 1, 8, 8>}, {transform_indices = @transform_3, window_bounds = array<i64: 1, 8, 32>}, {transform_indices = @transform_4, window_bounds = array<i64: 1, 8, 8>}, {pipeline_mode = #tpu.pipeline_mode<synchronous>, transform_indices = @transform_5, window_bounds = array<i64: 32, 32>}, {pipeline_mode = #tpu.pipeline_mode<synchronous>, transform_indices = @transform_6, window_bounds = array<i64: 32, 32>}, {pipeline_mode = #tpu.pipeline_mode<synchronous>, transform_indices = @transform_7, window_bounds = array<i64: 32, 32>}, {pipeline_mode = #tpu.pipeline_mode<synchronous>, transform_indices = @transform_8, window_bounds = array<i64: 32, 32>}, {pipeline_mode = #tpu.pipeline_mode<synchronous>, transform_indices = @transform_9, window_bounds = array<i64: 1, 32>}, {pipeline_mode = #tpu.pipeline_mode<synchronous>, transform_indices = @transform_10, window_bounds = array<i64: 32, 32>}, {pipeline_mode = #tpu.pipeline_mode<synchronous>, transform_indices = @transform_11, window_bounds = array<i64: 32, 32>}, {pipeline_mode = #tpu.pipeline_mode<synchronous>, transform_indices = @transform_12, window_bounds = array<i64: 32, 32>}, {pipeline_mode = #tpu.pipeline_mode<synchronous>, transform_indices = @transform_13, window_bounds = array<i64: 32, 32>}, {pipeline_mode = #tpu.pipeline_mode<synchronous>, transform_indices = @transform_14, window_bounds = array<i64: 1, 32>}, {pipeline_mode = #tpu.pipeline_mode<synchronous>, transform_indices = @transform_15, window_bounds = array<i64: 32, 64>}, {pipeline_mode = #tpu.pipeline_mode<synchronous>, transform_indices = @transform_16, window_bounds = array<i64: 1, 64>}, {pipeline_mode = #tpu.pipeline_mode<synchronous>, transform_indices = @transform_17, window_bounds = array<i64: 64, 32>}, {pipeline_mode = #tpu.pipeline_mode<synchronous>, transform_indices = @transform_18, window_bounds = array<i64: 1, 32>}, {pipeline_mode = #tpu.pipeline_mode<synchronous>, transform_indices = @transform_19, window_bounds = array<i64: 1, 32>}, {pipeline_mode = #tpu.pipeline_mode<synchronous>, transform_indices = @transform_20, window_bounds = array<i64: 1, 32>}, {pipeline_mode = #tpu.pipeline_mode<synchronous>, transform_indices = @transform_21, window_bounds = array<i64: 1, 32>}, {pipeline_mode = #tpu.pipeline_mode<synchronous>, transform_indices = @transform_22, window_bounds = array<i64: 1, 32>}, {pipeline_mode = #tpu.pipeline_mode<synchronous>, transform_indices = @transform_23, window_bounds = array<i64: 1, 32>}, {pipeline_mode = #tpu.pipeline_mode<synchronous>, transform_indices = @transform_24, window_bounds = array<i64: 1, 32>}, {transform_indices = @transform_25, window_bounds = array<i64: 1, 8, 32>}, {transform_indices = @transform_26, window_bounds = array<i64: 1, 4, 8, 8>}]} {
    %c0 = arith.constant 0 : index
    %c0_0 = arith.constant 0 : index
    %c0_1 = arith.constant 0 : index
    %0 = vector.load %arg2[%c0, %c0_0, %c0_1] : memref<1x8x32xf32, #tpu.memory_space<vmem>>, vector<1x8x32xf32>
    %1 = vector.shape_cast %0 : vector<1x8x32xf32> to vector<8x32xf32>
    %c0_2 = arith.constant 0 : index
    %c0_3 = arith.constant 0 : index
    %c0_4 = arith.constant 0 : index
    %2 = vector.load %arg3[%c0_2, %c0_3, %c0_4] : memref<1x8x32xbf16, #tpu.memory_space<vmem>>, vector<1x8x32xbf16>
    %3 = vector.shape_cast %2 : vector<1x8x32xbf16> to vector<8x32xbf16>
    %c0_5 = arith.constant 0 : index
    %c0_6 = arith.constant 0 : index
    %c0_7 = arith.constant 0 : index
    %4 = vector.load %arg5[%c0_5, %c0_6, %c0_7] : memref<1x8x32xbf16, #tpu.memory_space<vmem>>, vector<1x8x32xbf16>
    %5 = vector.shape_cast %4 : vector<1x8x32xbf16> to vector<8x32xbf16>
    %c0_8 = arith.constant 0 : index
    %c0_9 = arith.constant 0 : index
    %c0_10 = arith.constant 0 : index
    %6 = vector.load %arg4[%c0_8, %c0_9, %c0_10] : memref<1x8x8xi8, #tpu.memory_space<vmem>>, vector<1x8x8xi8>
    %7 = vector.shape_cast %6 : vector<1x8x8xi8> to vector<8x8xi8>
    %c0_11 = arith.constant 0 : index
    %c0_12 = arith.constant 0 : index
    %c0_13 = arith.constant 0 : index
    %8 = vector.load %arg6[%c0_11, %c0_12, %c0_13] : memref<1x8x8xi8, #tpu.memory_space<vmem>>, vector<1x8x8xi8>
    %9 = vector.shape_cast %8 : vector<1x8x8xi8> to vector<8x8xi8>
    %c0_14 = arith.constant 0 : index
    %c0_15 = arith.constant 0 : index
    %10 = vector.load %arg7[%c0_14, %c0_15] : memref<32x32xbf16, #tpu.memory_space<vmem>>, vector<32x32xbf16>
    %c0_16 = arith.constant 0 : index
    %c0_17 = arith.constant 0 : index
    %11 = vector.load %arg8[%c0_16, %c0_17] : memref<32x32xbf16, #tpu.memory_space<vmem>>, vector<32x32xbf16>
    %c0_18 = arith.constant 0 : index
    %c0_19 = arith.constant 0 : index
    %12 = vector.load %arg9[%c0_18, %c0_19] : memref<32x32xbf16, #tpu.memory_space<vmem>>, vector<32x32xbf16>
    %c0_20 = arith.constant 0 : index
    %c0_21 = arith.constant 0 : index
    %13 = vector.load %arg10[%c0_20, %c0_21] : memref<32x32xbf16, #tpu.memory_space<vmem>>, vector<32x32xbf16>
    %c0_22 = arith.constant 0 : index
    %c0_23 = arith.constant 0 : index
    %14 = vector.load %arg11[%c0_22, %c0_23] : memref<1x32xf32, #tpu.memory_space<vmem>>, vector<1x32xf32>
    %15 = arith.truncf %1 : vector<8x32xf32> to vector<8x32xbf16>
    %cst = arith.constant dense<0.000000e+00> : vector<8x32xf32>
    %16 = tpu.matmul %15, %10, %cst {dimension_numbers = #tpu.dot_dimension_numbers<[1], [0], [0], [1], [0, 0, 1, 1], [], []>} : vector<8x32xbf16>, vector<32x32xbf16>, vector<8x32xf32> -> vector<8x32xf32>
    %cst_24 = arith.constant dense<0.000000e+00> : vector<8x32xf32>
    %17 = tpu.matmul %3, %11, %cst_24 {dimension_numbers = #tpu.dot_dimension_numbers<[1], [0], [0], [1], [0, 0, 1, 1], [], []>} : vector<8x32xbf16>, vector<32x32xbf16>, vector<8x32xf32> -> vector<8x32xf32>
    %cst_25 = arith.constant dense<0.000000e+00> : vector<8x32xf32>
    %18 = tpu.matmul %3, %12, %cst_25 {dimension_numbers = #tpu.dot_dimension_numbers<[1], [0], [0], [1], [0, 0, 1, 1], [], []>} : vector<8x32xbf16>, vector<32x32xbf16>, vector<8x32xf32> -> vector<8x32xf32>
    %19 = vector.shape_cast %16 : vector<8x32xf32> to vector<8x4x8xf32>
    %20 = tpu.transpose %19, [1, 0, 2] : vector<8x4x8xf32> -> vector<4x8x8xf32>
    %21 = arith.truncf %20 : vector<4x8x8xf32> to vector<4x8x8xbf16>
    %22 = vector.shape_cast %17 : vector<8x32xf32> to vector<8x4x8xf32>
    %23 = tpu.transpose %22, [1, 0, 2] : vector<8x4x8xf32> -> vector<4x8x8xf32>
    %24 = arith.truncf %23 : vector<4x8x8xf32> to vector<4x8x8xbf16>
    %25 = vector.shape_cast %18 : vector<8x32xf32> to vector<8x4x8xf32>
    %26 = tpu.transpose %25, [1, 0, 2] : vector<8x4x8xf32> -> vector<4x8x8xf32>
    %27 = arith.truncf %26 : vector<4x8x8xf32> to vector<4x8x8xbf16>
    "tpu.trace_start"() <{level = 10 : i32, message = "hqd,hkd->hqk"}> : () -> ()
    %cst_26 = arith.constant dense<0.000000e+00> : vector<4x8x8xf32>
    %28 = tpu.matmul %21, %24, %cst_26 {dimension_numbers = #tpu.dot_dimension_numbers<[2], [2], [1], [1], [0, 0, 0, 1, 1, 1], [0], [0]>} : vector<4x8x8xbf16>, vector<4x8x8xbf16>, vector<4x8x8xf32> -> vector<4x8x8xf32>
    %c0_i8 = arith.constant 0 : i8
    "tpu.trace_stop"() : () -> ()
    %29 = vector.broadcast %c0_i8 : i8 to vector<8x8xi8>
    %30 = arith.cmpi ne, %7, %29 : vector<8x8xi8>
    %31 = vector.shape_cast %30 : vector<8x8xi1> to vector<1x8x8xi1>
    %cst_27 = arith.constant -1.000000e+09 : f32
    %32 = vector.shape_cast %31 : vector<1x8x8xi1> to vector<1x8x8xi1>
    %33 = vector.broadcast %32 : vector<1x8x8xi1> to vector<4x8x8xi1>
    %34 = vector.broadcast %cst_27 : f32 to vector<4x8x8xf32>
    %35 = arith.select %33, %28, %34 : vector<4x8x8xi1>, vector<4x8x8xf32>
    %cst_28 = arith.constant dense<0xFF800000> : vector<4x8xf32>
    %36 = vector.multi_reduction <maximumf>, %35, %cst_28 [2] : vector<4x8x8xf32> to vector<4x8xf32>
    %cst_29 = arith.constant 0xFF800000 : f32
    %37 = vector.broadcast %cst_29 : f32 to vector<4x8xf32>
    %38 = arith.maximumf %37, %36 : vector<4x8xf32>
    %39 = vector.shape_cast %38 : vector<4x8xf32> to vector<4x8x1xf32>
    %40 = vector.broadcast %39 : vector<4x8x1xf32> to vector<4x8x8xf32>
    %41 = arith.subf %35, %40 : vector<4x8x8xf32>
    %42 = math.exp %41 : vector<4x8x8xf32>
    %cst_30 = arith.constant dense<0.000000e+00> : vector<4x8xf32>
    %43 = vector.multi_reduction <add>, %42, %cst_30 [2] : vector<4x8x8xf32> to vector<4x8xf32>
    %44 = vector.shape_cast %43 : vector<4x8xf32> to vector<4x8x1xf32>
    %45 = vector.broadcast %44 : vector<4x8x1xf32> to vector<4x8x8xf32>
    %46 = arith.divf %42, %45 : vector<4x8x8xf32>
    %47 = arith.truncf %46 : vector<4x8x8xf32> to vector<4x8x8xbf16>
    "tpu.trace_start"() <{level = 10 : i32, message = "hqk,hkd->hqd"}> : () -> ()
    %cst_31 = arith.constant dense<0.000000e+00> : vector<4x8x8xf32>
    %48 = tpu.matmul %47, %27, %cst_31 {dimension_numbers = #tpu.dot_dimension_numbers<[2], [1], [1], [2], [0, 0, 0, 1, 1, 2], [0], [0]>} : vector<4x8x8xbf16>, vector<4x8x8xbf16>, vector<4x8x8xf32> -> vector<4x8x8xf32>
    "tpu.trace_stop"() : () -> ()
    %49 = tpu.transpose %48, [1, 0, 2] : vector<4x8x8xf32> -> vector<8x4x8xf32>
    %50 = vector.shape_cast %49 : vector<8x4x8xf32> to vector<8x32xf32>
    %51 = arith.truncf %50 : vector<8x32xf32> to vector<8x32xbf16>
    %cst_32 = arith.constant dense<0.000000e+00> : vector<8x32xf32>
    %52 = tpu.matmul %51, %13, %cst_32 {dimension_numbers = #tpu.dot_dimension_numbers<[1], [0], [0], [1], [0, 0, 1, 1], [], []>} : vector<8x32xbf16>, vector<32x32xbf16>, vector<8x32xf32> -> vector<8x32xf32>
    %53 = vector.broadcast %14 : vector<1x32xf32> to vector<8x32xf32>
    %54 = arith.addf %52, %53 : vector<8x32xf32>
    %55 = arith.addf %1, %54 : vector<8x32xf32>
    %c0_33 = arith.constant 0 : index
    %c0_34 = arith.constant 0 : index
    %56 = vector.load %arg21[%c0_33, %c0_34] : memref<1x32xf32, #tpu.memory_space<vmem>>, vector<1x32xf32>
    %c0_35 = arith.constant 0 : index
    %c0_36 = arith.constant 0 : index
    %57 = vector.load %arg22[%c0_35, %c0_36] : memref<1x32xf32, #tpu.memory_space<vmem>>, vector<1x32xf32>
    %cst_37 = arith.constant dense<0.000000e+00> : vector<8xf32>
    %58 = vector.multi_reduction <add>, %55, %cst_37 [1] : vector<8x32xf32> to vector<8xf32>
    %59 = vector.shape_cast %58 : vector<8xf32> to vector<8x1xf32>
    %cst_38 = arith.constant 3.200000e+01 : f32
    %60 = vector.broadcast %cst_38 : f32 to vector<8x1xf32>
    %61 = arith.divf %59, %60 : vector<8x1xf32>
    %62 = vector.broadcast %61 : vector<8x1xf32> to vector<8x32xf32>
    %63 = arith.subf %55, %62 : vector<8x32xf32>
    %64 = arith.mulf %63, %63 : vector<8x32xf32>
    %cst_39 = arith.constant dense<0.000000e+00> : vector<8xf32>
    %65 = vector.multi_reduction <add>, %64, %cst_39 [1] : vector<8x32xf32> to vector<8xf32>
    %66 = vector.shape_cast %65 : vector<8xf32> to vector<8x1xf32>
    %cst_40 = arith.constant 3.200000e+01 : f32
    %67 = vector.broadcast %cst_40 : f32 to vector<8x1xf32>
    %68 = arith.divf %66, %67 : vector<8x1xf32>
    %69 = vector.broadcast %61 : vector<8x1xf32> to vector<8x32xf32>
    %70 = arith.subf %55, %69 : vector<8x32xf32>
    %cst_41 = arith.constant 1.000000e-03 : f32
    %71 = vector.broadcast %cst_41 : f32 to vector<8x1xf32>
    %72 = arith.addf %68, %71 : vector<8x1xf32>
    %73 = math.rsqrt %72 : vector<8x1xf32>
    %74 = vector.broadcast %73 : vector<8x1xf32> to vector<8x32xf32>
    %75 = arith.mulf %70, %74 : vector<8x32xf32>
    %76 = vector.broadcast %56 : vector<1x32xf32> to vector<8x32xf32>
    %77 = arith.mulf %75, %76 : vector<8x32xf32>
    %78 = vector.broadcast %57 : vector<1x32xf32> to vector<8x32xf32>
    %79 = arith.addf %77, %78 : vector<8x32xf32>
    %c0_42 = arith.constant 0 : index
    %c0_43 = arith.constant 0 : index
    %80 = vector.load %arg12[%c0_42, %c0_43] : memref<32x32xbf16, #tpu.memory_space<vmem>>, vector<32x32xbf16>
    %c0_44 = arith.constant 0 : index
    %c0_45 = arith.constant 0 : index
    %81 = vector.load %arg13[%c0_44, %c0_45] : memref<32x32xbf16, #tpu.memory_space<vmem>>, vector<32x32xbf16>
    %c0_46 = arith.constant 0 : index
    %c0_47 = arith.constant 0 : index
    %82 = vector.load %arg14[%c0_46, %c0_47] : memref<32x32xbf16, #tpu.memory_space<vmem>>, vector<32x32xbf16>
    %c0_48 = arith.constant 0 : index
    %c0_49 = arith.constant 0 : index
    %83 = vector.load %arg15[%c0_48, %c0_49] : memref<32x32xbf16, #tpu.memory_space<vmem>>, vector<32x32xbf16>
    %c0_50 = arith.constant 0 : index
    %c0_51 = arith.constant 0 : index
    %84 = vector.load %arg16[%c0_50, %c0_51] : memref<1x32xf32, #tpu.memory_space<vmem>>, vector<1x32xf32>
    %85 = arith.truncf %79 : vector<8x32xf32> to vector<8x32xbf16>
    %cst_52 = arith.constant dense<0.000000e+00> : vector<8x32xf32>
    %86 = tpu.matmul %85, %80, %cst_52 {dimension_numbers = #tpu.dot_dimension_numbers<[1], [0], [0], [1], [0, 0, 1, 1], [], []>} : vector<8x32xbf16>, vector<32x32xbf16>, vector<8x32xf32> -> vector<8x32xf32>
    %cst_53 = arith.constant dense<0.000000e+00> : vector<8x32xf32>
    %87 = tpu.matmul %5, %81, %cst_53 {dimension_numbers = #tpu.dot_dimension_numbers<[1], [0], [0], [1], [0, 0, 1, 1], [], []>} : vector<8x32xbf16>, vector<32x32xbf16>, vector<8x32xf32> -> vector<8x32xf32>
    %cst_54 = arith.constant dense<0.000000e+00> : vector<8x32xf32>
    %88 = tpu.matmul %5, %82, %cst_54 {dimension_numbers = #tpu.dot_dimension_numbers<[1], [0], [0], [1], [0, 0, 1, 1], [], []>} : vector<8x32xbf16>, vector<32x32xbf16>, vector<8x32xf32> -> vector<8x32xf32>
    %89 = vector.shape_cast %86 : vector<8x32xf32> to vector<8x4x8xf32>
    %90 = tpu.transpose %89, [1, 0, 2] : vector<8x4x8xf32> -> vector<4x8x8xf32>
    %91 = arith.truncf %90 : vector<4x8x8xf32> to vector<4x8x8xbf16>
    %92 = vector.shape_cast %87 : vector<8x32xf32> to vector<8x4x8xf32>
    %93 = tpu.transpose %92, [1, 0, 2] : vector<8x4x8xf32> -> vector<4x8x8xf32>
    %94 = arith.truncf %93 : vector<4x8x8xf32> to vector<4x8x8xbf16>
    %95 = vector.shape_cast %88 : vector<8x32xf32> to vector<8x4x8xf32>
    %96 = tpu.transpose %95, [1, 0, 2] : vector<8x4x8xf32> -> vector<4x8x8xf32>
    %97 = arith.truncf %96 : vector<4x8x8xf32> to vector<4x8x8xbf16>
    "tpu.trace_start"() <{level = 10 : i32, message = "hqd,hkd->hqk"}> : () -> ()
    %cst_55 = arith.constant dense<0.000000e+00> : vector<4x8x8xf32>
    %98 = tpu.matmul %91, %94, %cst_55 {dimension_numbers = #tpu.dot_dimension_numbers<[2], [2], [1], [1], [0, 0, 0, 1, 1, 1], [0], [0]>} : vector<4x8x8xbf16>, vector<4x8x8xbf16>, vector<4x8x8xf32> -> vector<4x8x8xf32>
    %c0_i8_56 = arith.constant 0 : i8
    "tpu.trace_stop"() : () -> ()
    %99 = vector.broadcast %c0_i8_56 : i8 to vector<8x8xi8>
    %100 = arith.cmpi ne, %9, %99 : vector<8x8xi8>
    %101 = vector.shape_cast %100 : vector<8x8xi1> to vector<1x8x8xi1>
    %cst_57 = arith.constant -1.000000e+09 : f32
    %102 = vector.shape_cast %101 : vector<1x8x8xi1> to vector<1x8x8xi1>
    %103 = vector.broadcast %102 : vector<1x8x8xi1> to vector<4x8x8xi1>
    %104 = vector.broadcast %cst_57 : f32 to vector<4x8x8xf32>
    %105 = arith.select %103, %98, %104 : vector<4x8x8xi1>, vector<4x8x8xf32>
    %cst_58 = arith.constant dense<0xFF800000> : vector<4x8xf32>
    %106 = vector.multi_reduction <maximumf>, %105, %cst_58 [2] : vector<4x8x8xf32> to vector<4x8xf32>
    %cst_59 = arith.constant 0xFF800000 : f32
    %107 = vector.broadcast %cst_59 : f32 to vector<4x8xf32>
    %108 = arith.maximumf %107, %106 : vector<4x8xf32>
    %109 = vector.shape_cast %108 : vector<4x8xf32> to vector<4x8x1xf32>
    %110 = vector.broadcast %109 : vector<4x8x1xf32> to vector<4x8x8xf32>
    %111 = arith.subf %105, %110 : vector<4x8x8xf32>
    %112 = math.exp %111 : vector<4x8x8xf32>
    %cst_60 = arith.constant dense<0.000000e+00> : vector<4x8xf32>
    %113 = vector.multi_reduction <add>, %112, %cst_60 [2] : vector<4x8x8xf32> to vector<4x8xf32>
    %114 = vector.shape_cast %113 : vector<4x8xf32> to vector<4x8x1xf32>
    %115 = vector.broadcast %114 : vector<4x8x1xf32> to vector<4x8x8xf32>
    %116 = arith.divf %112, %115 : vector<4x8x8xf32>
    %117 = arith.truncf %116 : vector<4x8x8xf32> to vector<4x8x8xbf16>
    "tpu.trace_start"() <{level = 10 : i32, message = "hqk,hkd->hqd"}> : () -> ()
    %cst_61 = arith.constant dense<0.000000e+00> : vector<4x8x8xf32>
    %118 = tpu.matmul %117, %97, %cst_61 {dimension_numbers = #tpu.dot_dimension_numbers<[2], [1], [1], [2], [0, 0, 0, 1, 1, 2], [0], [0]>} : vector<4x8x8xbf16>, vector<4x8x8xbf16>, vector<4x8x8xf32> -> vector<4x8x8xf32>
    "tpu.trace_stop"() : () -> ()
    %119 = tpu.transpose %118, [1, 0, 2] : vector<4x8x8xf32> -> vector<8x4x8xf32>
    %120 = vector.shape_cast %119 : vector<8x4x8xf32> to vector<8x32xf32>
    %121 = arith.truncf %120 : vector<8x32xf32> to vector<8x32xbf16>
    %cst_62 = arith.constant dense<0.000000e+00> : vector<8x32xf32>
    %122 = tpu.matmul %121, %83, %cst_62 {dimension_numbers = #tpu.dot_dimension_numbers<[1], [0], [0], [1], [0, 0, 1, 1], [], []>} : vector<8x32xbf16>, vector<32x32xbf16>, vector<8x32xf32> -> vector<8x32xf32>
    %123 = vector.broadcast %84 : vector<1x32xf32> to vector<8x32xf32>
    %124 = arith.addf %122, %123 : vector<8x32xf32>
    %125 = arith.addf %79, %124 : vector<8x32xf32>
    %c0_63 = arith.constant 0 : index
    %c0_64 = arith.constant 0 : index
    %126 = vector.load %arg23[%c0_63, %c0_64] : memref<1x32xf32, #tpu.memory_space<vmem>>, vector<1x32xf32>
    %c0_65 = arith.constant 0 : index
    %c0_66 = arith.constant 0 : index
    %127 = vector.load %arg24[%c0_65, %c0_66] : memref<1x32xf32, #tpu.memory_space<vmem>>, vector<1x32xf32>
    %cst_67 = arith.constant dense<0.000000e+00> : vector<8xf32>
    %128 = vector.multi_reduction <add>, %125, %cst_67 [1] : vector<8x32xf32> to vector<8xf32>
    %129 = vector.shape_cast %128 : vector<8xf32> to vector<8x1xf32>
    %cst_68 = arith.constant 3.200000e+01 : f32
    %130 = vector.broadcast %cst_68 : f32 to vector<8x1xf32>
    %131 = arith.divf %129, %130 : vector<8x1xf32>
    %132 = vector.broadcast %131 : vector<8x1xf32> to vector<8x32xf32>
    %133 = arith.subf %125, %132 : vector<8x32xf32>
    %134 = arith.mulf %133, %133 : vector<8x32xf32>
    %cst_69 = arith.constant dense<0.000000e+00> : vector<8xf32>
    %135 = vector.multi_reduction <add>, %134, %cst_69 [1] : vector<8x32xf32> to vector<8xf32>
    %136 = vector.shape_cast %135 : vector<8xf32> to vector<8x1xf32>
    %cst_70 = arith.constant 3.200000e+01 : f32
    %137 = vector.broadcast %cst_70 : f32 to vector<8x1xf32>
    %138 = arith.divf %136, %137 : vector<8x1xf32>
    %139 = vector.broadcast %131 : vector<8x1xf32> to vector<8x32xf32>
    %140 = arith.subf %125, %139 : vector<8x32xf32>
    %cst_71 = arith.constant 1.000000e-03 : f32
    %141 = vector.broadcast %cst_71 : f32 to vector<8x1xf32>
    %142 = arith.addf %138, %141 : vector<8x1xf32>
    %143 = math.rsqrt %142 : vector<8x1xf32>
    %144 = vector.broadcast %143 : vector<8x1xf32> to vector<8x32xf32>
    %145 = arith.mulf %140, %144 : vector<8x32xf32>
    %146 = vector.broadcast %126 : vector<1x32xf32> to vector<8x32xf32>
    %147 = arith.mulf %145, %146 : vector<8x32xf32>
    %148 = vector.broadcast %127 : vector<1x32xf32> to vector<8x32xf32>
    %149 = arith.addf %147, %148 : vector<8x32xf32>
    %150 = arith.truncf %149 : vector<8x32xf32> to vector<8x32xbf16>
    %c0_72 = arith.constant 0 : index
    %c0_73 = arith.constant 0 : index
    %151 = vector.load %arg17[%c0_72, %c0_73] : memref<32x64xbf16, #tpu.memory_space<vmem>>, vector<32x64xbf16>
    %cst_74 = arith.constant dense<0.000000e+00> : vector<8x64xf32>
    %152 = tpu.matmul %150, %151, %cst_74 {dimension_numbers = #tpu.dot_dimension_numbers<[1], [0], [0], [1], [0, 0, 1, 1], [], []>} : vector<8x32xbf16>, vector<32x64xbf16>, vector<8x64xf32> -> vector<8x64xf32>
    %c0_75 = arith.constant 0 : index
    %c0_76 = arith.constant 0 : index
    %153 = vector.load %arg18[%c0_75, %c0_76] : memref<1x64xf32, #tpu.memory_space<vmem>>, vector<1x64xf32>
    %154 = vector.broadcast %153 : vector<1x64xf32> to vector<8x64xf32>
    %155 = arith.addf %152, %154 : vector<8x64xf32>
    %cst_77 = arith.constant 0.000000e+00 : f32
    %156 = vector.broadcast %cst_77 : f32 to vector<8x64xf32>
    %157 = arith.maximumf %155, %156 : vector<8x64xf32>
    %158 = arith.truncf %157 : vector<8x64xf32> to vector<8x64xbf16>
    %c0_78 = arith.constant 0 : index
    %c0_79 = arith.constant 0 : index
    %159 = vector.load %arg19[%c0_78, %c0_79] : memref<64x32xbf16, #tpu.memory_space<vmem>>, vector<64x32xbf16>
    %cst_80 = arith.constant dense<0.000000e+00> : vector<8x32xf32>
    %160 = tpu.matmul %158, %159, %cst_80 {dimension_numbers = #tpu.dot_dimension_numbers<[1], [0], [0], [1], [0, 0, 1, 1], [], []>} : vector<8x64xbf16>, vector<64x32xbf16>, vector<8x32xf32> -> vector<8x32xf32>
    %c0_81 = arith.constant 0 : index
    %c0_82 = arith.constant 0 : index
    %161 = vector.load %arg20[%c0_81, %c0_82] : memref<1x32xf32, #tpu.memory_space<vmem>>, vector<1x32xf32>
    %162 = vector.broadcast %161 : vector<1x32xf32> to vector<8x32xf32>
    %163 = arith.addf %160, %162 : vector<8x32xf32>
    %164 = arith.addf %149, %163 : vector<8x32xf32>
    %c0_83 = arith.constant 0 : index
    %c0_84 = arith.constant 0 : index
    %165 = vector.load %arg25[%c0_83, %c0_84] : memref<1x32xf32, #tpu.memory_space<vmem>>, vector<1x32xf32>
    %c0_85 = arith.constant 0 : index
    %c0_86 = arith.constant 0 : index
    %166 = vector.load %arg26[%c0_85, %c0_86] : memref<1x32xf32, #tpu.memory_space<vmem>>, vector<1x32xf32>
    %cst_87 = arith.constant dense<0.000000e+00> : vector<8xf32>
    %167 = vector.multi_reduction <add>, %164, %cst_87 [1] : vector<8x32xf32> to vector<8xf32>
    %168 = vector.shape_cast %167 : vector<8xf32> to vector<8x1xf32>
    %cst_88 = arith.constant 3.200000e+01 : f32
    %169 = vector.broadcast %cst_88 : f32 to vector<8x1xf32>
    %170 = arith.divf %168, %169 : vector<8x1xf32>
    %171 = vector.broadcast %170 : vector<8x1xf32> to vector<8x32xf32>
    %172 = arith.subf %164, %171 : vector<8x32xf32>
    %173 = arith.mulf %172, %172 : vector<8x32xf32>
    %cst_89 = arith.constant dense<0.000000e+00> : vector<8xf32>
    %174 = vector.multi_reduction <add>, %173, %cst_89 [1] : vector<8x32xf32> to vector<8xf32>
    %175 = vector.shape_cast %174 : vector<8xf32> to vector<8x1xf32>
    %cst_90 = arith.constant 3.200000e+01 : f32
    %176 = vector.broadcast %cst_90 : f32 to vector<8x1xf32>
    %177 = arith.divf %175, %176 : vector<8x1xf32>
    %178 = vector.broadcast %170 : vector<8x1xf32> to vector<8x32xf32>
    %179 = arith.subf %164, %178 : vector<8x32xf32>
    %cst_91 = arith.constant 1.000000e-03 : f32
    %180 = vector.broadcast %cst_91 : f32 to vector<8x1xf32>
    %181 = arith.addf %177, %180 : vector<8x1xf32>
    %182 = math.rsqrt %181 : vector<8x1xf32>
    %183 = vector.broadcast %182 : vector<8x1xf32> to vector<8x32xf32>
    %184 = arith.mulf %179, %183 : vector<8x32xf32>
    %185 = vector.broadcast %165 : vector<1x32xf32> to vector<8x32xf32>
    %186 = arith.mulf %184, %185 : vector<8x32xf32>
    %187 = vector.broadcast %166 : vector<1x32xf32> to vector<8x32xf32>
    %188 = arith.addf %186, %187 : vector<8x32xf32>
    %c0_92 = arith.constant 0 : index
    %c0_93 = arith.constant 0 : index
    %c0_94 = arith.constant 0 : index
    %189 = vector.load %arg27[%c0_92, %c0_93, %c0_94] : memref<1x8x32xf32, #tpu.memory_space<vmem>>, vector<1x8x32xf32>
    %190 = vector.shape_cast %189 : vector<1x8x32xf32> to vector<8x32xf32>
    %191 = vector.shape_cast %188 : vector<8x32xf32> to vector<1x8x32xf32>
    tpu.vector_store %arg27[%c0_92, %c0_93, %c0_94], %191 {strides = array<i32>} : memref<1x8x32xf32, #tpu.memory_space<vmem>>, vector<1x8x32xf32>,
    %192 = arith.truncf %116 : vector<4x8x8xf32> to vector<4x8x8xbf16>
    %c0_95 = arith.constant 0 : index
    %c0_96 = arith.constant 0 : index
    %c0_97 = arith.constant 0 : index
    %c0_98 = arith.constant 0 : index
    %193 = vector.load %arg28[%c0_95, %c0_96, %c0_97, %c0_98] : memref<1x4x8x8xbf16, #tpu.memory_space<vmem>>, vector<1x4x8x8xbf16>
    %194 = vector.shape_cast %193 : vector<1x4x8x8xbf16> to vector<4x8x8xbf16>
    %195 = vector.shape_cast %192 : vector<4x8x8xbf16> to vector<1x4x8x8xbf16>
    tpu.vector_store %arg28[%c0_95, %c0_96, %c0_97, %c0_98], %195 {strides = array<i32>} : memref<1x4x8x8xbf16, #tpu.memory_space<vmem>>, vector<1x4x8x8xbf16>,
    return
  }
  func.func @transform_0(%arg0: i32, %arg1: i32) -> (i32, i32, i32) {
    %c0_i32 = arith.constant 0 : i32
    %c0_i32_0 = arith.constant 0 : i32
    return %arg0, %arg1, %c0_i32 : i32, i32, i32
  }
  func.func @transform_1(%arg0: i32, %arg1: i32) -> (i32, i32, i32) {
    %c0_i32 = arith.constant 0 : i32
    %c0_i32_0 = arith.constant 0 : i32
    %c0_i32_1 = arith.constant 0 : i32
    return %arg0, %c0_i32, %c0_i32_0 : i32, i32, i32
  }
  func.func @transform_2(%arg0: i32, %arg1: i32) -> (i32, i32, i32) {
    %c0_i32 = arith.constant 0 : i32
    %c0_i32_0 = arith.constant 0 : i32
    return %arg0, %arg1, %c0_i32 : i32, i32, i32
  }
  func.func @transform_3(%arg0: i32, %arg1: i32) -> (i32, i32, i32) {
    %c0_i32 = arith.constant 0 : i32
    %c0_i32_0 = arith.constant 0 : i32
    %c0_i32_1 = arith.constant 0 : i32
    return %arg0, %c0_i32, %c0_i32_0 : i32, i32, i32
  }
  func.func @transform_4(%arg0: i32, %arg1: i32) -> (i32, i32, i32) {
    %c0_i32 = arith.constant 0 : i32
    %c0_i32_0 = arith.constant 0 : i32
    return %arg0, %arg1, %c0_i32 : i32, i32, i32
  }
  func.func @transform_5(%arg0: i32, %arg1: i32) -> (i32, i32) {
    %c0_i32 = arith.constant 0 : i32
    %c0_i32_0 = arith.constant 0 : i32
    %c0_i32_1 = arith.constant 0 : i32
    return %c0_i32, %c0_i32_0 : i32, i32
  }
  func.func @transform_6(%arg0: i32, %arg1: i32) -> (i32, i32) {
    %c0_i32 = arith.constant 0 : i32
    %c0_i32_0 = arith.constant 0 : i32
    %c0_i32_1 = arith.constant 0 : i32
    return %c0_i32, %c0_i32_0 : i32, i32
  }
  func.func @transform_7(%arg0: i32, %arg1: i32) -> (i32, i32) {
    %c0_i32 = arith.constant 0 : i32
    %c0_i32_0 = arith.constant 0 : i32
    %c0_i32_1 = arith.constant 0 : i32
    return %c0_i32, %c0_i32_0 : i32, i32
  }
  func.func @transform_8(%arg0: i32, %arg1: i32) -> (i32, i32) {
    %c0_i32 = arith.constant 0 : i32
    %c0_i32_0 = arith.constant 0 : i32
    %c0_i32_1 = arith.constant 0 : i32
    return %c0_i32, %c0_i32_0 : i32, i32
  }
  func.func @transform_9(%arg0: i32, %arg1: i32) -> (i32, i32) {
    %c0_i32 = arith.constant 0 : i32
    %c0_i32_0 = arith.constant 0 : i32
    %c0_i32_1 = arith.constant 0 : i32
    return %c0_i32, %c0_i32_0 : i32, i32
  }
  func.func @transform_10(%arg0: i32, %arg1: i32) -> (i32, i32) {
    %c0_i32 = arith.constant 0 : i32
    %c0_i32_0 = arith.constant 0 : i32
    %c0_i32_1 = arith.constant 0 : i32
    return %c0_i32, %c0_i32_0 : i32, i32
  }
  func.func @transform_11(%arg0: i32, %arg1: i32) -> (i32, i32) {
    %c0_i32 = arith.constant 0 : i32
    %c0_i32_0 = arith.constant 0 : i32
    %c0_i32_1 = arith.constant 0 : i32
    return %c0_i32, %c0_i32_0 : i32, i32
  }
  func.func @transform_12(%arg0: i32, %arg1: i32) -> (i32, i32) {
    %c0_i32 = arith.constant 0 : i32
    %c0_i32_0 = arith.constant 0 : i32
    %c0_i32_1 = arith.constant 0 : i32
    return %c0_i32, %c0_i32_0 : i32, i32
  }
  func.func @transform_13(%arg0: i32, %arg1: i32) -> (i32, i32) {
    %c0_i32 = arith.constant 0 : i32
    %c0_i32_0 = arith.constant 0 : i32
    %c0_i32_1 = arith.constant 0 : i32
    return %c0_i32, %c0_i32_0 : i32, i32
  }
  func.func @transform_14(%arg0: i32, %arg1: i32) -> (i32, i32) {
    %c0_i32 = arith.constant 0 : i32
    %c0_i32_0 = arith.constant 0 : i32
    %c0_i32_1 = arith.constant 0 : i32
    return %c0_i32, %c0_i32_0 : i32, i32
  }
  func.func @transform_15(%arg0: i32, %arg1: i32) -> (i32, i32) {
    %c0_i32 = arith.constant 0 : i32
    %c0_i32_0 = arith.constant 0 : i32
    %c0_i32_1 = arith.constant 0 : i32
    return %c0_i32, %c0_i32_0 : i32, i32
  }
  func.func @transform_16(%arg0: i32, %arg1: i32) -> (i32, i32) {
    %c0_i32 = arith.constant 0 : i32
    %c0_i32_0 = arith.constant 0 : i32
    %c0_i32_1 = arith.constant 0 : i32
    return %c0_i32, %c0_i32_0 : i32, i32
  }
  func.func @transform_17(%arg0: i32, %arg1: i32) -> (i32, i32) {
    %c0_i32 = arith.constant 0 : i32
    %c0_i32_0 = arith.constant 0 : i32
    %c0_i32_1 = arith.constant 0 : i32
    return %c0_i32, %c0_i32_0 : i32, i32
  }
  func.func @transform_18(%arg0: i32, %arg1: i32) -> (i32, i32) {
    %c0_i32 = arith.constant 0 : i32
    %c0_i32_0 = arith.constant 0 : i32
    %c0_i32_1 = arith.constant 0 : i32
    return %c0_i32, %c0_i32_0 : i32, i32
  }
  func.func @transform_19(%arg0: i32, %arg1: i32) -> (i32, i32) {
    %c0_i32 = arith.constant 0 : i32
    %c0_i32_0 = arith.constant 0 : i32
    %c0_i32_1 = arith.constant 0 : i32
    return %c0_i32, %c0_i32_0 : i32, i32
  }
  func.func @transform_20(%arg0: i32, %arg1: i32) -> (i32, i32) {
    %c0_i32 = arith.constant 0 : i32
    %c0_i32_0 = arith.constant 0 : i32
    %c0_i32_1 = arith.constant 0 : i32
    return %c0_i32, %c0_i32_0 : i32, i32
  }
  func.func @transform_21(%arg0: i32, %arg1: i32) -> (i32, i32) {
    %c0_i32 = arith.constant 0 : i32
    %c0_i32_0 = arith.constant 0 : i32
    %c0_i32_1 = arith.constant 0 : i32
    return %c0_i32, %c0_i32_0 : i32, i32
  }
  func.func @transform_22(%arg0: i32, %arg1: i32) -> (i32, i32) {
    %c0_i32 = arith.constant 0 : i32
    %c0_i32_0 = arith.constant 0 : i32
    %c0_i32_1 = arith.constant 0 : i32
    return %c0_i32, %c0_i32_0 : i32, i32
  }
  func.func @transform_23(%arg0: i32, %arg1: i32) -> (i32, i32) {
    %c0_i32 = arith.constant 0 : i32
    %c0_i32_0 = arith.constant 0 : i32
    %c0_i32_1 = arith.constant 0 : i32
    return %c0_i32, %c0_i32_0 : i32, i32
  }
  func.func @transform_24(%arg0: i32, %arg1: i32) -> (i32, i32) {
    %c0_i32 = arith.constant 0 : i32
    %c0_i32_0 = arith.constant 0 : i32
    %c0_i32_1 = arith.constant 0 : i32
    return %c0_i32, %c0_i32_0 : i32, i32
  }
  func.func @transform_25(%arg0: i32, %arg1: i32) -> (i32, i32, i32) {
    %c0_i32 = arith.constant 0 : i32
    %c0_i32_0 = arith.constant 0 : i32
    return %arg0, %arg1, %c0_i32 : i32, i32, i32
  }
  func.func @transform_26(%arg0: i32, %arg1: i32) -> (i32, i32, i32, i32) {
    %c0_i32 = arith.constant 0 : i32
    %c0_i32_0 = arith.constant 0 : i32
    %c0_i32_1 = arith.constant 0 : i32
    return %arg0, %c0_i32, %arg1, %c0_i32_0 : i32, i32, i32, i32
  }
}

</mosaic_0001>

<llo_original>
// kernel: tpu_custom_call.1
$region0: #{tpu_custom_call.1}
  #allocation0 [shape = 'u32[]', space=smem, size = 0x4, offset = 0x4, fixed_abs, tag = 'smem constant byte address 0x4 - core index']
  #allocation1 [shape = 'u32[144,128]{1,0:T(1,128)}', space=vmem, size = 0x12000, scoped, tag = 'internal scratch']
  %s0 = inlined_call_operand.vmem [shape: f32[2,8,32], index: 0, kind: input, shape index: {}]
  %s1 = inlined_call_operand.hbm [shape: bf16[2,8,32], index: 1, kind: input, shape index: {}]
  %s2 = inlined_call_operand.hbm [shape: s8[2,8,8], index: 2, kind: input, shape index: {}]
  %s3 = inlined_call_operand.hbm [shape: bf16[2,8,32], index: 3, kind: input, shape index: {}]
  %s4 = inlined_call_operand.hbm [shape: s8[2,8,8], index: 4, kind: input, shape index: {}]
  %s5 = inlined_call_operand.vmem [shape: bf16[32,32], index: 5, kind: input, shape index: {}]
  %s6 = inlined_call_operand.vmem [shape: bf16[32,32], index: 6, kind: input, shape index: {}]
  %s7 = inlined_call_operand.vmem [shape: bf16[32,32], index: 7, kind: input, shape index: {}]
  %s8 = inlined_call_operand.hbm [shape: bf16[32,32], index: 8, kind: input, shape index: {}]
  %s9 = inlined_call_operand.hbm [shape: f32[1,32], index: 9, kind: input, shape index: {}]
  %s10 = inlined_call_operand.vmem [shape: bf16[32,32], index: 10, kind: input, shape index: {}]
  %s11 = inlined_call_operand.hbm [shape: bf16[32,32], index: 11, kind: input, shape index: {}]
  %s12 = inlined_call_operand.hbm [shape: bf16[32,32], index: 12, kind: input, shape index: {}]
  %s13 = inlined_call_operand.vmem [shape: bf16[32,32], index: 13, kind: input, shape index: {}]
  %s14 = inlined_call_operand.hbm [shape: f32[1,32], index: 14, kind: input, shape index: {}]
  %s15 = inlined_call_operand.hbm [shape: bf16[32,64], index: 15, kind: input, shape index: {}]
  %s16 = inlined_call_operand.hbm [shape: f32[1,64], index: 16, kind: input, shape index: {}]
  %s17 = inlined_call_operand.vmem [shape: bf16[64,32], index: 17, kind: input, shape index: {}]
  %s18 = inlined_call_operand.vmem [shape: f32[1,32], index: 18, kind: input, shape index: {}]
  %s19 = inlined_call_operand.vmem [shape: f32[1,32], index: 19, kind: input, shape index: {}]
  %s20 = inlined_call_operand.vmem [shape: f32[1,32], index: 20, kind: input, shape index: {}]
  %s21 = inlined_call_operand.vmem [shape: f32[1,32], index: 21, kind: input, shape index: {}]
  %s22 = inlined_call_operand.vmem [shape: f32[1,32], index: 22, kind: input, shape index: {}]
  %s23 = inlined_call_operand.vmem [shape: f32[1,32], index: 23, kind: input, shape index: {}]
  %s24 = inlined_call_operand.vmem [shape: f32[1,32], index: 24, kind: input, shape index: {}]
  %s25 = inlined_call_operand.hbm [shape: f32[2,8,32], index: 25, kind: output, shape index: {0}]
  %s26 = inlined_call_operand.hbm [shape: bf16[2,4,8,8], index: 26, kind: output, shape index: {1}]
  %27 = xla_tuple %s25, %s26
  %s28 = sld [smem:[#allocation0]]
  $region185: #{tpu_custom_call.1} parent=0
    _
  %s30 = ssub.s32 1, %s28
  %s31 = scalar_select 0, %s30, %s28
  $region1: #{tpu_custom_call.1} parent=0
    #allocation2 [shape = 'u8[4096]{0}', space=vmem, size = 0x1000, scoped, tag = 'input window, operand 1']
    #allocation3 [shape = 's32[2]{0}', space=sflag, size = 0x8, scoped, tag = 'scoped memory for tpu_custom_call.1']
    #allocation4 [shape = 's32[2]{0}', space=sflag, size = 0x8, scoped, tag = 'scoped memory for tpu_custom_call.1']
    #allocation5 [shape = 'u8[2048]{0}', space=vmem, size = 0x800, scoped, tag = 'input window, operand 2']
    #allocation6 [shape = 's32[2]{0}', space=sflag, size = 0x8, scoped, tag = 'scoped memory for tpu_custom_call.1']
    #allocation7 [shape = 'u8[4096]{0}', space=vmem, size = 0x1000, scoped, tag = 'input window, operand 3']
    #allocation8 [shape = 'u8[2048]{0}', space=vmem, size = 0x800, scoped, tag = 'input window, operand 4']
    #allocation9 [shape = 's32[2]{0}', space=sflag, size = 0x8, scoped, tag = 'scoped memory for tpu_custom_call.1']
    #allocation10 [shape = 'u8[8192]{0}', space=vmem, size = 0x2000, scoped, tag = 'input window, operand 8, single buffered']
    #allocation11 [shape = 'u8[512]{0}', space=vmem, size = 0x400, scoped, tag = 'input window, operand 9, single buffered']
    #allocation12 [shape = 's32[1]{0}', space=sflag, size = 0x4, scoped, tag = 'scoped memory for tpu_custom_call.1']
    #allocation13 [shape = 'u8[8192]{0}', space=vmem, size = 0x2000, scoped, tag = 'input window, operand 11, single buffered']
    #allocation14 [shape = 'u8[8192]{0}', space=vmem, size = 0x2000, scoped, tag = 'input window, operand 12, single buffered']
    #allocation15 [shape = 's32[1]{0}', space=sflag, size = 0x4, scoped, tag = 'scoped memory for tpu_custom_call.1']
    #allocation16 [shape = 'u8[512]{0}', space=vmem, size = 0x400, scoped, tag = 'input window, operand 14, single buffered']
    #allocation17 [shape = 'u8[8192]{0}', space=vmem, size = 0x2000, scoped, tag = 'input window, operand 15, single buffered']
    #allocation18 [shape = 's32[1]{0}', space=sflag, size = 0x4, scoped, tag = 'scoped memory for tpu_custom_call.1']
    #allocation19 [shape = 'u8[512]{0}', space=vmem, size = 0x400, scoped, tag = 'input window, operand 16, single buffered']
    #allocation20 [shape = 'u8[8192]{0}', space=vmem, size = 0x2000, scoped, tag = 'output window, operand 0']
    #allocation21 [shape = 'u8[16384]{0}', space=vmem, size = 0x4000, scoped, tag = 'output window, operand 1']
    #allocation22 [shape = 's32[2]{0}', space=sflag, size = 0x8, scoped, tag = 'scoped memory for tpu_custom_call.1']
    %32 = vsyncpa [#allocation3], 0
    %s33 = scalar_lea.sflag [#allocation3], 1
    %34 = vsyncpa %s33, 0
    %35 = vsyncpa [#allocation6], 0
    %s36 = scalar_lea.sflag [#allocation6], 1
    %37 = vsyncpa %s36, 0
    %38 = vsyncpa [#allocation9], 0
    %s39 = scalar_lea.sflag [#allocation9], 1
    %40 = vsyncpa %s39, 0
    %41 = vsyncpa [#allocation12], 0
    %42 = vsyncpa [#allocation15], 0
    %43 = vsyncpa [#allocation18], 0
    %44 = vsyncpa [#allocation4], 0
    %s45 = scalar_lea.sflag [#allocation4], 1
    %46 = vsyncpa %s45, 0
    %47 = vsyncpa [#allocation22], 0
    %s48 = scalar_lea.sflag [#allocation22], 1
    %49 = vsyncpa %s48, 0
    loop: start=0, step=1, limit=4
    $region2: #{tpu_custom_call.1} parent=1 // loop_pre_header
      _
    $region3: #{tpu_custom_call.1} parent=1 // loop_header
      %s51 = sphi 0, %s55
      %p52 = scmp.ge.s32.totalorder %s51, 4
      %s58 = sphi 0, %s70
      %s59 = sphi 0, %s66
      %s60 = sphi 0, %s58
      %s61 = sphi 0, %s59
      %s62 = sphi 0, %s60
      %s63 = sphi 0, %s61
      %s75 = sphi 0, %s77
      %s78 = sphi 0, %s75
      %s79 = sphi 0, %s78
      %s95 = sphi 0, %s79
      %s101 = sphi 0, %s103
      %s104 = sphi 0, %s101
      %s105 = sphi 0, %s104
      %s121 = sphi 0, %s105
      %s129 = sphi 0, %s131
      %s132 = sphi 0, %s129
      %s133 = sphi 0, %s132
      %s149 = sphi 0, %s133
      %s155 = sphi 0, %s157
      %s158 = sphi 0, %s155
      %s159 = sphi 0, %s158
      %s175 = sphi 0, %s159
      %s183 = sphi 0, %s185
      %s186 = sphi 0, %s183
      %s187 = sphi 0, %s186
      %s203 = sphi 0, %s187
      %s207 = sphi 0, %s207
      %s209 = sphi 0, %s207
      %s210 = sphi 0, %s209
      %s224 = sphi 0, %s210
      %s228 = sphi 0, %s228
      %s230 = sphi 0, %s228
      %s231 = sphi 0, %s230
      %s245 = sphi 0, %s231
      %s249 = sphi 0, %s249
      %s251 = sphi 0, %s249
      %s252 = sphi 0, %s251
      %s266 = sphi 0, %s252
      %s270 = sphi 0, %s270
      %s272 = sphi 0, %s270
      %s273 = sphi 0, %s272
      %s287 = sphi 0, %s273
      %s291 = sphi 0, %s291
      %s293 = sphi 0, %s291
      %s294 = sphi 0, %s293
      %s308 = sphi 0, %s294
      %s312 = sphi 0, %s312
      %s314 = sphi 0, %s312
      %s315 = sphi 0, %s314
      %s329 = sphi 0, %s315
      %s333 = sphi 0, %s333
      %s335 = sphi 0, %s333
      %s336 = sphi 0, %s335
      %s350 = sphi 0, %s336
      %s354 = sphi 0, %s354
      %s356 = sphi 0, %s354
      %s357 = sphi 0, %s356
      %s371 = sphi 0, %s357
      %s375 = sphi 0, %s375
      %s377 = sphi 0, %s375
      %s378 = sphi 0, %s377
      %s392 = sphi 0, %s378
      %s396 = sphi 0, %s396
      %s398 = sphi 0, %s396
      %s399 = sphi 0, %s398
      %s413 = sphi 0, %s399
      %s417 = sphi 0, %s417
      %s419 = sphi 0, %s417
      %s420 = sphi 0, %s419
      %s434 = sphi 0, %s420
      %s438 = sphi 0, %s438
      %s440 = sphi 0, %s438
      %s441 = sphi 0, %s440
      %s455 = sphi 0, %s441
      %s459 = sphi 0, %s459
      %s461 = sphi 0, %s459
      %s462 = sphi 0, %s461
      %s476 = sphi 0, %s462
      %s480 = sphi 0, %s480
      %s482 = sphi 0, %s480
      %s483 = sphi 0, %s482
      %s497 = sphi 0, %s483
      %s501 = sphi 0, %s501
      %s503 = sphi 0, %s501
      %s504 = sphi 0, %s503
      %s518 = sphi 0, %s504
      %s522 = sphi 0, %s522
      %s524 = sphi 0, %s522
      %s525 = sphi 0, %s524
      %s539 = sphi 0, %s525
      %s543 = sphi 0, %s543
      %s545 = sphi 0, %s543
      %s546 = sphi 0, %s545
      %s560 = sphi 0, %s546
      %s564 = sphi 0, %s564
      %s566 = sphi 0, %s564
      %s567 = sphi 0, %s566
      %s581 = sphi 0, %s567
      %s585 = sphi 0, %s585
      %s587 = sphi 0, %s585
      %s588 = sphi 0, %s587
      %s602 = sphi 0, %s588
      %s606 = sphi 0, %s606
      %s608 = sphi 0, %s606
      %s609 = sphi 0, %s608
      %s623 = sphi 0, %s609
      %s631 = sphi 0, %s633
      %s634 = sphi 0, %s631
      %s635 = sphi 0, %s634
      %s651 = sphi 0, %s635
      %s659 = sphi 0, %s661
      %s662 = sphi 0, %s659
      %s663 = sphi 0, %s662
      %s679 = sphi 0, %s663
    $region4: #{tpu_custom_call.1} parent=1 // loop_header_branch
      %54 = sbr.rel (%p52) target = $region8
    $region5: #{tpu_custom_call.1} parent=1 // loop_body
      %s56 = ssub.s32 %s51, 1
      %s57 = ssub.s32 %s51, 2
      %s64 = sadd.s32 1, %s59
      %p65 = scmp.ge.s32.totalorder %s64, 1
      %s66 = scalar_select %p65, 0, %s64
      %s67 = sadd.s32 1, %s58
      %s68 = scalar_select %p65, %s67, %s58
      %p69 = scmp.ge.s32.totalorder %s68, 2
      %s70 = scalar_select %p69, 0, %s68
      %s71 = ssub.s32 %s58, %s70
      %s72 = ssub.s32 %s59, %s66
      %s73 = sor.u32 %s71, %s72
      %p74 = scmp.eq.s32.totalorder %s73, 0
      %s76 = sadd.s32 %s75, 1
      %s77 = scalar_select %p74, %s75, %s76
      %p80 = pneg %p74
      %p81 = scmp.eq.s32.totalorder %s51, 1
      %p82 = por %p80, %p81
      %p83 = scmp.ne.s32.totalorder %s75, %s78
      %p84 = scmp.eq.s32.totalorder %s51, 0
      %p85 = por %p83, %p84
      %p86 = scmp.ne.s32.totalorder %s75, %s78
      %p87 = scmp.eq.s32.totalorder %s56, 1
      %p88 = por %p86, %p87
      %p89 = scmp.ne.s32.totalorder %s78, %s79
      %p90 = scmp.eq.s32.totalorder %s56, 0
      %p91 = por %p89, %p90
      %p92 = scmp.ne.s32.totalorder %s78, %s79
      %p93 = scmp.eq.s32.totalorder %s57, 1
      %p94 = por %p92, %p93
      %p96 = scmp.ne.s32.totalorder %s79, %s95
      %p97 = scmp.eq.s32.totalorder %s57, 0
      %p98 = por %p96, %p97
      %s99 = ssub.s32 %s58, %s70
      %p100 = scmp.eq.s32.totalorder %s99, 0
      %s102 = sadd.s32 %s101, 1
      %s103 = scalar_select %p100, %s101, %s102
      %p106 = pneg %p100
      %p107 = scmp.eq.s32.totalorder %s51, 1
      %p108 = por %p106, %p107
      %p109 = scmp.ne.s32.totalorder %s101, %s104
      %p110 = scmp.eq.s32.totalorder %s51, 0
      %p111 = por %p109, %p110
      %p112 = scmp.ne.s32.totalorder %s101, %s104
      %p113 = scmp.eq.s32.totalorder %s56, 1
      %p114 = por %p112, %p113
      %p115 = scmp.ne.s32.totalorder %s104, %s105
      %p116 = scmp.eq.s32.totalorder %s56, 0
      %p117 = por %p115, %p116
      %p118 = scmp.ne.s32.totalorder %s104, %s105
      %p119 = scmp.eq.s32.totalorder %s57, 1
      %p120 = por %p118, %p119
      %p122 = scmp.ne.s32.totalorder %s105, %s121
      %p123 = scmp.eq.s32.totalorder %s57, 0
      %p124 = por %p122, %p123
      %s125 = ssub.s32 %s58, %s70
      %s126 = ssub.s32 %s59, %s66
      %s127 = sor.u32 %s125, %s126
      %p128 = scmp.eq.s32.totalorder %s127, 0
      %s130 = sadd.s32 %s129, 1
      %s131 = scalar_select %p128, %s129, %s130
      %p134 = pneg %p128
      %p135 = scmp.eq.s32.totalorder %s51, 1
      %p136 = por %p134, %p135
      %p137 = scmp.ne.s32.totalorder %s129, %s132
      %p138 = scmp.eq.s32.totalorder %s51, 0
      %p139 = por %p137, %p138
      %p140 = scmp.ne.s32.totalorder %s129, %s132
      %p141 = scmp.eq.s32.totalorder %s56, 1
      %p142 = por %p140, %p141
      %p143 = scmp.ne.s32.totalorder %s132, %s133
      %p144 = scmp.eq.s32.totalorder %s56, 0
      %p145 = por %p143, %p144
      %p146 = scmp.ne.s32.totalorder %s132, %s133
      %p147 = scmp.eq.s32.totalorder %s57, 1
      %p148 = por %p146, %p147
      %p150 = scmp.ne.s32.totalorder %s133, %s149
      %p151 = scmp.eq.s32.totalorder %s57, 0
      %p152 = por %p150, %p151
      %s153 = ssub.s32 %s58, %s70
      %p154 = scmp.eq.s32.totalorder %s153, 0
      %s156 = sadd.s32 %s155, 1
      %s157 = scalar_select %p154, %s155, %s156
      %p160 = pneg %p154
      %p161 = scmp.eq.s32.totalorder %s51, 1
      %p162 = por %p160, %p161
      %p163 = scmp.ne.s32.totalorder %s155, %s158
      %p164 = scmp.eq.s32.totalorder %s51, 0
      %p165 = por %p163, %p164
      %p166 = scmp.ne.s32.totalorder %s155, %s158
      %p167 = scmp.eq.s32.totalorder %s56, 1
      %p168 = por %p166, %p167
      %p169 = scmp.ne.s32.totalorder %s158, %s159
      %p170 = scmp.eq.s32.totalorder %s56, 0
      %p171 = por %p169, %p170
      %p172 = scmp.ne.s32.totalorder %s158, %s159
      %p173 = scmp.eq.s32.totalorder %s57, 1
      %p174 = por %p172, %p173
      %p176 = scmp.ne.s32.totalorder %s159, %s175
      %p177 = scmp.eq.s32.totalorder %s57, 0
      %p178 = por %p176, %p177
      %s179 = ssub.s32 %s58, %s70
      %s180 = ssub.s32 %s59, %s66
      %s181 = sor.u32 %s179, %s180
      %p182 = scmp.eq.s32.totalorder %s181, 0
      %s184 = sadd.s32 %s183, 1
      %s185 = scalar_select %p182, %s183, %s184
      %p188 = pneg %p182
      %p189 = scmp.eq.s32.totalorder %s51, 1
      %p190 = por %p188, %p189
      %p191 = scmp.ne.s32.totalorder %s183, %s186
      %p192 = scmp.eq.s32.totalorder %s51, 0
      %p193 = por %p191, %p192
      %p194 = scmp.ne.s32.totalorder %s183, %s186
      %p195 = scmp.eq.s32.totalorder %s56, 1
      %p196 = por %p194, %p195
      %p197 = scmp.ne.s32.totalorder %s186, %s187
      %p198 = scmp.eq.s32.totalorder %s56, 0
      %p199 = por %p197, %p198
      %p200 = scmp.ne.s32.totalorder %s186, %s187
      %p201 = scmp.eq.s32.totalorder %s57, 1
      %p202 = por %p200, %p201
      %p204 = scmp.ne.s32.totalorder %s187, %s203
      %p205 = scmp.eq.s32.totalorder %s57, 0
      %p206 = por %p204, %p205
      %s208 = sadd.s32 %s207, 1
      %p211 = scmp.eq.s32.totalorder %s51, 1
      %p212 = scmp.ne.s32.totalorder %s207, %s209
      %p213 = scmp.eq.s32.totalorder %s51, 0
      %p214 = por %p212, %p213
      %p215 = scmp.ne.s32.totalorder %s207, %s209
      %p216 = scmp.eq.s32.totalorder %s56, 1
      %p217 = por %p215, %p216
      %p218 = scmp.ne.s32.totalorder %s209, %s210
      %p219 = scmp.eq.s32.totalorder %s56, 0
      %p220 = por %p218, %p219
      %p221 = scmp.ne.s32.totalorder %s209, %s210
      %p222 = scmp.eq.s32.totalorder %s57, 1
      %p223 = por %p221, %p222
      %p225 = scmp.ne.s32.totalorder %s210, %s224
      %p226 = scmp.eq.s32.totalorder %s57, 0
      %p227 = por %p225, %p226
      %s229 = sadd.s32 %s228, 1
      %p232 = scmp.eq.s32.totalorder %s51, 1
      %p233 = scmp.ne.s32.totalorder %s228, %s230
      %p234 = scmp.eq.s32.totalorder %s51, 0
      %p235 = por %p233, %p234
      %p236 = scmp.ne.s32.totalorder %s228, %s230
      %p237 = scmp.eq.s32.totalorder %s56, 1
      %p238 = por %p236, %p237
      %p239 = scmp.ne.s32.totalorder %s230, %s231
      %p240 = scmp.eq.s32.totalorder %s56, 0
      %p241 = por %p239, %p240
      %p242 = scmp.ne.s32.totalorder %s230, %s231
      %p243 = scmp.eq.s32.totalorder %s57, 1
      %p244 = por %p242, %p243
      %p246 = scmp.ne.s32.totalorder %s231, %s245
      %p247 = scmp.eq.s32.totalorder %s57, 0
      %p248 = por %p246, %p247
      %s250 = sadd.s32 %s249, 1
      %p253 = scmp.eq.s32.totalorder %s51, 1
      %p254 = scmp.ne.s32.totalorder %s249, %s251
      %p255 = scmp.eq.s32.totalorder %s51, 0
      %p256 = por %p254, %p255
      %p257 = scmp.ne.s32.totalorder %s249, %s251
      %p258 = scmp.eq.s32.totalorder %s56, 1
      %p259 = por %p257, %p258
      %p260 = scmp.ne.s32.totalorder %s251, %s252
      %p261 = scmp.eq.s32.totalorder %s56, 0
      %p262 = por %p260, %p261
      %p263 = scmp.ne.s32.totalorder %s251, %s252
      %p264 = scmp.eq.s32.totalorder %s57, 1
      %p265 = por %p263, %p264
      %p267 = scmp.ne.s32.totalorder %s252, %s266
      %p268 = scmp.eq.s32.totalorder %s57, 0
      %p269 = por %p267, %p268
      %s271 = sadd.s32 %s270, 1
      %p274 = scmp.eq.s32.totalorder %s51, 1
      %p275 = scmp.ne.s32.totalorder %s270, %s272
      %p276 = scmp.eq.s32.totalorder %s51, 0
      %p277 = por %p275, %p276
      %p278 = scmp.ne.s32.totalorder %s270, %s272
      %p279 = scmp.eq.s32.totalorder %s56, 1
      %p280 = por %p278, %p279
      %p281 = scmp.ne.s32.totalorder %s272, %s273
      %p282 = scmp.eq.s32.totalorder %s56, 0
      %p283 = por %p281, %p282
      %p284 = scmp.ne.s32.totalorder %s272, %s273
      %p285 = scmp.eq.s32.totalorder %s57, 1
      %p286 = por %p284, %p285
      %p288 = scmp.ne.s32.totalorder %s273, %s287
      %p289 = scmp.eq.s32.totalorder %s57, 0
      %p290 = por %p288, %p289
      %s292 = sadd.s32 %s291, 1
      %p295 = scmp.eq.s32.totalorder %s51, 1
      %p296 = scmp.ne.s32.totalorder %s291, %s293
      %p297 = scmp.eq.s32.totalorder %s51, 0
      %p298 = por %p296, %p297
      %p299 = scmp.ne.s32.totalorder %s291, %s293
      %p300 = scmp.eq.s32.totalorder %s56, 1
      %p301 = por %p299, %p300
      %p302 = scmp.ne.s32.totalorder %s293, %s294
      %p303 = scmp.eq.s32.totalorder %s56, 0
      %p304 = por %p302, %p303
      %p305 = scmp.ne.s32.totalorder %s293, %s294
      %p306 = scmp.eq.s32.totalorder %s57, 1
      %p307 = por %p305, %p306
      %p309 = scmp.ne.s32.totalorder %s294, %s308
      %p310 = scmp.eq.s32.totalorder %s57, 0
      %p311 = por %p309, %p310
      %s313 = sadd.s32 %s312, 1
      %p316 = scmp.eq.s32.totalorder %s51, 1
      %p317 = scmp.ne.s32.totalorder %s312, %s314
      %p318 = scmp.eq.s32.totalorder %s51, 0
      %p319 = por %p317, %p318
      %p320 = scmp.ne.s32.totalorder %s312, %s314
      %p321 = scmp.eq.s32.totalorder %s56, 1
      %p322 = por %p320, %p321
      %p323 = scmp.ne.s32.totalorder %s314, %s315
      %p324 = scmp.eq.s32.totalorder %s56, 0
      %p325 = por %p323, %p324
      %p326 = scmp.ne.s32.totalorder %s314, %s315
      %p327 = scmp.eq.s32.totalorder %s57, 1
      %p328 = por %p326, %p327
      %p330 = scmp.ne.s32.totalorder %s315, %s329
      %p331 = scmp.eq.s32.totalorder %s57, 0
      %p332 = por %p330, %p331
      %s334 = sadd.s32 %s333, 1
      %p337 = scmp.eq.s32.totalorder %s51, 1
      %p338 = scmp.ne.s32.totalorder %s333, %s335
      %p339 = scmp.eq.s32.totalorder %s51, 0
      %p340 = por %p338, %p339
      %p341 = scmp.ne.s32.totalorder %s333, %s335
      %p342 = scmp.eq.s32.totalorder %s56, 1
      %p343 = por %p341, %p342
      %p344 = scmp.ne.s32.totalorder %s335, %s336
      %p345 = scmp.eq.s32.totalorder %s56, 0
      %p346 = por %p344, %p345
      %p347 = scmp.ne.s32.totalorder %s335, %s336
      %p348 = scmp.eq.s32.totalorder %s57, 1
      %p349 = por %p347, %p348
      %p351 = scmp.ne.s32.totalorder %s336, %s350
      %p352 = scmp.eq.s32.totalorder %s57, 0
      %p353 = por %p351, %p352
      %s355 = sadd.s32 %s354, 1
      %p358 = scmp.eq.s32.totalorder %s51, 1
      %p359 = scmp.ne.s32.totalorder %s354, %s356
      %p360 = scmp.eq.s32.totalorder %s51, 0
      %p361 = por %p359, %p360
      %p362 = scmp.ne.s32.totalorder %s354, %s356
      %p363 = scmp.eq.s32.totalorder %s56, 1
      %p364 = por %p362, %p363
      %p365 = scmp.ne.s32.totalorder %s356, %s357
      %p366 = scmp.eq.s32.totalorder %s56, 0
      %p367 = por %p365, %p366
      %p368 = scmp.ne.s32.totalorder %s356, %s357
      %p369 = scmp.eq.s32.totalorder %s57, 1
      %p370 = por %p368, %p369
      %p372 = scmp.ne.s32.totalorder %s357, %s371
      %p373 = scmp.eq.s32.totalorder %s57, 0
      %p374 = por %p372, %p373
      %s376 = sadd.s32 %s375, 1
      %p379 = scmp.eq.s32.totalorder %s51, 1
      %p380 = scmp.ne.s32.totalorder %s375, %s377
      %p381 = scmp.eq.s32.totalorder %s51, 0
      %p382 = por %p380, %p381
      %p383 = scmp.ne.s32.totalorder %s375, %s377
      %p384 = scmp.eq.s32.totalorder %s56, 1
      %p385 = por %p383, %p384
      %p386 = scmp.ne.s32.totalorder %s377, %s378
      %p387 = scmp.eq.s32.totalorder %s56, 0
      %p388 = por %p386, %p387
      %p389 = scmp.ne.s32.totalorder %s377, %s378
      %p390 = scmp.eq.s32.totalorder %s57, 1
      %p391 = por %p389, %p390
      %p393 = scmp.ne.s32.totalorder %s378, %s392
      %p394 = scmp.eq.s32.totalorder %s57, 0
      %p395 = por %p393, %p394
      %s397 = sadd.s32 %s396, 1
      %p400 = scmp.eq.s32.totalorder %s51, 1
      %p401 = scmp.ne.s32.totalorder %s396, %s398
      %p402 = scmp.eq.s32.totalorder %s51, 0
      %p403 = por %p401, %p402
      %p404 = scmp.ne.s32.totalorder %s396, %s398
      %p405 = scmp.eq.s32.totalorder %s56, 1
      %p406 = por %p404, %p405
      %p407 = scmp.ne.s32.totalorder %s398, %s399
      %p408 = scmp.eq.s32.totalorder %s56, 0
      %p409 = por %p407, %p408
      %p410 = scmp.ne.s32.totalorder %s398, %s399
      %p411 = scmp.eq.s32.totalorder %s57, 1
      %p412 = por %p410, %p411
      %p414 = scmp.ne.s32.totalorder %s399, %s413
      %p415 = scmp.eq.s32.totalorder %s57, 0
      %p416 = por %p414, %p415
      %s418 = sadd.s32 %s417, 1
      %p421 = scmp.eq.s32.totalorder %s51, 1
      %p422 = scmp.ne.s32.totalorder %s417, %s419
      %p423 = scmp.eq.s32.totalorder %s51, 0
      %p424 = por %p422, %p423
      %p425 = scmp.ne.s32.totalorder %s417, %s419
      %p426 = scmp.eq.s32.totalorder %s56, 1
      %p427 = por %p425, %p426
      %p428 = scmp.ne.s32.totalorder %s419, %s420
      %p429 = scmp.eq.s32.totalorder %s56, 0
      %p430 = por %p428, %p429
      %p431 = scmp.ne.s32.totalorder %s419, %s420
      %p432 = scmp.eq.s32.totalorder %s57, 1
      %p433 = por %p431, %p432
      %p435 = scmp.ne.s32.totalorder %s420, %s434
      %p436 = scmp.eq.s32.totalorder %s57, 0
      %p437 = por %p435, %p436
      %s439 = sadd.s32 %s438, 1
      %p442 = scmp.eq.s32.totalorder %s51, 1
      %p443 = scmp.ne.s32.totalorder %s438, %s440
      %p444 = scmp.eq.s32.totalorder %s51, 0
      %p445 = por %p443, %p444
      %p446 = scmp.ne.s32.totalorder %s438, %s440
      %p447 = scmp.eq.s32.totalorder %s56, 1
      %p448 = por %p446, %p447
      %p449 = scmp.ne.s32.totalorder %s440, %s441
      %p450 = scmp.eq.s32.totalorder %s56, 0
      %p451 = por %p449, %p450
      %p452 = scmp.ne.s32.totalorder %s440, %s441
      %p453 = scmp.eq.s32.totalorder %s57, 1
      %p454 = por %p452, %p453
      %p456 = scmp.ne.s32.totalorder %s441, %s455
      %p457 = scmp.eq.s32.totalorder %s57, 0
      %p458 = por %p456, %p457
      %s460 = sadd.s32 %s459, 1
      %p463 = scmp.eq.s32.totalorder %s51, 1
      %p464 = scmp.ne.s32.totalorder %s459, %s461
      %p465 = scmp.eq.s32.totalorder %s51, 0
      %p466 = por %p464, %p465
      %p467 = scmp.ne.s32.totalorder %s459, %s461
      %p468 = scmp.eq.s32.totalorder %s56, 1
      %p469 = por %p467, %p468
      %p470 = scmp.ne.s32.totalorder %s461, %s462
      %p471 = scmp.eq.s32.totalorder %s56, 0
      %p472 = por %p470, %p471
      %p473 = scmp.ne.s32.totalorder %s461, %s462
      %p474 = scmp.eq.s32.totalorder %s57, 1
      %p475 = por %p473, %p474
      %p477 = scmp.ne.s32.totalorder %s462, %s476
      %p478 = scmp.eq.s32.totalorder %s57, 0
      %p479 = por %p477, %p478
      %s481 = sadd.s32 %s480, 1
      %p484 = scmp.eq.s32.totalorder %s51, 1
      %p485 = scmp.ne.s32.totalorder %s480, %s482
      %p486 = scmp.eq.s32.totalorder %s51, 0
      %p487 = por %p485, %p486
      %p488 = scmp.ne.s32.totalorder %s480, %s482
      %p489 = scmp.eq.s32.totalorder %s56, 1
      %p490 = por %p488, %p489
      %p491 = scmp.ne.s32.totalorder %s482, %s483
      %p492 = scmp.eq.s32.totalorder %s56, 0
      %p493 = por %p491, %p492
      %p494 = scmp.ne.s32.totalorder %s482, %s483
      %p495 = scmp.eq.s32.totalorder %s57, 1
      %p496 = por %p494, %p495
      %p498 = scmp.ne.s32.totalorder %s483, %s497
      %p499 = scmp.eq.s32.totalorder %s57, 0
      %p500 = por %p498, %p499
      %s502 = sadd.s32 %s501, 1
      %p505 = scmp.eq.s32.totalorder %s51, 1
      %p506 = scmp.ne.s32.totalorder %s501, %s503
      %p507 = scmp.eq.s32.totalorder %s51, 0
      %p508 = por %p506, %p507
      %p509 = scmp.ne.s32.totalorder %s501, %s503
      %p510 = scmp.eq.s32.totalorder %s56, 1
      %p511 = por %p509, %p510
      %p512 = scmp.ne.s32.totalorder %s503, %s504
      %p513 = scmp.eq.s32.totalorder %s56, 0
      %p514 = por %p512, %p513
      %p515 = scmp.ne.s32.totalorder %s503, %s504
      %p516 = scmp.eq.s32.totalorder %s57, 1
      %p517 = por %p515, %p516
      %p519 = scmp.ne.s32.totalorder %s504, %s518
      %p520 = scmp.eq.s32.totalorder %s57, 0
      %p521 = por %p519, %p520
      %s523 = sadd.s32 %s522, 1
      %p526 = scmp.eq.s32.totalorder %s51, 1
      %p527 = scmp.ne.s32.totalorder %s522, %s524
      %p528 = scmp.eq.s32.totalorder %s51, 0
      %p529 = por %p527, %p528
      %p530 = scmp.ne.s32.totalorder %s522, %s524
      %p531 = scmp.eq.s32.totalorder %s56, 1
      %p532 = por %p530, %p531
      %p533 = scmp.ne.s32.totalorder %s524, %s525
      %p534 = scmp.eq.s32.totalorder %s56, 0
      %p535 = por %p533, %p534
      %p536 = scmp.ne.s32.totalorder %s524, %s525
      %p537 = scmp.eq.s32.totalorder %s57, 1
      %p538 = por %p536, %p537
      %p540 = scmp.ne.s32.totalorder %s525, %s539
      %p541 = scmp.eq.s32.totalorder %s57, 0
      %p542 = por %p540, %p541
      %s544 = sadd.s32 %s543, 1
      %p547 = scmp.eq.s32.totalorder %s51, 1
      %p548 = scmp.ne.s32.totalorder %s543, %s545
      %p549 = scmp.eq.s32.totalorder %s51, 0
      %p550 = por %p548, %p549
      %p551 = scmp.ne.s32.totalorder %s543, %s545
      %p552 = scmp.eq.s32.totalorder %s56, 1
      %p553 = por %p551, %p552
      %p554 = scmp.ne.s32.totalorder %s545, %s546
      %p555 = scmp.eq.s32.totalorder %s56, 0
      %p556 = por %p554, %p555
      %p557 = scmp.ne.s32.totalorder %s545, %s546
      %p558 = scmp.eq.s32.totalorder %s57, 1
      %p559 = por %p557, %p558
      %p561 = scmp.ne.s32.totalorder %s546, %s560
      %p562 = scmp.eq.s32.totalorder %s57, 0
      %p563 = por %p561, %p562
      %s565 = sadd.s32 %s564, 1
      %p568 = scmp.eq.s32.totalorder %s51, 1
      %p569 = scmp.ne.s32.totalorder %s564, %s566
      %p570 = scmp.eq.s32.totalorder %s51, 0
      %p571 = por %p569, %p570
      %p572 = scmp.ne.s32.totalorder %s564, %s566
      %p573 = scmp.eq.s32.totalorder %s56, 1
      %p574 = por %p572, %p573
      %p575 = scmp.ne.s32.totalorder %s566, %s567
      %p576 = scmp.eq.s32.totalorder %s56, 0
      %p577 = por %p575, %p576
      %p578 = scmp.ne.s32.totalorder %s566, %s567
      %p579 = scmp.eq.s32.totalorder %s57, 1
      %p580 = por %p578, %p579
      %p582 = scmp.ne.s32.totalorder %s567, %s581
      %p583 = scmp.eq.s32.totalorder %s57, 0
      %p584 = por %p582, %p583
      %s586 = sadd.s32 %s585, 1
      %p589 = scmp.eq.s32.totalorder %s51, 1
      %p590 = scmp.ne.s32.totalorder %s585, %s587
      %p591 = scmp.eq.s32.totalorder %s51, 0
      %p592 = por %p590, %p591
      %p593 = scmp.ne.s32.totalorder %s585, %s587
      %p594 = scmp.eq.s32.totalorder %s56, 1
      %p595 = por %p593, %p594
      %p596 = scmp.ne.s32.totalorder %s587, %s588
      %p597 = scmp.eq.s32.totalorder %s56, 0
      %p598 = por %p596, %p597
      %p599 = scmp.ne.s32.totalorder %s587, %s588
      %p600 = scmp.eq.s32.totalorder %s57, 1
      %p601 = por %p599, %p600
      %p603 = scmp.ne.s32.totalorder %s588, %s602
      %p604 = scmp.eq.s32.totalorder %s57, 0
      %p605 = por %p603, %p604
      %s607 = sadd.s32 %s606, 1
      %p610 = scmp.eq.s32.totalorder %s51, 1
      %p611 = scmp.ne.s32.totalorder %s606, %s608
      %p612 = scmp.eq.s32.totalorder %s51, 0
      %p613 = por %p611, %p612
      %p614 = scmp.ne.s32.totalorder %s606, %s608
      %p615 = scmp.eq.s32.totalorder %s56, 1
      %p616 = por %p614, %p615
      %p617 = scmp.ne.s32.totalorder %s608, %s609
      %p618 = scmp.eq.s32.totalorder %s56, 0
      %p619 = por %p617, %p618
      %p620 = scmp.ne.s32.totalorder %s608, %s609
      %p621 = scmp.eq.s32.totalorder %s57, 1
      %p622 = por %p620, %p621
      %p624 = scmp.ne.s32.totalorder %s609, %s623
      %p625 = scmp.eq.s32.totalorder %s57, 0
      %p626 = por %p624, %p625
      %s627 = ssub.s32 %s58, %s70
      %s628 = ssub.s32 %s59, %s66
      %s629 = sor.u32 %s627, %s628
      %p630 = scmp.eq.s32.totalorder %s629, 0
      %s632 = sadd.s32 %s631, 1
      %s633 = scalar_select %p630, %s631, %s632
      %p636 = pneg %p630
      %p637 = scmp.eq.s32.totalorder %s51, 1
      %p638 = por %p636, %p637
      %p639 = scmp.ne.s32.totalorder %s631, %s634
      %p640 = scmp.eq.s32.totalorder %s51, 0
      %p641 = por %p639, %p640
      %p642 = scmp.ne.s32.totalorder %s631, %s634
      %p643 = scmp.eq.s32.totalorder %s56, 1
      %p644 = por %p642, %p643
      %p645 = scmp.ne.s32.totalorder %s634, %s635
      %p646 = scmp.eq.s32.totalorder %s56, 0
      %p647 = por %p645, %p646
      %p648 = scmp.ne.s32.totalorder %s634, %s635
      %p649 = scmp.eq.s32.totalorder %s57, 1
      %p650 = por %p648, %p649
      %p652 = scmp.ne.s32.totalorder %s635, %s651
      %p653 = scmp.eq.s32.totalorder %s57, 0
      %p654 = por %p652, %p653
      %s655 = ssub.s32 %s58, %s70
      %s656 = ssub.s32 %s59, %s66
      %s657 = sor.u32 %s655, %s656
      %p658 = scmp.eq.s32.totalorder %s657, 0
      %s660 = sadd.s32 %s659, 1
      %s661 = scalar_select %p658, %s659, %s660
      %p664 = pneg %p658
      %p665 = scmp.eq.s32.totalorder %s51, 1
      %p666 = por %p664, %p665
      %p667 = scmp.ne.s32.totalorder %s659, %s662
      %p668 = scmp.eq.s32.totalorder %s51, 0
      %p669 = por %p667, %p668
      %p670 = scmp.ne.s32.totalorder %s659, %s662
      %p671 = scmp.eq.s32.totalorder %s56, 1
      %p672 = por %p670, %p671
      %p673 = scmp.ne.s32.totalorder %s662, %s663
      %p674 = scmp.eq.s32.totalorder %s56, 0
      %p675 = por %p673, %p674
      %p676 = scmp.ne.s32.totalorder %s662, %s663
      %p677 = scmp.eq.s32.totalorder %s57, 1
      %p678 = por %p676, %p677
      %p680 = scmp.ne.s32.totalorder %s663, %s679
      %p681 = scmp.eq.s32.totalorder %s57, 0
      %p682 = por %p680, %p681
      %p683 = scmp.le.s32.totalorder 1, %s51
      %p684 = scmp.lt.s32.totalorder %s51, 3
      %p685 = pnand %p683, %p684
      %p686 = pneg %p685
      // Predicated region
      $region9: #{tpu_custom_call.1} parent=5 // pred_check
        _
      $region10: #{tpu_custom_call.1} parent=5 // pred_check_branch
        %688 = sbr.rel (%p685) target = $region12
      $region11: #{tpu_custom_call.1} parent=5 // pred_region
        %s689 = ssub.s32 %s51, 1
        // Predicated region
        $region13: #{tpu_custom_call.1} parent=11 // pred_check
          %p690 = pneg %p220
        $region14: #{tpu_custom_call.1} parent=11 // pred_check_branch
          %692 = sbr.rel (%p690) target = $region16
        $region15: #{tpu_custom_call.1} parent=11 // pred_region
          _
        $region16: #{tpu_custom_call.1} parent=11 // pred_fallthru
          _
        // Predicated region
        $region17: #{tpu_custom_call.1} parent=11 // pred_check
          %p693 = pneg %p241
        $region18: #{tpu_custom_call.1} parent=11 // pred_check_branch
          %695 = sbr.rel (%p693) target = $region20
        $region19: #{tpu_custom_call.1} parent=11 // pred_region
          _
        $region20: #{tpu_custom_call.1} parent=11 // pred_fallthru
          _
        // Predicated region
        $region21: #{tpu_custom_call.1} parent=11 // pred_check
          %p696 = pneg %p262
        $region22: #{tpu_custom_call.1} parent=11 // pred_check_branch
          %698 = sbr.rel (%p696) target = $region24
        $region23: #{tpu_custom_call.1} parent=11 // pred_region
          _
        $region24: #{tpu_custom_call.1} parent=11 // pred_fallthru
          _
        // Predicated region
        $region25: #{tpu_custom_call.1} parent=11 // pred_check
          %p699 = pneg %p283
        $region26: #{tpu_custom_call.1} parent=11 // pred_check_branch
          %701 = sbr.rel (%p699) target = $region28
        $region27: #{tpu_custom_call.1} parent=11 // pred_region
          %s703 = ssub.s32 256, 256
          %704 = vsyncadd [#allocation9], %s703
          %s705 = sshll.u32 [#allocation10], 4
          %s706 = int_to_ptr.vmem [resolvable:$true] %s705
          %711 = dma.hbm_to_vmem [thread:$0]  %s8, 256, %s706, [#allocation9], 64, 64, 4
        $region28: #{tpu_custom_call.1} parent=11 // pred_fallthru
          _
        // Predicated region
        $region29: #{tpu_custom_call.1} parent=11 // pred_check
          %p712 = pneg %p304
        $region30: #{tpu_custom_call.1} parent=11 // pred_check_branch
          %714 = sbr.rel (%p712) target = $region32
        $region31: #{tpu_custom_call.1} parent=11 // pred_region
          %s716 = ssub.s32 16, 16
          %717 = vsyncadd [#allocation12], %s716
          %s719 = sshll.u32 [#allocation11], 4
          %s720 = int_to_ptr.vmem [resolvable:$true] %s719
          %722 = dma.hbm_to_vmem [thread:$0]  %s9, 16, %s720, [#allocation12]
        $region32: #{tpu_custom_call.1} parent=11 // pred_fallthru
          _
        // Predicated region
        $region33: #{tpu_custom_call.1} parent=11 // pred_check
          %p723 = pneg %p325
        $region34: #{tpu_custom_call.1} parent=11 // pred_check_branch
          %725 = sbr.rel (%p723) target = $region36
        $region35: #{tpu_custom_call.1} parent=11 // pred_region
          _
        $region36: #{tpu_custom_call.1} parent=11 // pred_fallthru
          _
        // Predicated region
        $region37: #{tpu_custom_call.1} parent=11 // pred_check
          %p726 = pneg %p346
        $region38: #{tpu_custom_call.1} parent=11 // pred_check_branch
          %728 = sbr.rel (%p726) target = $region40
        $region39: #{tpu_custom_call.1} parent=11 // pred_region
          %s730 = ssub.s32 256, 256
          %731 = vsyncadd [#allocation12], %s730
          %s732 = sshll.u32 [#allocation13], 4
          %s733 = int_to_ptr.vmem [resolvable:$true] %s732
          %738 = dma.hbm_to_vmem [thread:$0]  %s11, 256, %s733, [#allocation12], 64, 64, 4
        $region40: #{tpu_custom_call.1} parent=11 // pred_fallthru
          _
        // Predicated region
        $region41: #{tpu_custom_call.1} parent=11 // pred_check
          %p739 = pneg %p367
        $region42: #{tpu_custom_call.1} parent=11 // pred_check_branch
          %741 = sbr.rel (%p739) target = $region44
        $region43: #{tpu_custom_call.1} parent=11 // pred_region
          %s743 = ssub.s32 256, 256
          %744 = vsyncadd [#allocation15], %s743
          %s745 = sshll.u32 [#allocation14], 4
          %s746 = int_to_ptr.vmem [resolvable:$true] %s745
          %751 = dma.hbm_to_vmem [thread:$0]  %s12, 256, %s746, [#allocation15], 64, 64, 4
        $region44: #{tpu_custom_call.1} parent=11 // pred_fallthru
          _
        // Predicated region
        $region45: #{tpu_custom_call.1} parent=11 // pred_check
          %p752 = pneg %p388
        $region46: #{tpu_custom_call.1} parent=11 // pred_check_branch
          %754 = sbr.rel (%p752) target = $region48
        $region47: #{tpu_custom_call.1} parent=11 // pred_region
          _
        $region48: #{tpu_custom_call.1} parent=11 // pred_fallthru
          _
        // Predicated region
        $region49: #{tpu_custom_call.1} parent=11 // pred_check
          %p755 = pneg %p409
        $region50: #{tpu_custom_call.1} parent=11 // pred_check_branch
          %757 = sbr.rel (%p755) target = $region52
        $region51: #{tpu_custom_call.1} parent=11 // pred_region
          %s759 = ssub.s32 16, 16
          %760 = vsyncadd [#allocation15], %s759
          %s762 = sshll.u32 [#allocation16], 4
          %s763 = int_to_ptr.vmem [resolvable:$true] %s762
          %765 = dma.hbm_to_vmem [thread:$0]  %s14, 16, %s763, [#allocation15]
        $region52: #{tpu_custom_call.1} parent=11 // pred_fallthru
          _
        // Predicated region
        $region53: #{tpu_custom_call.1} parent=11 // pred_check
          %p766 = pneg %p430
        $region54: #{tpu_custom_call.1} parent=11 // pred_check_branch
          %768 = sbr.rel (%p766) target = $region56
        $region55: #{tpu_custom_call.1} parent=11 // pred_region
          %s770 = ssub.s32 256, 256
          %771 = vsyncadd [#allocation18], %s770
          %s772 = sshll.u32 [#allocation17], 4
          %s773 = int_to_ptr.vmem [resolvable:$true] %s772
          %778 = dma.hbm_to_vmem [thread:$0]  %s15, 256, %s773, [#allocation18], 64, 64, 4
        $region56: #{tpu_custom_call.1} parent=11 // pred_fallthru
          _
        // Predicated region
        $region57: #{tpu_custom_call.1} parent=11 // pred_check
          %p779 = pneg %p451
        $region58: #{tpu_custom_call.1} parent=11 // pred_check_branch
          %781 = sbr.rel (%p779) target = $region60
        $region59: #{tpu_custom_call.1} parent=11 // pred_region
          %s783 = ssub.s32 16, 16
          %784 = vsyncadd [#allocation18], %s783
          %s786 = sshll.u32 [#allocation19], 4
          %s787 = int_to_ptr.vmem [resolvable:$true] %s786
          %789 = dma.hbm_to_vmem [thread:$0]  %s16, 16, %s787, [#allocation18]
        $region60: #{tpu_custom_call.1} parent=11 // pred_fallthru
          _
        // Predicated region
        $region61: #{tpu_custom_call.1} parent=11 // pred_check
          %p790 = pneg %p472
        $region62: #{tpu_custom_call.1} parent=11 // pred_check_branch
          %792 = sbr.rel (%p790) target = $region64
        $region63: #{tpu_custom_call.1} parent=11 // pred_region
          _
        $region64: #{tpu_custom_call.1} parent=11 // pred_fallthru
          _
        // Predicated region
        $region65: #{tpu_custom_call.1} parent=11 // pred_check
          %p793 = pneg %p493
        $region66: #{tpu_custom_call.1} parent=11 // pred_check_branch
          %795 = sbr.rel (%p793) target = $region68
        $region67: #{tpu_custom_call.1} parent=11 // pred_region
          _
        $region68: #{tpu_custom_call.1} parent=11 // pred_fallthru
          _
        // Predicated region
        $region69: #{tpu_custom_call.1} parent=11 // pred_check
          %p796 = pneg %p514
        $region70: #{tpu_custom_call.1} parent=11 // pred_check_branch
          %798 = sbr.rel (%p796) target = $region72
        $region71: #{tpu_custom_call.1} parent=11 // pred_region
          _
        $region72: #{tpu_custom_call.1} parent=11 // pred_fallthru
          _
        // Predicated region
        $region73: #{tpu_custom_call.1} parent=11 // pred_check
          %p799 = pneg %p535
        $region74: #{tpu_custom_call.1} parent=11 // pred_check_branch
          %801 = sbr.rel (%p799) target = $region76
        $region75: #{tpu_custom_call.1} parent=11 // pred_region
          _
        $region76: #{tpu_custom_call.1} parent=11 // pred_fallthru
          _
        // Predicated region
        $region77: #{tpu_custom_call.1} parent=11 // pred_check
          %p802 = pneg %p556
        $region78: #{tpu_custom_call.1} parent=11 // pred_check_branch
          %804 = sbr.rel (%p802) target = $region80
        $region79: #{tpu_custom_call.1} parent=11 // pred_region
          _
        $region80: #{tpu_custom_call.1} parent=11 // pred_fallthru
          _
        // Predicated region
        $region81: #{tpu_custom_call.1} parent=11 // pred_check
          %p805 = pneg %p577
        $region82: #{tpu_custom_call.1} parent=11 // pred_check_branch
          %807 = sbr.rel (%p805) target = $region84
        $region83: #{tpu_custom_call.1} parent=11 // pred_region
          _
        $region84: #{tpu_custom_call.1} parent=11 // pred_fallthru
          _
        // Predicated region
        $region85: #{tpu_custom_call.1} parent=11 // pred_check
          %p808 = pneg %p598
        $region86: #{tpu_custom_call.1} parent=11 // pred_check_branch
          %810 = sbr.rel (%p808) target = $region88
        $region87: #{tpu_custom_call.1} parent=11 // pred_region
          _
        $region88: #{tpu_custom_call.1} parent=11 // pred_fallthru
          _
        // Predicated region
        $region89: #{tpu_custom_call.1} parent=11 // pred_check
          %p811 = pneg %p619
        $region90: #{tpu_custom_call.1} parent=11 // pred_check_branch
          %813 = sbr.rel (%p811) target = $region92
        $region91: #{tpu_custom_call.1} parent=11 // pred_region
          _
        $region92: #{tpu_custom_call.1} parent=11 // pred_fallthru
          _
      $region12: #{tpu_custom_call.1} parent=5 // pred_fallthru
        _
      %p814 = scmp.lt.s32.totalorder %s51, 2
      // Predicated region
      $region93: #{tpu_custom_call.1} parent=5 // pred_check
        %p815 = pneg %p814
      $region94: #{tpu_custom_call.1} parent=5 // pred_check_branch
        %817 = sbr.rel (%p815) target = $region96
      $region95: #{tpu_custom_call.1} parent=5 // pred_region
        // Predicated region
        $region97: #{tpu_custom_call.1} parent=95 // pred_check
          %p818 = pneg %p85
        $region98: #{tpu_custom_call.1} parent=95 // pred_check_branch
          %820 = sbr.rel (%p818) target = $region100
        $region99: #{tpu_custom_call.1} parent=95 // pred_region
          %p821 = scmp.lt.s32.totalorder %s58, 1
          %s822 = scalar_select %p821, %s58, 1
          %p823 = scmp.lt.s32.totalorder %s59, 0
          %s824 = scalar_select %p823, %s59, 0
          %s825 = sadd.s32 %s824, %s822
          %s826 = smul.addr %s825, 8
          %s827 = scalar_lea.vmem %s0, %s826
        $region100: #{tpu_custom_call.1} parent=95 // pred_fallthru
          _
        // Predicated region
        $region101: #{tpu_custom_call.1} parent=95 // pred_check
          %p828 = pneg %p111
        $region102: #{tpu_custom_call.1} parent=95 // pred_check_branch
          %830 = sbr.rel (%p828) target = $region104
        $region103: #{tpu_custom_call.1} parent=95 // pred_region
          %s831 = sand.u32 %s101, 1
          %s832 = scalar_lea.sflag [#allocation3], %s831
          %s833 = sand.u32 %s101, 1
          %s834 = smul.addr %s833, 4
          %s835 = scalar_lea.vmem [#allocation2], %s834
          %s837 = ssub.s32 64, 64
          %838 = vsyncadd %s832, %s837
          %s839 = smul.addr %s58, 64
          %s840 = scalar_lea.hbm %s1, %s839
          %s842 = sshll.u32 %s835, 4
          %s843 = int_to_ptr.vmem [resolvable:$true] %s842
          %845 = dma.hbm_to_vmem [thread:$0]  %s840, 64, %s843, %s832
        $region104: #{tpu_custom_call.1} parent=95 // pred_fallthru
          _
        // Predicated region
        $region105: #{tpu_custom_call.1} parent=95 // pred_check
          %p846 = pneg %p139
        $region106: #{tpu_custom_call.1} parent=95 // pred_check_branch
          %848 = sbr.rel (%p846) target = $region108
        $region107: #{tpu_custom_call.1} parent=95 // pred_region
          %s849 = sand.u32 %s51, 1
          %s850 = scalar_lea.sflag [#allocation6], %s849
          %s851 = sand.u32 %s129, 1
          %s852 = smul.addr %s851, 2
          %s853 = scalar_lea.vmem [#allocation5], %s852
          %s855 = ssub.s32 32, 32
          %856 = vsyncadd %s850, %s855
          %s857 = sadd.s32 %s59, %s58
          %s858 = smul.addr %s857, 32
          %s859 = scalar_lea.hbm %s2, %s858
          %s861 = sshll.u32 %s853, 4
          %s862 = int_to_ptr.vmem [resolvable:$true] %s861
          %864 = dma.hbm_to_vmem [thread:$0]  %s859, 32, %s862, %s850
        $region108: #{tpu_custom_call.1} parent=95 // pred_fallthru
          _
        // Predicated region
        $region109: #{tpu_custom_call.1} parent=95 // pred_check
          %p865 = pneg %p165
        $region110: #{tpu_custom_call.1} parent=95 // pred_check_branch
          %867 = sbr.rel (%p865) target = $region112
        $region111: #{tpu_custom_call.1} parent=95 // pred_region
          %s868 = sand.u32 %s51, 1
          %s869 = scalar_lea.sflag [#allocation6], %s868
          %s870 = sand.u32 %s155, 1
          %s871 = smul.addr %s870, 4
          %s872 = scalar_lea.vmem [#allocation7], %s871
          %s874 = ssub.s32 64, 64
          %875 = vsyncadd %s869, %s874
          %s876 = smul.addr %s58, 64
          %s877 = scalar_lea.hbm %s3, %s876
          %s879 = sshll.u32 %s872, 4
          %s880 = int_to_ptr.vmem [resolvable:$true] %s879
          %882 = dma.hbm_to_vmem [thread:$0]  %s877, 64, %s880, %s869
        $region112: #{tpu_custom_call.1} parent=95 // pred_fallthru
          _
        // Predicated region
        $region113: #{tpu_custom_call.1} parent=95 // pred_check
          %p883 = pneg %p193
        $region114: #{tpu_custom_call.1} parent=95 // pred_check_branch
          %885 = sbr.rel (%p883) target = $region116
        $region115: #{tpu_custom_call.1} parent=95 // pred_region
          %s886 = sand.u32 %s51, 1
          %s887 = scalar_lea.sflag [#allocation9], %s886
          %s888 = sand.u32 %s183, 1
          %s889 = smul.addr %s888, 2
          %s890 = scalar_lea.vmem [#allocation8], %s889
          %s892 = ssub.s32 32, 32
          %893 = vsyncadd %s887, %s892
          %s894 = sadd.s32 %s59, %s58
          %s895 = smul.addr %s894, 32
          %s896 = scalar_lea.hbm %s4, %s895
          %s898 = sshll.u32 %s890, 4
          %s899 = int_to_ptr.vmem [resolvable:$true] %s898
          %901 = dma.hbm_to_vmem [thread:$0]  %s896, 32, %s899, %s887
        $region116: #{tpu_custom_call.1} parent=95 // pred_fallthru
          _
      $region96: #{tpu_custom_call.1} parent=5 // pred_fallthru
        _
      %p902 = scmp.le.s32.totalorder 1, %s51
      %p903 = scmp.lt.s32.totalorder %s51, 3
      %p904 = pnand %p902, %p903
      %p905 = pneg %p904
      // Predicated region
      $region117: #{tpu_custom_call.1} parent=5 // pred_check
        _
      $region118: #{tpu_custom_call.1} parent=5 // pred_check_branch
        %907 = sbr.rel (%p904) target = $region120
      $region119: #{tpu_custom_call.1} parent=5 // pred_region
        %s908 = ssub.s32 %s51, 1
        %s909 = sand.u32 %s104, 1
        %s910 = scalar_lea.sflag [#allocation3], %s909
        %s911 = sand.u32 %s104, 1
        %s912 = smul.addr %s911, 4
        %s913 = scalar_lea.vmem [#allocation2], %s912
        // Predicated region
        $region121: #{tpu_custom_call.1} parent=119 // pred_check
          %p914 = pneg %p117
        $region122: #{tpu_custom_call.1} parent=119 // pred_check_branch
          %916 = sbr.rel (%p914) target = $region124
        $region123: #{tpu_custom_call.1} parent=119 // pred_region
          %917 = dma.done %s910, 64
        $region124: #{tpu_custom_call.1} parent=119 // pred_fallthru
          _
        %s918 = sand.u32 %s56, 1
        %s919 = scalar_lea.sflag [#allocation6], %s918
        %s920 = sand.u32 %s132, 1
        %s921 = smul.addr %s920, 2
        %s922 = scalar_lea.vmem [#allocation5], %s921
        // Predicated region
        $region125: #{tpu_custom_call.1} parent=119 // pred_check
          %p923 = pneg %p145
        $region126: #{tpu_custom_call.1} parent=119 // pred_check_branch
          %925 = sbr.rel (%p923) target = $region128
        $region127: #{tpu_custom_call.1} parent=119 // pred_region
          %926 = dma.done %s919, 32
        $region128: #{tpu_custom_call.1} parent=119 // pred_fallthru
          _
        %s927 = sand.u32 %s56, 1
        %s928 = scalar_lea.sflag [#allocation6], %s927
        %s929 = sand.u32 %s158, 1
        %s930 = smul.addr %s929, 4
        %s931 = scalar_lea.vmem [#allocation7], %s930
        // Predicated region
        $region129: #{tpu_custom_call.1} parent=119 // pred_check
          %p932 = pneg %p171
        $region130: #{tpu_custom_call.1} parent=119 // pred_check_branch
          %934 = sbr.rel (%p932) target = $region132
        $region131: #{tpu_custom_call.1} parent=119 // pred_region
          %935 = dma.done %s928, 64
        $region132: #{tpu_custom_call.1} parent=119 // pred_fallthru
          _
        %s936 = sand.u32 %s56, 1
        %s937 = scalar_lea.sflag [#allocation9], %s936
        %s938 = sand.u32 %s186, 1
        %s939 = smul.addr %s938, 2
        %s940 = scalar_lea.vmem [#allocation8], %s939
        // Predicated region
        $region133: #{tpu_custom_call.1} parent=119 // pred_check
          %p941 = pneg %p199
        $region134: #{tpu_custom_call.1} parent=119 // pred_check_branch
          %943 = sbr.rel (%p941) target = $region136
        $region135: #{tpu_custom_call.1} parent=119 // pred_region
          %944 = dma.done %s937, 32
        $region136: #{tpu_custom_call.1} parent=119 // pred_fallthru
          _
        // Predicated region
        $region137: #{tpu_custom_call.1} parent=119 // pred_check
          %p945 = pneg %p283
        $region138: #{tpu_custom_call.1} parent=119 // pred_check_branch
          %947 = sbr.rel (%p945) target = $region140
        $region139: #{tpu_custom_call.1} parent=119 // pred_region
          %948 = dma.done [#allocation9], 256
        $region140: #{tpu_custom_call.1} parent=119 // pred_fallthru
          _
        // Predicated region
        $region141: #{tpu_custom_call.1} parent=119 // pred_check
          %p949 = pneg %p304
        $region142: #{tpu_custom_call.1} parent=119 // pred_check_branch
          %951 = sbr.rel (%p949) target = $region144
        $region143: #{tpu_custom_call.1} parent=119 // pred_region
          %952 = dma.done [#allocation12], 16
        $region144: #{tpu_custom_call.1} parent=119 // pred_fallthru
          _
        // Predicated region
        $region145: #{tpu_custom_call.1} parent=119 // pred_check
          %p953 = pneg %p346
        $region146: #{tpu_custom_call.1} parent=119 // pred_check_branch
          %955 = sbr.rel (%p953) target = $region148
        $region147: #{tpu_custom_call.1} parent=119 // pred_region
          %956 = dma.done [#allocation12], 256
        $region148: #{tpu_custom_call.1} parent=119 // pred_fallthru
          _
        // Predicated region
        $region149: #{tpu_custom_call.1} parent=119 // pred_check
          %p957 = pneg %p367
        $region150: #{tpu_custom_call.1} parent=119 // pred_check_branch
          %959 = sbr.rel (%p957) target = $region152
        $region151: #{tpu_custom_call.1} parent=119 // pred_region
          %960 = dma.done [#allocation15], 256
        $region152: #{tpu_custom_call.1} parent=119 // pred_fallthru
          _
        // Predicated region
        $region153: #{tpu_custom_call.1} parent=119 // pred_check
          %p961 = pneg %p409
        $region154: #{tpu_custom_call.1} parent=119 // pred_check_branch
          %963 = sbr.rel (%p961) target = $region156
        $region155: #{tpu_custom_call.1} parent=119 // pred_region
          %964 = dma.done [#allocation15], 16
        $region156: #{tpu_custom_call.1} parent=119 // pred_fallthru
          _
        // Predicated region
        $region157: #{tpu_custom_call.1} parent=119 // pred_check
          %p965 = pneg %p430
        $region158: #{tpu_custom_call.1} parent=119 // pred_check_branch
          %967 = sbr.rel (%p965) target = $region160
        $region159: #{tpu_custom_call.1} parent=119 // pred_region
          %968 = dma.done [#allocation18], 256
        $region160: #{tpu_custom_call.1} parent=119 // pred_fallthru
          _
        // Predicated region
        $region161: #{tpu_custom_call.1} parent=119 // pred_check
          %p969 = pneg %p451
        $region162: #{tpu_custom_call.1} parent=119 // pred_check_branch
          %971 = sbr.rel (%p969) target = $region164
        $region163: #{tpu_custom_call.1} parent=119 // pred_region
          %972 = dma.done [#allocation18], 16
        $region164: #{tpu_custom_call.1} parent=119 // pred_fallthru
          _
        %p973 = scmp.lt.s32.totalorder %s60, 1
        %s974 = scalar_select %p973, %s60, 1
        %p975 = scmp.lt.s32.totalorder %s61, 0
        %s976 = scalar_select %p975, %s61, 0
        %s977 = sadd.s32 %s976, %s974
        %s978 = smul.addr %s977, 8
        %s979 = scalar_lea.vmem %s0, %s978
        %p980 = pneg %p91
        %p981 = pneg %p88
        %s982 = sand.u32 %s104, 1
        %s983 = scalar_lea.sflag [#allocation3], %s982
        %s984 = sand.u32 %s104, 1
        %s985 = smul.addr %s984, 4
        %s986 = scalar_lea.vmem [#allocation2], %s985
        %p987 = pneg %p117
        %p988 = pneg %p114
        %s989 = sand.u32 %s56, 1
        %s990 = scalar_lea.sflag [#allocation6], %s989
        %s991 = sand.u32 %s132, 1
        %s992 = smul.addr %s991, 2
        %s993 = scalar_lea.vmem [#allocation5], %s992
        %p994 = pneg %p145
        %p995 = pneg %p142
        %s996 = sand.u32 %s56, 1
        %s997 = scalar_lea.sflag [#allocation6], %s996
        %s998 = sand.u32 %s158, 1
        %s999 = smul.addr %s998, 4
        %s1000 = scalar_lea.vmem [#allocation7], %s999
        %p1001 = pneg %p171
        %p1002 = pneg %p168
        %s1003 = sand.u32 %s56, 1
        %s1004 = scalar_lea.sflag [#allocation9], %s1003
        %s1005 = sand.u32 %s186, 1
        %s1006 = smul.addr %s1005, 2
        %s1007 = scalar_lea.vmem [#allocation8], %s1006
        %p1008 = pneg %p199
        %p1009 = pneg %p196
        %p1010 = pneg %p220
        %p1011 = pneg %p217
        %p1012 = pneg %p241
        %p1013 = pneg %p238
        %p1014 = pneg %p262
        %p1015 = pneg %p259
        %p1016 = pneg %p283
        %p1017 = pneg %p280
        %p1018 = pneg %p304
        %p1019 = pneg %p301
        %p1020 = pneg %p325
        %p1021 = pneg %p322
        %p1022 = pneg %p346
        %p1023 = pneg %p343
        %p1024 = pneg %p367
        %p1025 = pneg %p364
        %p1026 = pneg %p388
        %p1027 = pneg %p385
        %p1028 = pneg %p409
        %p1029 = pneg %p406
        %p1030 = pneg %p430
        %p1031 = pneg %p427
        %p1032 = pneg %p451
        %p1033 = pneg %p448
        %p1034 = pneg %p472
        %p1035 = pneg %p469
        %p1036 = pneg %p493
        %p1037 = pneg %p490
        %p1038 = pneg %p514
        %p1039 = pneg %p511
        %p1040 = pneg %p535
        %p1041 = pneg %p532
        %p1042 = pneg %p556
        %p1043 = pneg %p553
        %p1044 = pneg %p577
        %p1045 = pneg %p574
        %p1046 = pneg %p598
        %p1047 = pneg %p595
        %p1048 = pneg %p619
        %p1049 = pneg %p616
        %p1050 = pneg %p647
        %p1051 = pneg %p644
        %s1052 = sand.u32 %s634, 1
        %s1053 = scalar_lea.sflag [#allocation4], %s1052
        %s1054 = sand.u32 %s634, 1
        %s1055 = smul.addr %s1054, 8
        %s1056 = scalar_lea.vmem [#allocation20], %s1055
        %p1057 = pneg %p675
        %p1058 = pneg %p672
        %s1059 = sand.u32 %s662, 1
        %s1060 = scalar_lea.sflag [#allocation22], %s1059
        %s1061 = sand.u32 %s662, 1
        %s1062 = smul.addr %s1061, 16
        %s1063 = scalar_lea.vmem [#allocation21], %s1062
        %p1064 = scmp.lt.s32.totalorder %s60, 1
        %s1065 = scalar_select %p1064, %s60, 1
        %p1066 = scmp.lt.s32.totalorder %s61, 0
        %s1067 = scalar_select %p1066, %s61, 0
        %s1068 = sadd.s32 %s1067, %s1065
        %s1069 = smul.addr %s1068, 8
        %s1070 = scalar_lea.vmem %s0, %s1069
        %v1074 = vld [vmem:[%s1070] sm:$0xff]
        %v1075 = vld [vmem:[%s913] sm:$0xf]
        %v1076 = vld [vmem:[%s931] sm:$0xf]
        %v1077 = vld [vmem:[%s922] sm:$0x3]
        %v1078 = vld [vmem:[%s940] sm:$0x3]
        %v1079 = vld [vmem:[%s5] sm:$0xf]
        %v1080 = vld [vmem:[%s5 + $0x4] sm:$0xf]
        %v1081 = vld [vmem:[%s5 + $0x8] sm:$0xf]
        %v1082 = vld [vmem:[%s5 + $0xc] sm:$0xf]
        %v1083 = vld [vmem:[%s6] sm:$0xf]
        %v1084 = vld [vmem:[%s6 + $0x4] sm:$0xf]
        %v1085 = vld [vmem:[%s6 + $0x8] sm:$0xf]
        %v1086 = vld [vmem:[%s6 + $0xc] sm:$0xf]
        %v1087 = vld [vmem:[%s7] sm:$0xf]
        %v1088 = vld [vmem:[%s7 + $0x4] sm:$0xf]
        %v1089 = vld [vmem:[%s7 + $0x8] sm:$0xf]
        %v1090 = vld [vmem:[%s7 + $0xc] sm:$0xf]
        %v1091 = vld [vmem:[#allocation10] sm:$0xf]
        %v1092 = vld [vmem:[#allocation10 + $0x4] sm:$0xf]
        %v1093 = vld [vmem:[#allocation10 + $0x8] sm:$0xf]
        %v1094 = vld [vmem:[#allocation10 + $0xc] sm:$0xf]
        %v1095 = vld [vmem:[#allocation11] sm:$0x1]
        %v1096 = vpack.c.bf16 %v1074, %v1074
        %v1101 = vunpack.c.l.b16 %v1079
        %v1102 = vunpack.c.l.b16 %v1080
        %v1103 = vunpack.c.l.b16 %v1081
        %v1104 = vunpack.c.l.b16 %v1082
        %v1105 = vpack.c.b16 %v1102, %v1101
        %v1106 = vpack.c.b16 %v1104, %v1103
        %vm1109 = vcmask 261120
        %v1111 = vsel %vm1109, %v1096, 0
        %1113 = vmatprep.subr.bf16.mxu0 0
        %1114 = vmatpush1.bf16.msra.mxu0 %v1105
        %1115 = vmatprep.subr.bf16.mxu0 0
        %1116 = vmatpush1.bf16.msra.mxu0 %v1106
        %1117 = vmatprep.subr.bf16.mxu0 0
        %1118 = vmatpush1.bf16.msra.mxu0 0
        %1119 = vmatprep.subr.bf16.mxu0 0
        %1120 = vmatpush1.bf16.msra.mxu0 0
        %1121 = vmatprep.subr.bf16.mxu0 0
        %1122 = vmatpush1.bf16.msra.mxu0 0
        %1123 = vmatprep.subr.bf16.mxu0 0
        %1124 = vmatpush1.bf16.msra.mxu0 0
        %1125 = vmatprep.subr.bf16.mxu0 0
        %1126 = vmatpush1.bf16.msra.mxu0 0
        %1127 = vmatprep.subr.bf16.mxu0 0
        %1128 = vmatpush1.bf16.msra.mxu0 0
        %1129 = vmatprep.subr.bf16.mxu0 0
        %1130 = vmatpush1.bf16.msra.mxu0 0
        %1131 = vmatprep.subr.bf16.mxu0 0
        %1132 = vmatpush1.bf16.msra.mxu0 0
        %1133 = vmatprep.subr.bf16.mxu0 0
        %1134 = vmatpush1.bf16.msra.mxu0 0
        %1135 = vmatprep.subr.bf16.mxu0 0
        %1136 = vmatpush1.bf16.msra.mxu0 0
        %1137 = vmatprep.subr.bf16.mxu0 0
        %1138 = vmatpush1.bf16.msra.mxu0 0
        %1139 = vmatprep.subr.bf16.mxu0 0
        %1140 = vmatpush1.bf16.msra.mxu0 0
        %1141 = vmatprep.subr.bf16.mxu0 0
        %1142 = vmatpush1.bf16.msra.mxu0 0
        %1143 = vmatprep.subr.bf16.mxu0 0
        %1144 = vmatpush1.bf16.msra.mxu0 0
        %1145 = vmatprep.mubr.bf16.mxu0 0
        %1146 = vmatmul.mubr.bf16.gmra.mrb[0].mxu0 %v1111
        %v1147 = vpop.f32.mrb[0].mxu0
        %v1148 = vadd.f32 0.0, %v1147
        %v1149 = vpop.f32.mrb[0].mxu0
        %v1150 = vpop.f32.mrb[0].mxu0
        %v1151 = vpop.f32.mrb[0].mxu0
        %1152 = vdwg.mxu0
        %v1157 = vunpack.c.l.b16 %v1083
        %v1158 = vunpack.c.l.b16 %v1084
        %v1159 = vunpack.c.l.b16 %v1085
        %v1160 = vunpack.c.l.b16 %v1086
        %v1161 = vpack.c.b16 %v1158, %v1157
        %v1162 = vpack.c.b16 %v1160, %v1159
        %v1166 = vsel %vm1109, %v1075, 0
        %1168 = vmatprep.subr.bf16.mxu0 0
        %1169 = vmatpush1.bf16.msra.mxu0 %v1161
        %1170 = vmatprep.subr.bf16.mxu0 0
        %1171 = vmatpush1.bf16.msra.mxu0 %v1162
        %1172 = vmatprep.subr.bf16.mxu0 0
        %1173 = vmatpush1.bf16.msra.mxu0 0
        %1174 = vmatprep.subr.bf16.mxu0 0
        %1175 = vmatpush1.bf16.msra.mxu0 0
        %1176 = vmatprep.subr.bf16.mxu0 0
        %1177 = vmatpush1.bf16.msra.mxu0 0
        %1178 = vmatprep.subr.bf16.mxu0 0
        %1179 = vmatpush1.bf16.msra.mxu0 0
        %1180 = vmatprep.subr.bf16.mxu0 0
        %1181 = vmatpush1.bf16.msra.mxu0 0
        %1182 = vmatprep.subr.bf16.mxu0 0
        %1183 = vmatpush1.bf16.msra.mxu0 0
        %1184 = vmatprep.subr.bf16.mxu0 0
        %1185 = vmatpush1.bf16.msra.mxu0 0
        %1186 = vmatprep.subr.bf16.mxu0 0
        %1187 = vmatpush1.bf16.msra.mxu0 0
        %1188 = vmatprep.subr.bf16.mxu0 0
        %1189 = vmatpush1.bf16.msra.mxu0 0
        %1190 = vmatprep.subr.bf16.mxu0 0
        %1191 = vmatpush1.bf16.msra.mxu0 0
        %1192 = vmatprep.subr.bf16.mxu0 0
        %1193 = vmatpush1.bf16.msra.mxu0 0
        %1194 = vmatprep.subr.bf16.mxu0 0
        %1195 = vmatpush1.bf16.msra.mxu0 0
        %1196 = vmatprep.subr.bf16.mxu0 0
        %1197 = vmatpush1.bf16.msra.mxu0 0
        %1198 = vmatprep.subr.bf16.mxu0 0
        %1199 = vmatpush1.bf16.msra.mxu0 0
        %1200 = vmatprep.mubr.bf16.mxu0 0
        %1201 = vmatmul.mubr.bf16.gmra.mrb[0].mxu0 %v1166
        %v1202 = vpop.f32.mrb[0].mxu0
        %v1203 = vadd.f32 0.0, %v1202
        %v1204 = vpop.f32.mrb[0].mxu0
        %v1205 = vpop.f32.mrb[0].mxu0
        %v1206 = vpop.f32.mrb[0].mxu0
        %1207 = vdwg.mxu0
        %v1212 = vunpack.c.l.b16 %v1087
        %v1213 = vunpack.c.l.b16 %v1088
        %v1214 = vunpack.c.l.b16 %v1089
        %v1215 = vunpack.c.l.b16 %v1090
        %v1216 = vpack.c.b16 %v1213, %v1212
        %v1217 = vpack.c.b16 %v1215, %v1214
        %1220 = vmatprep.subr.bf16.mxu0 0
        %1221 = vmatpush1.bf16.msra.mxu0 %v1216
        %1222 = vmatprep.subr.bf16.mxu0 0
        %1223 = vmatpush1.bf16.msra.mxu0 %v1217
        %1224 = vmatprep.subr.bf16.mxu0 0
        %1225 = vmatpush1.bf16.msra.mxu0 0
        %1226 = vmatprep.subr.bf16.mxu0 0
        %1227 = vmatpush1.bf16.msra.mxu0 0
        %1228 = vmatprep.subr.bf16.mxu0 0
        %1229 = vmatpush1.bf16.msra.mxu0 0
        %1230 = vmatprep.subr.bf16.mxu0 0
        %1231 = vmatpush1.bf16.msra.mxu0 0
        %1232 = vmatprep.subr.bf16.mxu0 0
        %1233 = vmatpush1.bf16.msra.mxu0 0
        %1234 = vmatprep.subr.bf16.mxu0 0
        %1235 = vmatpush1.bf16.msra.mxu0 0
        %1236 = vmatprep.subr.bf16.mxu0 0
        %1237 = vmatpush1.bf16.msra.mxu0 0
        %1238 = vmatprep.subr.bf16.mxu0 0
        %1239 = vmatpush1.bf16.msra.mxu0 0
        %1240 = vmatprep.subr.bf16.mxu0 0
        %1241 = vmatpush1.bf16.msra.mxu0 0
        %1242 = vmatprep.subr.bf16.mxu0 0
        %1243 = vmatpush1.bf16.msra.mxu0 0
        %1244 = vmatprep.subr.bf16.mxu0 0
        %1245 = vmatpush1.bf16.msra.mxu0 0
        %1246 = vmatprep.subr.bf16.mxu0 0
        %1247 = vmatpush1.bf16.msra.mxu0 0
        %1248 = vmatprep.subr.bf16.mxu0 0
        %1249 = vmatpush1.bf16.msra.mxu0 0
        %1250 = vmatprep.subr.bf16.mxu0 0
        %1251 = vmatpush1.bf16.msra.mxu0 0
        %1252 = vmatprep.mubr.bf16.mxu0 0
        %1253 = vmatmul.mubr.bf16.gmra.mrb[0].mxu0 %v1166
        %v1254 = vpop.f32.mrb[0].mxu0
        %v1255 = vadd.f32 0.0, %v1254
        %v1256 = vpop.f32.mrb[0].mxu0
        %v1257 = vpop.f32.mrb[0].mxu0
        %v1258 = vpop.f32.mrb[0].mxu0
        %1259 = vdwg.mxu0
        %1261 = vrot.lane.b32.xlu0 %v1148, 120
        %v1262 = vpop.permute.xlu0 %1261
        %1264 = vrot.lane.b32.xlu0 %v1148, 112
        %v1265 = vpop.permute.xlu0 %1264
        %1267 = vrot.lane.b32.xlu0 %v1148, 104
        %v1268 = vpop.permute.xlu0 %1267
        %v1270 = vcombine.low %v1148, %v1265
        %v1271 = vcombine.high %v1148, %v1265
        %v1273 = vunpack.c.l.s4 1983009808
        %v1274 = vunpack.c.0.s8 %v1273
        %v1275 = vlaneseq
        %v1276 = vshrl.u32 %v1275, 7
        %v1277 = vsub.s32 %v1274, %v1276
        %v1278 = vrot.slane %v1270, %v1277
        %v1280 = vunpack.c.l.s4 1983009808
        %v1281 = vunpack.c.0.s8 %v1280
        %v1282 = vlaneseq
        %v1283 = vshrl.u32 %v1282, 7
        %v1284 = vsub.s32 %v1281, %v1283
        %v1285 = vrot.slane %v1271, %v1284
        %v1286 = vcombine.low %v1262, %v1268
        %v1287 = vcombine.high %v1262, %v1268
        %v1289 = vunpack.c.l.s4 1983009808
        %v1290 = vunpack.c.0.s8 %v1289
        %v1291 = vlaneseq
        %v1292 = vshrl.u32 %v1291, 7
        %v1293 = vsub.s32 %v1290, %v1292
        %v1294 = vrot.slane %v1286, %v1293
        %v1296 = vunpack.c.l.s4 1983009808
        %v1297 = vunpack.c.0.s8 %v1296
        %v1298 = vlaneseq
        %v1299 = vshrl.u32 %v1298, 7
        %v1300 = vsub.s32 %v1297, %v1299
        %v1301 = vrot.slane %v1287, %v1300
        %v1302 = vcombine.low %v1278, %v1294
        %v1303 = vcombine.high %v1278, %v1294
        %v1305 = vunpack.c.l.s4 1934713408
        %v1306 = vunpack.c.0.s8 %v1305
        %v1307 = vlaneseq
        %v1308 = vshrl.u32 %v1307, 7
        %v1309 = vsub.s32 %v1306, %v1308
        %v1310 = vrot.slane %v1302, %v1309
        %v1312 = vunpack.c.l.s4 1934713408
        %v1313 = vunpack.c.0.s8 %v1312
        %v1314 = vlaneseq
        %v1315 = vshrl.u32 %v1314, 7
        %v1316 = vsub.s32 %v1313, %v1315
        %v1317 = vrot.slane %v1303, %v1316
        %v1318 = vcombine.low %v1285, %v1301
        %v1319 = vcombine.high %v1285, %v1301
        %v1321 = vunpack.c.l.s4 1934713408
        %v1322 = vunpack.c.0.s8 %v1321
        %v1323 = vlaneseq
        %v1324 = vshrl.u32 %v1323, 7
        %v1325 = vsub.s32 %v1322, %v1324
        %v1326 = vrot.slane %v1318, %v1325
        %v1328 = vunpack.c.l.s4 1934713408
        %v1329 = vunpack.c.0.s8 %v1328
        %v1330 = vlaneseq
        %v1331 = vshrl.u32 %v1330, 7
        %v1332 = vsub.s32 %v1329, %v1331
        %v1333 = vrot.slane %v1319, %v1332
        %v1334 = vcombine.high %v1310, 0.0
        %v1335 = vcombine.high %v1317, 0.0
        %v1336 = vcombine.high %v1326, 0.0
        %v1337 = vcombine.high %v1333, 0.0
        %v1338 = vcombine.low %v1310, %v1317
        %v1340 = vunpack.c.l.s4 1983009808
        %v1341 = vunpack.c.0.s8 %v1340
        %v1342 = vlaneseq
        %v1343 = vshrl.u32 %v1342, 7
        %v1344 = vsub.s32 %v1341, %v1343
        %v1345 = vrot.slane %v1338, %v1344
        %v1346 = vcombine.low %v1334, %v1335
        %v1348 = vunpack.c.l.s4 1983009808
        %v1349 = vunpack.c.0.s8 %v1348
        %v1350 = vlaneseq
        %v1351 = vshrl.u32 %v1350, 7
        %v1352 = vsub.s32 %v1349, %v1351
        %v1353 = vrot.slane %v1346, %v1352
        %v1354 = vcombine.low %v1326, %v1333
        %v1356 = vunpack.c.l.s4 1983009808
        %v1357 = vunpack.c.0.s8 %v1356
        %v1358 = vlaneseq
        %v1359 = vshrl.u32 %v1358, 7
        %v1360 = vsub.s32 %v1357, %v1359
        %v1361 = vrot.slane %v1354, %v1360
        %v1362 = vcombine.low %v1336, %v1337
        %v1364 = vunpack.c.l.s4 1983009808
        %v1365 = vunpack.c.0.s8 %v1364
        %v1366 = vlaneseq
        %v1367 = vshrl.u32 %v1366, 7
        %v1368 = vsub.s32 %v1365, %v1367
        %v1369 = vrot.slane %v1362, %v1368
        %v1370 = vcombine.low %v1345, %v1353
        %v1371 = vcombine.high %v1345, %v1353
        %v1373 = vunpack.c.l.s4 1934713408
        %v1374 = vunpack.c.0.s8 %v1373
        %v1375 = vlaneseq
        %v1376 = vshrl.u32 %v1375, 7
        %v1377 = vsub.s32 %v1374, %v1376
        %v1378 = vrot.slane %v1370, %v1377
        %v1380 = vunpack.c.l.s4 1934713408
        %v1381 = vunpack.c.0.s8 %v1380
        %v1382 = vlaneseq
        %v1383 = vshrl.u32 %v1382, 7
        %v1384 = vsub.s32 %v1381, %v1383
        %v1385 = vrot.slane %v1371, %v1384
        %v1386 = vcombine.low %v1361, %v1369
        %v1387 = vcombine.high %v1361, %v1369
        %v1389 = vunpack.c.l.s4 1934713408
        %v1390 = vunpack.c.0.s8 %v1389
        %v1391 = vlaneseq
        %v1392 = vshrl.u32 %v1391, 7
        %v1393 = vsub.s32 %v1390, %v1392
        %v1394 = vrot.slane %v1386, %v1393
        %v1396 = vunpack.c.l.s4 1934713408
        %v1397 = vunpack.c.0.s8 %v1396
        %v1398 = vlaneseq
        %v1399 = vshrl.u32 %v1398, 7
        %v1400 = vsub.s32 %v1397, %v1399
        %v1401 = vrot.slane %v1387, %v1400
        %v1402 = vcombine.low %v1378, %v1394
        %v1403 = vcombine.high %v1378, %v1394
        %v1404 = vcombine.low %v1385, %v1401
        %v1405 = vcombine.high %v1385, %v1401
        %v1406 = vpack.c.bf16 %v1402, %v1402
        %v1407 = vpack.c.bf16 %v1403, %v1403
        %v1408 = vpack.c.bf16 %v1404, %v1404
        %v1409 = vpack.c.bf16 %v1405, %v1405
        %1411 = vrot.lane.b32.xlu0 %v1203, 120
        %v1412 = vpop.permute.xlu0 %1411
        %1414 = vrot.lane.b32.xlu0 %v1203, 112
        %v1415 = vpop.permute.xlu0 %1414
        %1417 = vrot.lane.b32.xlu0 %v1203, 104
        %v1418 = vpop.permute.xlu0 %1417
        %v1420 = vcombine.low %v1203, %v1415
        %v1421 = vcombine.high %v1203, %v1415
        %v1423 = vunpack.c.l.s4 1983009808
        %v1424 = vunpack.c.0.s8 %v1423
        %v1425 = vlaneseq
        %v1426 = vshrl.u32 %v1425, 7
        %v1427 = vsub.s32 %v1424, %v1426
        %v1428 = vrot.slane %v1420, %v1427
        %v1430 = vunpack.c.l.s4 1983009808
        %v1431 = vunpack.c.0.s8 %v1430
        %v1432 = vlaneseq
        %v1433 = vshrl.u32 %v1432, 7
        %v1434 = vsub.s32 %v1431, %v1433
        %v1435 = vrot.slane %v1421, %v1434
        %v1436 = vcombine.low %v1412, %v1418
        %v1437 = vcombine.high %v1412, %v1418
        %v1439 = vunpack.c.l.s4 1983009808
        %v1440 = vunpack.c.0.s8 %v1439
        %v1441 = vlaneseq
        %v1442 = vshrl.u32 %v1441, 7
        %v1443 = vsub.s32 %v1440, %v1442
        %v1444 = vrot.slane %v1436, %v1443
        %v1446 = vunpack.c.l.s4 1983009808
        %v1447 = vunpack.c.0.s8 %v1446
        %v1448 = vlaneseq
        %v1449 = vshrl.u32 %v1448, 7
        %v1450 = vsub.s32 %v1447, %v1449
        %v1451 = vrot.slane %v1437, %v1450
        %v1452 = vcombine.low %v1428, %v1444
        %v1453 = vcombine.high %v1428, %v1444
        %v1455 = vunpack.c.l.s4 1934713408
        %v1456 = vunpack.c.0.s8 %v1455
        %v1457 = vlaneseq
        %v1458 = vshrl.u32 %v1457, 7
        %v1459 = vsub.s32 %v1456, %v1458
        %v1460 = vrot.slane %v1452, %v1459
        %v1462 = vunpack.c.l.s4 1934713408
        %v1463 = vunpack.c.0.s8 %v1462
        %v1464 = vlaneseq
        %v1465 = vshrl.u32 %v1464, 7
        %v1466 = vsub.s32 %v1463, %v1465
        %v1467 = vrot.slane %v1453, %v1466
        %v1468 = vcombine.low %v1435, %v1451
        %v1469 = vcombine.high %v1435, %v1451
        %v1471 = vunpack.c.l.s4 1934713408
        %v1472 = vunpack.c.0.s8 %v1471
        %v1473 = vlaneseq
        %v1474 = vshrl.u32 %v1473, 7
        %v1475 = vsub.s32 %v1472, %v1474
        %v1476 = vrot.slane %v1468, %v1475
        %v1478 = vunpack.c.l.s4 1934713408
        %v1479 = vunpack.c.0.s8 %v1478
        %v1480 = vlaneseq
        %v1481 = vshrl.u32 %v1480, 7
        %v1482 = vsub.s32 %v1479, %v1481
        %v1483 = vrot.slane %v1469, %v1482
        %v1484 = vcombine.high %v1460, 0.0
        %v1485 = vcombine.high %v1467, 0.0
        %v1486 = vcombine.high %v1476, 0.0
        %v1487 = vcombine.high %v1483, 0.0
        %v1488 = vcombine.low %v1460, %v1467
        %v1490 = vunpack.c.l.s4 1983009808
        %v1491 = vunpack.c.0.s8 %v1490
        %v1492 = vlaneseq
        %v1493 = vshrl.u32 %v1492, 7
        %v1494 = vsub.s32 %v1491, %v1493
        %v1495 = vrot.slane %v1488, %v1494
        %v1496 = vcombine.low %v1484, %v1485
        %v1498 = vunpack.c.l.s4 1983009808
        %v1499 = vunpack.c.0.s8 %v1498
        %v1500 = vlaneseq
        %v1501 = vshrl.u32 %v1500, 7
        %v1502 = vsub.s32 %v1499, %v1501
        %v1503 = vrot.slane %v1496, %v1502
        %v1504 = vcombine.low %v1476, %v1483
        %v1506 = vunpack.c.l.s4 1983009808
        %v1507 = vunpack.c.0.s8 %v1506
        %v1508 = vlaneseq
        %v1509 = vshrl.u32 %v1508, 7
        %v1510 = vsub.s32 %v1507, %v1509
        %v1511 = vrot.slane %v1504, %v1510
        %v1512 = vcombine.low %v1486, %v1487
        %v1514 = vunpack.c.l.s4 1983009808
        %v1515 = vunpack.c.0.s8 %v1514
        %v1516 = vlaneseq
        %v1517 = vshrl.u32 %v1516, 7
        %v1518 = vsub.s32 %v1515, %v1517
        %v1519 = vrot.slane %v1512, %v1518
        %v1520 = vcombine.low %v1495, %v1503
        %v1521 = vcombine.high %v1495, %v1503
        %v1523 = vunpack.c.l.s4 1934713408
        %v1524 = vunpack.c.0.s8 %v1523
        %v1525 = vlaneseq
        %v1526 = vshrl.u32 %v1525, 7
        %v1527 = vsub.s32 %v1524, %v1526
        %v1528 = vrot.slane %v1520, %v1527
        %v1530 = vunpack.c.l.s4 1934713408
        %v1531 = vunpack.c.0.s8 %v1530
        %v1532 = vlaneseq
        %v1533 = vshrl.u32 %v1532, 7
        %v1534 = vsub.s32 %v1531, %v1533
        %v1535 = vrot.slane %v1521, %v1534
        %v1536 = vcombine.low %v1511, %v1519
        %v1537 = vcombine.high %v1511, %v1519
        %v1539 = vunpack.c.l.s4 1934713408
        %v1540 = vunpack.c.0.s8 %v1539
        %v1541 = vlaneseq
        %v1542 = vshrl.u32 %v1541, 7
        %v1543 = vsub.s32 %v1540, %v1542
        %v1544 = vrot.slane %v1536, %v1543
        %v1546 = vunpack.c.l.s4 1934713408
        %v1547 = vunpack.c.0.s8 %v1546
        %v1548 = vlaneseq
        %v1549 = vshrl.u32 %v1548, 7
        %v1550 = vsub.s32 %v1547, %v1549
        %v1551 = vrot.slane %v1537, %v1550
        %v1552 = vcombine.low %v1528, %v1544
        %v1553 = vcombine.high %v1528, %v1544
        %v1554 = vcombine.low %v1535, %v1551
        %v1555 = vcombine.high %v1535, %v1551
        %v1556 = vpack.c.bf16 %v1552, %v1552
        %v1557 = vpack.c.bf16 %v1553, %v1553
        %v1558 = vpack.c.bf16 %v1554, %v1554
        %v1559 = vpack.c.bf16 %v1555, %v1555
        %1561 = vrot.lane.b32.xlu0 %v1255, 120
        %v1562 = vpop.permute.xlu0 %1561
        %1564 = vrot.lane.b32.xlu0 %v1255, 112
        %v1565 = vpop.permute.xlu0 %1564
        %1567 = vrot.lane.b32.xlu0 %v1255, 104
        %v1568 = vpop.permute.xlu0 %1567
        %v1570 = vcombine.low %v1255, %v1565
        %v1571 = vcombine.high %v1255, %v1565
        %v1573 = vunpack.c.l.s4 1983009808
        %v1574 = vunpack.c.0.s8 %v1573
        %v1575 = vlaneseq
        %v1576 = vshrl.u32 %v1575, 7
        %v1577 = vsub.s32 %v1574, %v1576
        %v1578 = vrot.slane %v1570, %v1577
        %v1580 = vunpack.c.l.s4 1983009808
        %v1581 = vunpack.c.0.s8 %v1580
        %v1582 = vlaneseq
        %v1583 = vshrl.u32 %v1582, 7
        %v1584 = vsub.s32 %v1581, %v1583
        %v1585 = vrot.slane %v1571, %v1584
        %v1586 = vcombine.low %v1562, %v1568
        %v1587 = vcombine.high %v1562, %v1568
        %v1589 = vunpack.c.l.s4 1983009808
        %v1590 = vunpack.c.0.s8 %v1589
        %v1591 = vlaneseq
        %v1592 = vshrl.u32 %v1591, 7
        %v1593 = vsub.s32 %v1590, %v1592
        %v1594 = vrot.slane %v1586, %v1593
        %v1596 = vunpack.c.l.s4 1983009808
        %v1597 = vunpack.c.0.s8 %v1596
        %v1598 = vlaneseq
        %v1599 = vshrl.u32 %v1598, 7
        %v1600 = vsub.s32 %v1597, %v1599
        %v1601 = vrot.slane %v1587, %v1600
        %v1602 = vcombine.low %v1578, %v1594
        %v1603 = vcombine.high %v1578, %v1594
        %v1605 = vunpack.c.l.s4 1934713408
        %v1606 = vunpack.c.0.s8 %v1605
        %v1607 = vlaneseq
        %v1608 = vshrl.u32 %v1607, 7
        %v1609 = vsub.s32 %v1606, %v1608
        %v1610 = vrot.slane %v1602, %v1609
        %v1612 = vunpack.c.l.s4 1934713408
        %v1613 = vunpack.c.0.s8 %v1612
        %v1614 = vlaneseq
        %v1615 = vshrl.u32 %v1614, 7
        %v1616 = vsub.s32 %v1613, %v1615
        %v1617 = vrot.slane %v1603, %v1616
        %v1618 = vcombine.low %v1585, %v1601
        %v1619 = vcombine.high %v1585, %v1601
        %v1621 = vunpack.c.l.s4 1934713408
        %v1622 = vunpack.c.0.s8 %v1621
        %v1623 = vlaneseq
        %v1624 = vshrl.u32 %v1623, 7
        %v1625 = vsub.s32 %v1622, %v1624
        %v1626 = vrot.slane %v1618, %v1625
        %v1628 = vunpack.c.l.s4 1934713408
        %v1629 = vunpack.c.0.s8 %v1628
        %v1630 = vlaneseq
        %v1631 = vshrl.u32 %v1630, 7
        %v1632 = vsub.s32 %v1629, %v1631
        %v1633 = vrot.slane %v1619, %v1632
        %v1634 = vcombine.high %v1610, 0.0
        %v1635 = vcombine.high %v1617, 0.0
        %v1636 = vcombine.high %v1626, 0.0
        %v1637 = vcombine.high %v1633, 0.0
        %v1638 = vcombine.low %v1610, %v1617
        %v1640 = vunpack.c.l.s4 1983009808
        %v1641 = vunpack.c.0.s8 %v1640
        %v1642 = vlaneseq
        %v1643 = vshrl.u32 %v1642, 7
        %v1644 = vsub.s32 %v1641, %v1643
        %v1645 = vrot.slane %v1638, %v1644
        %v1646 = vcombine.low %v1634, %v1635
        %v1648 = vunpack.c.l.s4 1983009808
        %v1649 = vunpack.c.0.s8 %v1648
        %v1650 = vlaneseq
        %v1651 = vshrl.u32 %v1650, 7
        %v1652 = vsub.s32 %v1649, %v1651
        %v1653 = vrot.slane %v1646, %v1652
        %v1654 = vcombine.low %v1626, %v1633
        %v1656 = vunpack.c.l.s4 1983009808
        %v1657 = vunpack.c.0.s8 %v1656
        %v1658 = vlaneseq
        %v1659 = vshrl.u32 %v1658, 7
        %v1660 = vsub.s32 %v1657, %v1659
        %v1661 = vrot.slane %v1654, %v1660
        %v1662 = vcombine.low %v1636, %v1637
        %v1664 = vunpack.c.l.s4 1983009808
        %v1665 = vunpack.c.0.s8 %v1664
        %v1666 = vlaneseq
        %v1667 = vshrl.u32 %v1666, 7
        %v1668 = vsub.s32 %v1665, %v1667
        %v1669 = vrot.slane %v1662, %v1668
        %v1670 = vcombine.low %v1645, %v1653
        %v1671 = vcombine.high %v1645, %v1653
        %v1673 = vunpack.c.l.s4 1934713408
        %v1674 = vunpack.c.0.s8 %v1673
        %v1675 = vlaneseq
        %v1676 = vshrl.u32 %v1675, 7
        %v1677 = vsub.s32 %v1674, %v1676
        %v1678 = vrot.slane %v1670, %v1677
        %v1680 = vunpack.c.l.s4 1934713408
        %v1681 = vunpack.c.0.s8 %v1680
        %v1682 = vlaneseq
        %v1683 = vshrl.u32 %v1682, 7
        %v1684 = vsub.s32 %v1681, %v1683
        %v1685 = vrot.slane %v1671, %v1684
        %v1686 = vcombine.low %v1661, %v1669
        %v1687 = vcombine.high %v1661, %v1669
        %v1689 = vunpack.c.l.s4 1934713408
        %v1690 = vunpack.c.0.s8 %v1689
        %v1691 = vlaneseq
        %v1692 = vshrl.u32 %v1691, 7
        %v1693 = vsub.s32 %v1690, %v1692
        %v1694 = vrot.slane %v1686, %v1693
        %v1696 = vunpack.c.l.s4 1934713408
        %v1697 = vunpack.c.0.s8 %v1696
        %v1698 = vlaneseq
        %v1699 = vshrl.u32 %v1698, 7
        %v1700 = vsub.s32 %v1697, %v1699
        %v1701 = vrot.slane %v1687, %v1700
        %v1702 = vcombine.low %v1678, %v1694
        %v1703 = vcombine.high %v1678, %v1694
        %v1704 = vcombine.low %v1685, %v1701
        %v1705 = vcombine.high %v1685, %v1701
        %v1706 = vpack.c.bf16 %v1702, %v1702
        %v1707 = vpack.c.bf16 %v1703, %v1703
        %v1708 = vpack.c.bf16 %v1704, %v1704
        %v1709 = vpack.c.bf16 %v1705, %v1705
        %vm1710 = vcmask 64512
        %v1712 = vsel %vm1710, %v1406, 0
        %v1715 = vsel %vm1710, %v1556, 0
        %1717 = vmatprep.subr.bf16.mxu0 0
        %1718 = vmatpush1.bf16.xpose.msra.mxu0 %v1715
        %1719 = vmatprep.subr.bf16.mxu0 0
        %1720 = vmatpush1.bf16.xpose.msra.mxu0 0
        %1721 = vmatprep.subr.bf16.mxu0 0
        %1722 = vmatpush1.bf16.xpose.msra.mxu0 0
        %1723 = vmatprep.subr.bf16.mxu0 0
        %1724 = vmatpush1.bf16.xpose.msra.mxu0 0
        %1725 = vmatprep.subr.bf16.mxu0 0
        %1726 = vmatpush1.bf16.xpose.msra.mxu0 0
        %1727 = vmatprep.subr.bf16.mxu0 0
        %1728 = vmatpush1.bf16.xpose.msra.mxu0 0
        %1729 = vmatprep.subr.bf16.mxu0 0
        %1730 = vmatpush1.bf16.xpose.msra.mxu0 0
        %1731 = vmatprep.subr.bf16.mxu0 0
        %1732 = vmatpush1.bf16.xpose.msra.mxu0 0
        %1733 = vmatprep.subr.bf16.mxu0 0
        %1734 = vmatpush1.bf16.xpose.msra.mxu0 0
        %1735 = vmatprep.subr.bf16.mxu0 0
        %1736 = vmatpush1.bf16.xpose.msra.mxu0 0
        %1737 = vmatprep.subr.bf16.mxu0 0
        %1738 = vmatpush1.bf16.xpose.msra.mxu0 0
        %1739 = vmatprep.subr.bf16.mxu0 0
        %1740 = vmatpush1.bf16.xpose.msra.mxu0 0
        %1741 = vmatprep.subr.bf16.mxu0 0
        %1742 = vmatpush1.bf16.xpose.msra.mxu0 0
        %1743 = vmatprep.subr.bf16.mxu0 0
        %1744 = vmatpush1.bf16.xpose.msra.mxu0 0
        %1745 = vmatprep.subr.bf16.mxu0 0
        %1746 = vmatpush1.bf16.xpose.msra.mxu0 0
        %1747 = vmatprep.subr.bf16.mxu0 0
        %1748 = vmatpush1.bf16.xpose.msra.mxu0 0
        %1749 = vmatprep.mubr.bf16.mxu0 0
        %1750 = vmatmul.mubr.bf16.gmra.mrb[0].mxu0 %v1712
        %v1751 = vpop.f32.mrb[0].mxu0
        %v1752 = vadd.f32 0.0, %v1751
        %v1753 = vpop.f32.mrb[0].mxu0
        %v1754 = vpop.f32.mrb[0].mxu0
        %v1755 = vpop.f32.mrb[0].mxu0
        %1756 = vdwg.mxu0
        %v1758 = vsel %vm1710, %v1407, 0
        %v1761 = vsel %vm1710, %v1557, 0
        %1763 = vmatprep.subr.bf16.mxu0 0
        %1764 = vmatpush1.bf16.xpose.msra.mxu0 %v1761
        %1765 = vmatprep.subr.bf16.mxu0 0
        %1766 = vmatpush1.bf16.xpose.msra.mxu0 0
        %1767 = vmatprep.subr.bf16.mxu0 0
        %1768 = vmatpush1.bf16.xpose.msra.mxu0 0
        %1769 = vmatprep.subr.bf16.mxu0 0
        %1770 = vmatpush1.bf16.xpose.msra.mxu0 0
        %1771 = vmatprep.subr.bf16.mxu0 0
        %1772 = vmatpush1.bf16.xpose.msra.mxu0 0
        %1773 = vmatprep.subr.bf16.mxu0 0
        %1774 = vmatpush1.bf16.xpose.msra.mxu0 0
        %1775 = vmatprep.subr.bf16.mxu0 0
        %1776 = vmatpush1.bf16.xpose.msra.mxu0 0
        %1777 = vmatprep.subr.bf16.mxu0 0
        %1778 = vmatpush1.bf16.xpose.msra.mxu0 0
        %1779 = vmatprep.subr.bf16.mxu0 0
        %1780 = vmatpush1.bf16.xpose.msra.mxu0 0
        %1781 = vmatprep.subr.bf16.mxu0 0
        %1782 = vmatpush1.bf16.xpose.msra.mxu0 0
        %1783 = vmatprep.subr.bf16.mxu0 0
        %1784 = vmatpush1.bf16.xpose.msra.mxu0 0
        %1785 = vmatprep.subr.bf16.mxu0 0
        %1786 = vmatpush1.bf16.xpose.msra.mxu0 0
        %1787 = vmatprep.subr.bf16.mxu0 0
        %1788 = vmatpush1.bf16.xpose.msra.mxu0 0
        %1789 = vmatprep.subr.bf16.mxu0 0
        %1790 = vmatpush1.bf16.xpose.msra.mxu0 0
        %1791 = vmatprep.subr.bf16.mxu0 0
        %1792 = vmatpush1.bf16.xpose.msra.mxu0 0
        %1793 = vmatprep.subr.bf16.mxu0 0
        %1794 = vmatpush1.bf16.xpose.msra.mxu0 0
        %1795 = vmatprep.mubr.bf16.mxu0 0
        %1796 = vmatmul.mubr.bf16.gmra.mrb[0].mxu0 %v1758
        %v1797 = vpop.f32.mrb[0].mxu0
        %v1798 = vadd.f32 0.0, %v1797
        %v1799 = vpop.f32.mrb[0].mxu0
        %v1800 = vpop.f32.mrb[0].mxu0
        %v1801 = vpop.f32.mrb[0].mxu0
        %1802 = vdwg.mxu0
        %v1804 = vsel %vm1710, %v1408, 0
        %v1807 = vsel %vm1710, %v1558, 0
        %1809 = vmatprep.subr.bf16.mxu0 0
        %1810 = vmatpush1.bf16.xpose.msra.mxu0 %v1807
        %1811 = vmatprep.subr.bf16.mxu0 0
        %1812 = vmatpush1.bf16.xpose.msra.mxu0 0
        %1813 = vmatprep.subr.bf16.mxu0 0
        %1814 = vmatpush1.bf16.xpose.msra.mxu0 0
        %1815 = vmatprep.subr.bf16.mxu0 0
        %1816 = vmatpush1.bf16.xpose.msra.mxu0 0
        %1817 = vmatprep.subr.bf16.mxu0 0
        %1818 = vmatpush1.bf16.xpose.msra.mxu0 0
        %1819 = vmatprep.subr.bf16.mxu0 0
        %1820 = vmatpush1.bf16.xpose.msra.mxu0 0
        %1821 = vmatprep.subr.bf16.mxu0 0
        %1822 = vmatpush1.bf16.xpose.msra.mxu0 0
        %1823 = vmatprep.subr.bf16.mxu0 0
        %1824 = vmatpush1.bf16.xpose.msra.mxu0 0
        %1825 = vmatprep.subr.bf16.mxu0 0
        %1826 = vmatpush1.bf16.xpose.msra.mxu0 0
        %1827 = vmatprep.subr.bf16.mxu0 0
        %1828 = vmatpush1.bf16.xpose.msra.mxu0 0
        %1829 = vmatprep.subr.bf16.mxu0 0
        %1830 = vmatpush1.bf16.xpose.msra.mxu0 0
        %1831 = vmatprep.subr.bf16.mxu0 0
        %1832 = vmatpush1.bf16.xpose.msra.mxu0 0
        %1833 = vmatprep.subr.bf16.mxu0 0
        %1834 = vmatpush1.bf16.xpose.msra.mxu0 0
        %1835 = vmatprep.subr.bf16.mxu0 0
        %1836 = vmatpush1.bf16.xpose.msra.mxu0 0
        %1837 = vmatprep.subr.bf16.mxu0 0
        %1838 = vmatpush1.bf16.xpose.msra.mxu0 0
        %1839 = vmatprep.subr.bf16.mxu0 0
        %1840 = vmatpush1.bf16.xpose.msra.mxu0 0
        %1841 = vmatprep.mubr.bf16.mxu0 0
        %1842 = vmatmul.mubr.bf16.gmra.mrb[0].mxu0 %v1804
        %v1843 = vpop.f32.mrb[0].mxu0
        %v1844 = vadd.f32 0.0, %v1843
        %v1845 = vpop.f32.mrb[0].mxu0
        %v1846 = vpop.f32.mrb[0].mxu0
        %v1847 = vpop.f32.mrb[0].mxu0
        %1848 = vdwg.mxu0
        %v1850 = vsel %vm1710, %v1409, 0
        %v1853 = vsel %vm1710, %v1559, 0
        %1855 = vmatprep.subr.bf16.mxu0 0
        %1856 = vmatpush1.bf16.xpose.msra.mxu0 %v1853
        %1857 = vmatprep.subr.bf16.mxu0 0
        %1858 = vmatpush1.bf16.xpose.msra.mxu0 0
        %1859 = vmatprep.subr.bf16.mxu0 0
        %1860 = vmatpush1.bf16.xpose.msra.mxu0 0
        %1861 = vmatprep.subr.bf16.mxu0 0
        %1862 = vmatpush1.bf16.xpose.msra.mxu0 0
        %1863 = vmatprep.subr.bf16.mxu0 0
        %1864 = vmatpush1.bf16.xpose.msra.mxu0 0
        %1865 = vmatprep.subr.bf16.mxu0 0
        %1866 = vmatpush1.bf16.xpose.msra.mxu0 0
        %1867 = vmatprep.subr.bf16.mxu0 0
        %1868 = vmatpush1.bf16.xpose.msra.mxu0 0
        %1869 = vmatprep.subr.bf16.mxu0 0
        %1870 = vmatpush1.bf16.xpose.msra.mxu0 0
        %1871 = vmatprep.subr.bf16.mxu0 0
        %1872 = vmatpush1.bf16.xpose.msra.mxu0 0
        %1873 = vmatprep.subr.bf16.mxu0 0
        %1874 = vmatpush1.bf16.xpose.msra.mxu0 0
        %1875 = vmatprep.subr.bf16.mxu0 0
        %1876 = vmatpush1.bf16.xpose.msra.mxu0 0
        %1877 = vmatprep.subr.bf16.mxu0 0
        %1878 = vmatpush1.bf16.xpose.msra.mxu0 0
        %1879 = vmatprep.subr.bf16.mxu0 0
        %1880 = vmatpush1.bf16.xpose.msra.mxu0 0
        %1881 = vmatprep.subr.bf16.mxu0 0
        %1882 = vmatpush1.bf16.xpose.msra.mxu0 0
        %1883 = vmatprep.subr.bf16.mxu0 0
        %1884 = vmatpush1.bf16.xpose.msra.mxu0 0
        %1885 = vmatprep.subr.bf16.mxu0 0
        %1886 = vmatpush1.bf16.xpose.msra.mxu0 0
        %1887 = vmatprep.mubr.bf16.mxu0 0
        %1888 = vmatmul.mubr.bf16.gmra.mrb[0].mxu0 %v1850
        %v1889 = vpop.f32.mrb[0].mxu0
        %v1890 = vadd.f32 0.0, %v1889
        %v1891 = vpop.f32.mrb[0].mxu0
        %v1892 = vpop.f32.mrb[0].mxu0
        %v1893 = vpop.f32.mrb[0].mxu0
        %1894 = vdwg.mxu0
        %vm1895 = vnez %v1077
        %v1896 = vsel %vm1895, 16843009, 0
        %v1897 = vunpack.c.0.s8 %v1896
        %vm1898 = vcmp.ne.s32.totalorder %v1897, 0
        %v1899 = vsel %vm1898, 1, 0
        %vm1900 = vcmp.eq.s32.totalorder %v1899, 1
        %v1901 = vsel %vm1900, %v1752, -1e+09
        %v1902 = vsel %vm1900, %v1798, -1e+09
        %v1903 = vsel %vm1900, %v1844, -1e+09
        %v1904 = vsel %vm1900, %v1890, -1e+09
        %v1905 = vsel %vm1710, %v1901, -inf
        %1906 = vmax.xlane.f32.xlu0 %v1905
        %v1907 = vpop.xlane.xlu0 %1906
        %v1908 = vsel %vm1710, %v1902, -inf
        %1909 = vmax.xlane.f32.xlu0 %v1908
        %v1910 = vpop.xlane.xlu0 %1909
        %v1911 = vsel %vm1710, %v1903, -inf
        %1912 = vmax.xlane.f32.xlu0 %v1911
        %v1913 = vpop.xlane.xlu0 %1912
        %v1914 = vsel %vm1710, %v1904, -inf
        %1915 = vmax.xlane.f32.xlu0 %v1914
        %v1916 = vpop.xlane.xlu0 %1915
        %v1917 = vsub.f32 %v1901, %v1907
        %v1918 = vsub.f32 %v1902, %v1910
        %v1919 = vsub.f32 %v1903, %v1913
        %v1920 = vsub.f32 %v1904, %v1916
        %v1921 = vmul.f32 %v1917, 1.442695
        %v1922 = vpow.pop %v1921
        %v1923 = vmul.f32 %v1918, 1.442695
        %v1924 = vpow.pop %v1923
        %v1925 = vmul.f32 %v1919, 1.442695
        %v1926 = vpow.pop %v1925
        %v1927 = vmul.f32 %v1920, 1.442695
        %v1928 = vpow.pop %v1927
        %v1929 = vsel %vm1710, %v1922, 0.0
        %1930 = vadd.xlane.f32.xlu0 %v1929
        %v1931 = vpop.xlane.xlu0 %1930
        %v1932 = vsel %vm1710, %v1924, 0.0
        %1933 = vadd.xlane.f32.xlu0 %v1932
        %v1934 = vpop.xlane.xlu0 %1933
        %v1935 = vsel %vm1710, %v1926, 0.0
        %1936 = vadd.xlane.f32.xlu0 %v1935
        %v1937 = vpop.xlane.xlu0 %1936
        %v1938 = vsel %vm1710, %v1928, 0.0
        %1939 = vadd.xlane.f32.xlu0 %v1938
        %v1940 = vpop.xlane.xlu0 %1939
        %v1941 = vrcp.pop %v1931
        %v1942 = vmul.f32 %v1922, %v1941
        %v1943 = vrcp.pop %v1934
        %v1944 = vmul.f32 %v1924, %v1943
        %v1945 = vrcp.pop %v1937
        %v1946 = vmul.f32 %v1926, %v1945
        %v1947 = vrcp.pop %v1940
        %v1948 = vmul.f32 %v1928, %v1947
        %v1949 = vpack.c.bf16 %v1942, %v1942
        %v1950 = vpack.c.bf16 %v1944, %v1944
        %v1951 = vpack.c.bf16 %v1946, %v1946
        %v1952 = vpack.c.bf16 %v1948, %v1948
        %v1954 = vsel %vm1710, %v1949, 0
        %vm1956 = vcmask 1043456
        %v1958 = vsel %vm1956, %v1706, 0
        %1960 = vmatprep.subr.bf16.mxu0 0
        %1961 = vmatpush1.bf16.msra.mxu0 %v1958
        %1962 = vmatprep.subr.bf16.mxu0 0
        %1963 = vmatpush1.bf16.msra.mxu0 0
        %1964 = vmatprep.subr.bf16.mxu0 0
        %1965 = vmatpush1.bf16.msra.mxu0 0
        %1966 = vmatprep.subr.bf16.mxu0 0
        %1967 = vmatpush1.bf16.msra.mxu0 0
        %1968 = vmatprep.subr.bf16.mxu0 0
        %1969 = vmatpush1.bf16.msra.mxu0 0
        %1970 = vmatprep.subr.bf16.mxu0 0
        %1971 = vmatpush1.bf16.msra.mxu0 0
        %1972 = vmatprep.subr.bf16.mxu0 0
        %1973 = vmatpush1.bf16.msra.mxu0 0
        %1974 = vmatprep.subr.bf16.mxu0 0
        %1975 = vmatpush1.bf16.msra.mxu0 0
        %1976 = vmatprep.subr.bf16.mxu0 0
        %1977 = vmatpush1.bf16.msra.mxu0 0
        %1978 = vmatprep.subr.bf16.mxu0 0
        %1979 = vmatpush1.bf16.msra.mxu0 0
        %1980 = vmatprep.subr.bf16.mxu0 0
        %1981 = vmatpush1.bf16.msra.mxu0 0
        %1982 = vmatprep.subr.bf16.mxu0 0
        %1983 = vmatpush1.bf16.msra.mxu0 0
        %1984 = vmatprep.subr.bf16.mxu0 0
        %1985 = vmatpush1.bf16.msra.mxu0 0
        %1986 = vmatprep.subr.bf16.mxu0 0
        %1987 = vmatpush1.bf16.msra.mxu0 0
        %1988 = vmatprep.subr.bf16.mxu0 0
        %1989 = vmatpush1.bf16.msra.mxu0 0
        %1990 = vmatprep.subr.bf16.mxu0 0
        %1991 = vmatpush1.bf16.msra.mxu0 0
        %1992 = vmatprep.mubr.bf16.mxu0 0
        %1993 = vmatmul.mubr.bf16.gmra.mrb[0].mxu0 %v1954
        %v1994 = vpop.f32.mrb[0].mxu0
        %v1995 = vadd.f32 0.0, %v1994
        %v1996 = vpop.f32.mrb[0].mxu0
        %v1997 = vpop.f32.mrb[0].mxu0
        %v1998 = vpop.f32.mrb[0].mxu0
        %1999 = vdwg.mxu0
        %v2001 = vsel %vm1710, %v1950, 0
        %v2004 = vsel %vm1956, %v1707, 0
        %2006 = vmatprep.subr.bf16.mxu0 0
        %2007 = vmatpush1.bf16.msra.mxu0 %v2004
        %2008 = vmatprep.subr.bf16.mxu0 0
        %2009 = vmatpush1.bf16.msra.mxu0 0
        %2010 = vmatprep.subr.bf16.mxu0 0
        %2011 = vmatpush1.bf16.msra.mxu0 0
        %2012 = vmatprep.subr.bf16.mxu0 0
        %2013 = vmatpush1.bf16.msra.mxu0 0
        %2014 = vmatprep.subr.bf16.mxu0 0
        %2015 = vmatpush1.bf16.msra.mxu0 0
        %2016 = vmatprep.subr.bf16.mxu0 0
        %2017 = vmatpush1.bf16.msra.mxu0 0
        %2018 = vmatprep.subr.bf16.mxu0 0
        %2019 = vmatpush1.bf16.msra.mxu0 0
        %2020 = vmatprep.subr.bf16.mxu0 0
        %2021 = vmatpush1.bf16.msra.mxu0 0
        %2022 = vmatprep.subr.bf16.mxu0 0
        %2023 = vmatpush1.bf16.msra.mxu0 0
        %2024 = vmatprep.subr.bf16.mxu0 0
        %2025 = vmatpush1.bf16.msra.mxu0 0
        %2026 = vmatprep.subr.bf16.mxu0 0
        %2027 = vmatpush1.bf16.msra.mxu0 0
        %2028 = vmatprep.subr.bf16.mxu0 0
        %2029 = vmatpush1.bf16.msra.mxu0 0
        %2030 = vmatprep.subr.bf16.mxu0 0
        %2031 = vmatpush1.bf16.msra.mxu0 0
        %2032 = vmatprep.subr.bf16.mxu0 0
        %2033 = vmatpush1.bf16.msra.mxu0 0
        %2034 = vmatprep.subr.bf16.mxu0 0
        %2035 = vmatpush1.bf16.msra.mxu0 0
        %2036 = vmatprep.subr.bf16.mxu0 0
        %2037 = vmatpush1.bf16.msra.mxu0 0
        %2038 = vmatprep.mubr.bf16.mxu0 0
        %2039 = vmatmul.mubr.bf16.gmra.mrb[0].mxu0 %v2001
        %v2040 = vpop.f32.mrb[0].mxu0
        %v2041 = vadd.f32 0.0, %v2040
        %v2042 = vpop.f32.mrb[0].mxu0
        %v2043 = vpop.f32.mrb[0].mxu0
        %v2044 = vpop.f32.mrb[0].mxu0
        %2045 = vdwg.mxu0
        %v2047 = vsel %vm1710, %v1951, 0
        %v2050 = vsel %vm1956, %v1708, 0
        %2052 = vmatprep.subr.bf16.mxu0 0
        %2053 = vmatpush1.bf16.msra.mxu0 %v2050
        %2054 = vmatprep.subr.bf16.mxu0 0
        %2055 = vmatpush1.bf16.msra.mxu0 0
        %2056 = vmatprep.subr.bf16.mxu0 0
        %2057 = vmatpush1.bf16.msra.mxu0 0
        %2058 = vmatprep.subr.bf16.mxu0 0
        %2059 = vmatpush1.bf16.msra.mxu0 0
        %2060 = vmatprep.subr.bf16.mxu0 0
        %2061 = vmatpush1.bf16.msra.mxu0 0
        %2062 = vmatprep.subr.bf16.mxu0 0
        %2063 = vmatpush1.bf16.msra.mxu0 0
        %2064 = vmatprep.subr.bf16.mxu0 0
        %2065 = vmatpush1.bf16.msra.mxu0 0
        %2066 = vmatprep.subr.bf16.mxu0 0
        %2067 = vmatpush1.bf16.msra.mxu0 0
        %2068 = vmatprep.subr.bf16.mxu0 0
        %2069 = vmatpush1.bf16.msra.mxu0 0
        %2070 = vmatprep.subr.bf16.mxu0 0
        %2071 = vmatpush1.bf16.msra.mxu0 0
        %2072 = vmatprep.subr.bf16.mxu0 0
        %2073 = vmatpush1.bf16.msra.mxu0 0
        %2074 = vmatprep.subr.bf16.mxu0 0
        %2075 = vmatpush1.bf16.msra.mxu0 0
        %2076 = vmatprep.subr.bf16.mxu0 0
        %2077 = vmatpush1.bf16.msra.mxu0 0
        %2078 = vmatprep.subr.bf16.mxu0 0
        %2079 = vmatpush1.bf16.msra.mxu0 0
        %2080 = vmatprep.subr.bf16.mxu0 0
        %2081 = vmatpush1.bf16.msra.mxu0 0
        %2082 = vmatprep.subr.bf16.mxu0 0
        %2083 = vmatpush1.bf16.msra.mxu0 0
        %2084 = vmatprep.mubr.bf16.mxu0 0
        %2085 = vmatmul.mubr.bf16.gmra.mrb[0].mxu0 %v2047
        %v2086 = vpop.f32.mrb[0].mxu0
        %v2087 = vadd.f32 0.0, %v2086
        %v2088 = vpop.f32.mrb[0].mxu0
        %v2089 = vpop.f32.mrb[0].mxu0
        %v2090 = vpop.f32.mrb[0].mxu0
        %2091 = vdwg.mxu0
        %v2093 = vsel %vm1710, %v1952, 0
        %v2096 = vsel %vm1956, %v1709, 0
        %2098 = vmatprep.subr.bf16.mxu0 0
        %2099 = vmatpush1.bf16.msra.mxu0 %v2096
        %2100 = vmatprep.subr.bf16.mxu0 0
        %2101 = vmatpush1.bf16.msra.mxu0 0
        %2102 = vmatprep.subr.bf16.mxu0 0
        %2103 = vmatpush1.bf16.msra.mxu0 0
        %2104 = vmatprep.subr.bf16.mxu0 0
        %2105 = vmatpush1.bf16.msra.mxu0 0
        %2106 = vmatprep.subr.bf16.mxu0 0
        %2107 = vmatpush1.bf16.msra.mxu0 0
        %2108 = vmatprep.subr.bf16.mxu0 0
        %2109 = vmatpush1.bf16.msra.mxu0 0
        %2110 = vmatprep.subr.bf16.mxu0 0
        %2111 = vmatpush1.bf16.msra.mxu0 0
        %2112 = vmatprep.subr.bf16.mxu0 0
        %2113 = vmatpush1.bf16.msra.mxu0 0
        %2114 = vmatprep.subr.bf16.mxu0 0
        %2115 = vmatpush1.bf16.msra.mxu0 0
        %2116 = vmatprep.subr.bf16.mxu0 0
        %2117 = vmatpush1.bf16.msra.mxu0 0
        %2118 = vmatprep.subr.bf16.mxu0 0
        %2119 = vmatpush1.bf16.msra.mxu0 0
        %2120 = vmatprep.subr.bf16.mxu0 0
        %2121 = vmatpush1.bf16.msra.mxu0 0
        %2122 = vmatprep.subr.bf16.mxu0 0
        %2123 = vmatpush1.bf16.msra.mxu0 0
        %2124 = vmatprep.subr.bf16.mxu0 0
        %2125 = vmatpush1.bf16.msra.mxu0 0
        %2126 = vmatprep.subr.bf16.mxu0 0
        %2127 = vmatpush1.bf16.msra.mxu0 0
        %2128 = vmatprep.subr.bf16.mxu0 0
        %2129 = vmatpush1.bf16.msra.mxu0 0
        %2130 = vmatprep.mubr.bf16.mxu0 0
        %2131 = vmatmul.mubr.bf16.gmra.mrb[0].mxu0 %v2093
        %v2132 = vpop.f32.mrb[0].mxu0
        %v2133 = vadd.f32 0.0, %v2132
        %v2134 = vpop.f32.mrb[0].mxu0
        %v2135 = vpop.f32.mrb[0].mxu0
        %v2136 = vpop.f32.mrb[0].mxu0
        %2137 = vdwg.mxu0
        %v2138 = vcombine.low %v1995, %v2087
        %v2139 = vcombine.high %v1995, %v2087
        %v2141 = vunpack.c.l.s4 1983009808
        %v2142 = vunpack.c.0.s8 %v2141
        %v2143 = vlaneseq
        %v2144 = vshrl.u32 %v2143, 7
        %v2145 = vsub.s32 %v2142, %v2144
        %v2146 = vrot.slane %v2138, %v2145
        %v2148 = vunpack.c.l.s4 1983009808
        %v2149 = vunpack.c.0.s8 %v2148
        %v2150 = vlaneseq
        %v2151 = vshrl.u32 %v2150, 7
        %v2152 = vsub.s32 %v2149, %v2151
        %v2153 = vrot.slane %v2139, %v2152
        %v2154 = vcombine.low %v2041, %v2133
        %v2155 = vcombine.high %v2041, %v2133
        %v2157 = vunpack.c.l.s4 1983009808
        %v2158 = vunpack.c.0.s8 %v2157
        %v2159 = vlaneseq
        %v2160 = vshrl.u32 %v2159, 7
        %v2161 = vsub.s32 %v2158, %v2160
        %v2162 = vrot.slane %v2154, %v2161
        %v2164 = vunpack.c.l.s4 1983009808
        %v2165 = vunpack.c.0.s8 %v2164
        %v2166 = vlaneseq
        %v2167 = vshrl.u32 %v2166, 7
        %v2168 = vsub.s32 %v2165, %v2167
        %v2169 = vrot.slane %v2155, %v2168
        %v2170 = vcombine.low %v2146, %v2162
        %v2171 = vcombine.high %v2146, %v2162
        %v2173 = vunpack.c.l.s4 1934713408
        %v2174 = vunpack.c.0.s8 %v2173
        %v2175 = vlaneseq
        %v2176 = vshrl.u32 %v2175, 7
        %v2177 = vsub.s32 %v2174, %v2176
        %v2178 = vrot.slane %v2170, %v2177
        %v2180 = vunpack.c.l.s4 1934713408
        %v2181 = vunpack.c.0.s8 %v2180
        %v2182 = vlaneseq
        %v2183 = vshrl.u32 %v2182, 7
        %v2184 = vsub.s32 %v2181, %v2183
        %v2185 = vrot.slane %v2171, %v2184
        %v2186 = vcombine.low %v2153, %v2169
        %v2187 = vcombine.high %v2153, %v2169
        %v2189 = vunpack.c.l.s4 1934713408
        %v2190 = vunpack.c.0.s8 %v2189
        %v2191 = vlaneseq
        %v2192 = vshrl.u32 %v2191, 7
        %v2193 = vsub.s32 %v2190, %v2192
        %v2194 = vrot.slane %v2186, %v2193
        %v2196 = vunpack.c.l.s4 1934713408
        %v2197 = vunpack.c.0.s8 %v2196
        %v2198 = vlaneseq
        %v2199 = vshrl.u32 %v2198, 7
        %v2200 = vsub.s32 %v2197, %v2199
        %v2201 = vrot.slane %v2187, %v2200
        %v2202 = vcombine.high %v2178, 0.0
        %v2203 = vcombine.high %v2185, 0.0
        %v2204 = vcombine.high %v2194, 0.0
        %v2205 = vcombine.high %v2201, 0.0
        %v2206 = vcombine.low %v2178, %v2185
        %v2208 = vunpack.c.l.s4 1983009808
        %v2209 = vunpack.c.0.s8 %v2208
        %v2210 = vlaneseq
        %v2211 = vshrl.u32 %v2210, 7
        %v2212 = vsub.s32 %v2209, %v2211
        %v2213 = vrot.slane %v2206, %v2212
        %v2214 = vcombine.low %v2202, %v2203
        %v2216 = vunpack.c.l.s4 1983009808
        %v2217 = vunpack.c.0.s8 %v2216
        %v2218 = vlaneseq
        %v2219 = vshrl.u32 %v2218, 7
        %v2220 = vsub.s32 %v2217, %v2219
        %v2221 = vrot.slane %v2214, %v2220
        %v2222 = vcombine.low %v2194, %v2201
        %v2224 = vunpack.c.l.s4 1983009808
        %v2225 = vunpack.c.0.s8 %v2224
        %v2226 = vlaneseq
        %v2227 = vshrl.u32 %v2226, 7
        %v2228 = vsub.s32 %v2225, %v2227
        %v2229 = vrot.slane %v2222, %v2228
        %v2230 = vcombine.low %v2204, %v2205
        %v2232 = vunpack.c.l.s4 1983009808
        %v2233 = vunpack.c.0.s8 %v2232
        %v2234 = vlaneseq
        %v2235 = vshrl.u32 %v2234, 7
        %v2236 = vsub.s32 %v2233, %v2235
        %v2237 = vrot.slane %v2230, %v2236
        %v2238 = vcombine.low %v2213, %v2221
        %v2239 = vcombine.high %v2213, %v2221
        %v2241 = vunpack.c.l.s4 1934713408
        %v2242 = vunpack.c.0.s8 %v2241
        %v2243 = vlaneseq
        %v2244 = vshrl.u32 %v2243, 7
        %v2245 = vsub.s32 %v2242, %v2244
        %v2246 = vrot.slane %v2238, %v2245
        %v2248 = vunpack.c.l.s4 1934713408
        %v2249 = vunpack.c.0.s8 %v2248
        %v2250 = vlaneseq
        %v2251 = vshrl.u32 %v2250, 7
        %v2252 = vsub.s32 %v2249, %v2251
        %v2253 = vrot.slane %v2239, %v2252
        %v2254 = vcombine.low %v2229, %v2237
        %v2255 = vcombine.high %v2229, %v2237
        %v2257 = vunpack.c.l.s4 1934713408
        %v2258 = vunpack.c.0.s8 %v2257
        %v2259 = vlaneseq
        %v2260 = vshrl.u32 %v2259, 7
        %v2261 = vsub.s32 %v2258, %v2260
        %v2262 = vrot.slane %v2254, %v2261
        %v2264 = vunpack.c.l.s4 1934713408
        %v2265 = vunpack.c.0.s8 %v2264
        %v2266 = vlaneseq
        %v2267 = vshrl.u32 %v2266, 7
        %v2268 = vsub.s32 %v2265, %v2267
        %v2269 = vrot.slane %v2255, %v2268
        %v2270 = vcombine.low %v2246, %v2262
        %v2271 = vcombine.high %v2246, %v2262
        %v2272 = vcombine.low %v2253, %v2269
        %v2273 = vcombine.high %v2253, %v2269
        %2275 = vrot.lane.b32.xlu0 %v2271, 8
        %v2276 = vpop.permute.xlu0 %2275
        %2279 = vrot.lane.b32.xlu0 %v2272, 16
        %v2280 = vpop.permute.xlu0 %2279
        %2283 = vrot.lane.b32.xlu0 %v2273, 24
        %v2284 = vpop.permute.xlu0 %2283
        %v2286 = vsel %vm1710, %v2270, %v2276
        %vm2287 = vcmask 130048
        %v2288 = vsel %vm2287, %v2286, %v2280
        %vm2289 = vcmask 195584
        %v2290 = vsel %vm2289, %v2288, %v2284
        %v2291 = vpack.c.bf16 %v2290, %v2290
        %v2293 = vlaneseq
        %v2294 = vshrl.u32 %v2293, 7
        %v2295 = vsub.s32 0, %v2294
        %v2296 = vrot.slane %v1095, %v2295
        %v2302 = vunpack.c.l.b16 %v1091
        %v2303 = vunpack.c.l.b16 %v1092
        %v2304 = vunpack.c.l.b16 %v1093
        %v2305 = vunpack.c.l.b16 %v1094
        %v2306 = vpack.c.b16 %v2303, %v2302
        %v2307 = vpack.c.b16 %v2305, %v2304
        %v2311 = vsel %vm1109, %v2291, 0
        %2313 = vmatprep.subr.bf16.mxu0 0
        %2314 = vmatpush1.bf16.msra.mxu0 %v2306
        %2315 = vmatprep.subr.bf16.mxu0 0
        %2316 = vmatpush1.bf16.msra.mxu0 %v2307
        %2317 = vmatprep.subr.bf16.mxu0 0
        %2318 = vmatpush1.bf16.msra.mxu0 0
        %2319 = vmatprep.subr.bf16.mxu0 0
        %2320 = vmatpush1.bf16.msra.mxu0 0
        %2321 = vmatprep.subr.bf16.mxu0 0
        %2322 = vmatpush1.bf16.msra.mxu0 0
        %2323 = vmatprep.subr.bf16.mxu0 0
        %2324 = vmatpush1.bf16.msra.mxu0 0
        %2325 = vmatprep.subr.bf16.mxu0 0
        %2326 = vmatpush1.bf16.msra.mxu0 0
        %2327 = vmatprep.subr.bf16.mxu0 0
        %2328 = vmatpush1.bf16.msra.mxu0 0
        %2329 = vmatprep.subr.bf16.mxu0 0
        %2330 = vmatpush1.bf16.msra.mxu0 0
        %2331 = vmatprep.subr.bf16.mxu0 0
        %2332 = vmatpush1.bf16.msra.mxu0 0
        %2333 = vmatprep.subr.bf16.mxu0 0
        %2334 = vmatpush1.bf16.msra.mxu0 0
        %2335 = vmatprep.subr.bf16.mxu0 0
        %2336 = vmatpush1.bf16.msra.mxu0 0
        %2337 = vmatprep.subr.bf16.mxu0 0
        %2338 = vmatpush1.bf16.msra.mxu0 0
        %2339 = vmatprep.subr.bf16.mxu0 0
        %2340 = vmatpush1.bf16.msra.mxu0 0
        %2341 = vmatprep.subr.bf16.mxu0 0
        %2342 = vmatpush1.bf16.msra.mxu0 0
        %2343 = vmatprep.subr.bf16.mxu0 0
        %2344 = vmatpush1.bf16.msra.mxu0 0
        %2345 = vmatprep.mubr.bf16.mxu0 0
        %2346 = vmatmul.mubr.bf16.gmra.mrb[0].mxu0 %v2311
        %v2347 = vpop.f32.mrb[0].mxu0
        %v2348 = vadd.f32 %v2296, %v2347
        %v2349 = vpop.f32.mrb[0].mxu0
        %v2350 = vpop.f32.mrb[0].mxu0
        %v2351 = vpop.f32.mrb[0].mxu0
        %2352 = vdwg.mxu0
        %v2353 = vadd.f32 %v1074, %v2348
        %v2354 = vld [vmem:[%s19] sm:$0x1]
        %v2355 = vld [vmem:[%s20] sm:$0x1]
        %v2356 = vsel %vm1109, %v2353, 0.0
        %2357 = vadd.xlane.f32.xlu0 %v2356
        %v2358 = vpop.xlane.xlu0 %2357
        %v2359 = vrcp.pop 32.0
        %v2360 = vmul.f32 %v2358, %v2359
        %v2361 = vsub.f32 %v2353, %v2360
        %v2362 = vmul.f32 %v2361, %v2361
        %v2363 = vsel %vm1109, %v2362, 0.0
        %2364 = vadd.xlane.f32.xlu0 %v2363
        %v2365 = vpop.xlane.xlu0 %2364
        %v2366 = vmul.f32 %v2365, %v2359
        %v2367 = vadd.f32 %v2366, 0.001
        %v2368 = vrsqrt.pop %v2367
        %v2369 = vmul.f32 %v2361, %v2368
        %v2371 = vlaneseq
        %v2372 = vshrl.u32 %v2371, 7
        %v2373 = vsub.s32 0, %v2372
        %v2374 = vrot.slane %v2354, %v2373
        %v2376 = vmul.f32 %v2369, %v2374
        %v2378 = vlaneseq
        %v2379 = vshrl.u32 %v2378, 7
        %v2380 = vsub.s32 0, %v2379
        %v2381 = vrot.slane %v2355, %v2380
        %v2383 = vadd.f32 %v2376, %v2381
        %v2384 = vld [vmem:[%s10] sm:$0xf]
        %v2385 = vld [vmem:[%s10 + $0x4] sm:$0xf]
        %v2386 = vld [vmem:[%s10 + $0x8] sm:$0xf]
        %v2387 = vld [vmem:[%s10 + $0xc] sm:$0xf]
        %v2388 = vld [vmem:[#allocation13] sm:$0xf]
        %v2389 = vld [vmem:[#allocation13 + $0x4] sm:$0xf]
        %v2390 = vld [vmem:[#allocation13 + $0x8] sm:$0xf]
        %v2391 = vld [vmem:[#allocation13 + $0xc] sm:$0xf]
        %v2392 = vld [vmem:[#allocation14] sm:$0xf]
        %v2393 = vld [vmem:[#allocation14 + $0x4] sm:$0xf]
        %v2394 = vld [vmem:[#allocation14 + $0x8] sm:$0xf]
        %v2395 = vld [vmem:[#allocation14 + $0xc] sm:$0xf]
        %v2396 = vld [vmem:[%s13] sm:$0xf]
        %v2397 = vld [vmem:[%s13 + $0x4] sm:$0xf]
        %v2398 = vld [vmem:[%s13 + $0x8] sm:$0xf]
        %v2399 = vld [vmem:[%s13 + $0xc] sm:$0xf]
        %v2400 = vld [vmem:[#allocation16] sm:$0x1]
        %v2401 = vpack.c.bf16 %v2383, %v2383
        %v2406 = vunpack.c.l.b16 %v2384
        %v2407 = vunpack.c.l.b16 %v2385
        %v2408 = vunpack.c.l.b16 %v2386
        %v2409 = vunpack.c.l.b16 %v2387
        %v2410 = vpack.c.b16 %v2407, %v2406
        %v2411 = vpack.c.b16 %v2409, %v2408
        %v2415 = vsel %vm1109, %v2401, 0
        %2417 = vmatprep.subr.bf16.mxu0 0
        %2418 = vmatpush1.bf16.msra.mxu0 %v2410
        %2419 = vmatprep.subr.bf16.mxu0 0
        %2420 = vmatpush1.bf16.msra.mxu0 %v2411
        %2421 = vmatprep.subr.bf16.mxu0 0
        %2422 = vmatpush1.bf16.msra.mxu0 0
        %2423 = vmatprep.subr.bf16.mxu0 0
        %2424 = vmatpush1.bf16.msra.mxu0 0
        %2425 = vmatprep.subr.bf16.mxu0 0
        %2426 = vmatpush1.bf16.msra.mxu0 0
        %2427 = vmatprep.subr.bf16.mxu0 0
        %2428 = vmatpush1.bf16.msra.mxu0 0
        %2429 = vmatprep.subr.bf16.mxu0 0
        %2430 = vmatpush1.bf16.msra.mxu0 0
        %2431 = vmatprep.subr.bf16.mxu0 0
        %2432 = vmatpush1.bf16.msra.mxu0 0
        %2433 = vmatprep.subr.bf16.mxu0 0
        %2434 = vmatpush1.bf16.msra.mxu0 0
        %2435 = vmatprep.subr.bf16.mxu0 0
        %2436 = vmatpush1.bf16.msra.mxu0 0
        %2437 = vmatprep.subr.bf16.mxu0 0
        %2438 = vmatpush1.bf16.msra.mxu0 0
        %2439 = vmatprep.subr.bf16.mxu0 0
        %2440 = vmatpush1.bf16.msra.mxu0 0
        %2441 = vmatprep.subr.bf16.mxu0 0
        %2442 = vmatpush1.bf16.msra.mxu0 0
        %2443 = vmatprep.subr.bf16.mxu0 0
        %2444 = vmatpush1.bf16.msra.mxu0 0
        %2445 = vmatprep.subr.bf16.mxu0 0
        %2446 = vmatpush1.bf16.msra.mxu0 0
        %2447 = vmatprep.subr.bf16.mxu0 0
        %2448 = vmatpush1.bf16.msra.mxu0 0
        %2449 = vmatprep.mubr.bf16.mxu0 0
        %2450 = vmatmul.mubr.bf16.gmra.mrb[0].mxu0 %v2415
        %v2451 = vpop.f32.mrb[0].mxu0
        %v2452 = vadd.f32 0.0, %v2451
        %v2453 = vpop.f32.mrb[0].mxu0
        %v2454 = vpop.f32.mrb[0].mxu0
        %v2455 = vpop.f32.mrb[0].mxu0
        %2456 = vdwg.mxu0
        %v2461 = vunpack.c.l.b16 %v2388
        %v2462 = vunpack.c.l.b16 %v2389
        %v2463 = vunpack.c.l.b16 %v2390
        %v2464 = vunpack.c.l.b16 %v2391
        %v2465 = vpack.c.b16 %v2462, %v2461
        %v2466 = vpack.c.b16 %v2464, %v2463
        %v2470 = vsel %vm1109, %v1076, 0
        %2472 = vmatprep.subr.bf16.mxu0 0
        %2473 = vmatpush1.bf16.msra.mxu0 %v2465
        %2474 = vmatprep.subr.bf16.mxu0 0
        %2475 = vmatpush1.bf16.msra.mxu0 %v2466
        %2476 = vmatprep.subr.bf16.mxu0 0
        %2477 = vmatpush1.bf16.msra.mxu0 0
        %2478 = vmatprep.subr.bf16.mxu0 0
        %2479 = vmatpush1.bf16.msra.mxu0 0
        %2480 = vmatprep.subr.bf16.mxu0 0
        %2481 = vmatpush1.bf16.msra.mxu0 0
        %2482 = vmatprep.subr.bf16.mxu0 0
        %2483 = vmatpush1.bf16.msra.mxu0 0
        %2484 = vmatprep.subr.bf16.mxu0 0
        %2485 = vmatpush1.bf16.msra.mxu0 0
        %2486 = vmatprep.subr.bf16.mxu0 0
        %2487 = vmatpush1.bf16.msra.mxu0 0
        %2488 = vmatprep.subr.bf16.mxu0 0
        %2489 = vmatpush1.bf16.msra.mxu0 0
        %2490 = vmatprep.subr.bf16.mxu0 0
        %2491 = vmatpush1.bf16.msra.mxu0 0
        %2492 = vmatprep.subr.bf16.mxu0 0
        %2493 = vmatpush1.bf16.msra.mxu0 0
        %2494 = vmatprep.subr.bf16.mxu0 0
        %2495 = vmatpush1.bf16.msra.mxu0 0
        %2496 = vmatprep.subr.bf16.mxu0 0
        %2497 = vmatpush1.bf16.msra.mxu0 0
        %2498 = vmatprep.subr.bf16.mxu0 0
        %2499 = vmatpush1.bf16.msra.mxu0 0
        %2500 = vmatprep.subr.bf16.mxu0 0
        %2501 = vmatpush1.bf16.msra.mxu0 0
        %2502 = vmatprep.subr.bf16.mxu0 0
        %2503 = vmatpush1.bf16.msra.mxu0 0
        %2504 = vmatprep.mubr.bf16.mxu0 0
        %2505 = vmatmul.mubr.bf16.gmra.mrb[0].mxu0 %v2470
        %v2506 = vpop.f32.mrb[0].mxu0
        %v2507 = vadd.f32 0.0, %v2506
        %v2508 = vpop.f32.mrb[0].mxu0
        %v2509 = vpop.f32.mrb[0].mxu0
        %v2510 = vpop.f32.mrb[0].mxu0
        %2511 = vdwg.mxu0
        %v2516 = vunpack.c.l.b16 %v2392
        %v2517 = vunpack.c.l.b16 %v2393
        %v2518 = vunpack.c.l.b16 %v2394
        %v2519 = vunpack.c.l.b16 %v2395
        %v2520 = vpack.c.b16 %v2517, %v2516
        %v2521 = vpack.c.b16 %v2519, %v2518
        %2524 = vmatprep.subr.bf16.mxu0 0
        %2525 = vmatpush1.bf16.msra.mxu0 %v2520
        %2526 = vmatprep.subr.bf16.mxu0 0
        %2527 = vmatpush1.bf16.msra.mxu0 %v2521
        %2528 = vmatprep.subr.bf16.mxu0 0
        %2529 = vmatpush1.bf16.msra.mxu0 0
        %2530 = vmatprep.subr.bf16.mxu0 0
        %2531 = vmatpush1.bf16.msra.mxu0 0
        %2532 = vmatprep.subr.bf16.mxu0 0
        %2533 = vmatpush1.bf16.msra.mxu0 0
        %2534 = vmatprep.subr.bf16.mxu0 0
        %2535 = vmatpush1.bf16.msra.mxu0 0
        %2536 = vmatprep.subr.bf16.mxu0 0
        %2537 = vmatpush1.bf16.msra.mxu0 0
        %2538 = vmatprep.subr.bf16.mxu0 0
        %2539 = vmatpush1.bf16.msra.mxu0 0
        %2540 = vmatprep.subr.bf16.mxu0 0
        %2541 = vmatpush1.bf16.msra.mxu0 0
        %2542 = vmatprep.subr.bf16.mxu0 0
        %2543 = vmatpush1.bf16.msra.mxu0 0
        %2544 = vmatprep.subr.bf16.mxu0 0
        %2545 = vmatpush1.bf16.msra.mxu0 0
        %2546 = vmatprep.subr.bf16.mxu0 0
        %2547 = vmatpush1.bf16.msra.mxu0 0
        %2548 = vmatprep.subr.bf16.mxu0 0
        %2549 = vmatpush1.bf16.msra.mxu0 0
        %2550 = vmatprep.subr.bf16.mxu0 0
        %2551 = vmatpush1.bf16.msra.mxu0 0
        %2552 = vmatprep.subr.bf16.mxu0 0
        %2553 = vmatpush1.bf16.msra.mxu0 0
        %2554 = vmatprep.subr.bf16.mxu0 0
        %2555 = vmatpush1.bf16.msra.mxu0 0
        %2556 = vmatprep.mubr.bf16.mxu0 0
        %2557 = vmatmul.mubr.bf16.gmra.mrb[0].mxu0 %v2470
        %v2558 = vpop.f32.mrb[0].mxu0
        %v2559 = vadd.f32 0.0, %v2558
        %v2560 = vpop.f32.mrb[0].mxu0
        %v2561 = vpop.f32.mrb[0].mxu0
        %v2562 = vpop.f32.mrb[0].mxu0
        %2563 = vdwg.mxu0
        %2565 = vrot.lane.b32.xlu0 %v2452, 120
        %v2566 = vpop.permute.xlu0 %2565
        %2568 = vrot.lane.b32.xlu0 %v2452, 112
        %v2569 = vpop.permute.xlu0 %2568
        %2571 = vrot.lane.b32.xlu0 %v2452, 104
        %v2572 = vpop.permute.xlu0 %2571
        %v2574 = vcombine.low %v2452, %v2569
        %v2575 = vcombine.high %v2452, %v2569
        %v2577 = vunpack.c.l.s4 1983009808
        %v2578 = vunpack.c.0.s8 %v2577
        %v2579 = vlaneseq
        %v2580 = vshrl.u32 %v2579, 7
        %v2581 = vsub.s32 %v2578, %v2580
        %v2582 = vrot.slane %v2574, %v2581
        %v2584 = vunpack.c.l.s4 1983009808
        %v2585 = vunpack.c.0.s8 %v2584
        %v2586 = vlaneseq
        %v2587 = vshrl.u32 %v2586, 7
        %v2588 = vsub.s32 %v2585, %v2587
        %v2589 = vrot.slane %v2575, %v2588
        %v2590 = vcombine.low %v2566, %v2572
        %v2591 = vcombine.high %v2566, %v2572
        %v2593 = vunpack.c.l.s4 1983009808
        %v2594 = vunpack.c.0.s8 %v2593
        %v2595 = vlaneseq
        %v2596 = vshrl.u32 %v2595, 7
        %v2597 = vsub.s32 %v2594, %v2596
        %v2598 = vrot.slane %v2590, %v2597
        %v2600 = vunpack.c.l.s4 1983009808
        %v2601 = vunpack.c.0.s8 %v2600
        %v2602 = vlaneseq
        %v2603 = vshrl.u32 %v2602, 7
        %v2604 = vsub.s32 %v2601, %v2603
        %v2605 = vrot.slane %v2591, %v2604
        %v2606 = vcombine.low %v2582, %v2598
        %v2607 = vcombine.high %v2582, %v2598
        %v2609 = vunpack.c.l.s4 1934713408
        %v2610 = vunpack.c.0.s8 %v2609
        %v2611 = vlaneseq
        %v2612 = vshrl.u32 %v2611, 7
        %v2613 = vsub.s32 %v2610, %v2612
        %v2614 = vrot.slane %v2606, %v2613
        %v2616 = vunpack.c.l.s4 1934713408
        %v2617 = vunpack.c.0.s8 %v2616
        %v2618 = vlaneseq
        %v2619 = vshrl.u32 %v2618, 7
        %v2620 = vsub.s32 %v2617, %v2619
        %v2621 = vrot.slane %v2607, %v2620
        %v2622 = vcombine.low %v2589, %v2605
        %v2623 = vcombine.high %v2589, %v2605
        %v2625 = vunpack.c.l.s4 1934713408
        %v2626 = vunpack.c.0.s8 %v2625
        %v2627 = vlaneseq
        %v2628 = vshrl.u32 %v2627, 7
        %v2629 = vsub.s32 %v2626, %v2628
        %v2630 = vrot.slane %v2622, %v2629
        %v2632 = vunpack.c.l.s4 1934713408
        %v2633 = vunpack.c.0.s8 %v2632
        %v2634 = vlaneseq
        %v2635 = vshrl.u32 %v2634, 7
        %v2636 = vsub.s32 %v2633, %v2635
        %v2637 = vrot.slane %v2623, %v2636
        %v2638 = vcombine.high %v2614, 0.0
        %v2639 = vcombine.high %v2621, 0.0
        %v2640 = vcombine.high %v2630, 0.0
        %v2641 = vcombine.high %v2637, 0.0
        %v2642 = vcombine.low %v2614, %v2621
        %v2644 = vunpack.c.l.s4 1983009808
        %v2645 = vunpack.c.0.s8 %v2644
        %v2646 = vlaneseq
        %v2647 = vshrl.u32 %v2646, 7
        %v2648 = vsub.s32 %v2645, %v2647
        %v2649 = vrot.slane %v2642, %v2648
        %v2650 = vcombine.low %v2638, %v2639
        %v2652 = vunpack.c.l.s4 1983009808
        %v2653 = vunpack.c.0.s8 %v2652
        %v2654 = vlaneseq
        %v2655 = vshrl.u32 %v2654, 7
        %v2656 = vsub.s32 %v2653, %v2655
        %v2657 = vrot.slane %v2650, %v2656
        %v2658 = vcombine.low %v2630, %v2637
        %v2660 = vunpack.c.l.s4 1983009808
        %v2661 = vunpack.c.0.s8 %v2660
        %v2662 = vlaneseq
        %v2663 = vshrl.u32 %v2662, 7
        %v2664 = vsub.s32 %v2661, %v2663
        %v2665 = vrot.slane %v2658, %v2664
        %v2666 = vcombine.low %v2640, %v2641
        %v2668 = vunpack.c.l.s4 1983009808
        %v2669 = vunpack.c.0.s8 %v2668
        %v2670 = vlaneseq
        %v2671 = vshrl.u32 %v2670, 7
        %v2672 = vsub.s32 %v2669, %v2671
        %v2673 = vrot.slane %v2666, %v2672
        %v2674 = vcombine.low %v2649, %v2657
        %v2675 = vcombine.high %v2649, %v2657
        %v2677 = vunpack.c.l.s4 1934713408
        %v2678 = vunpack.c.0.s8 %v2677
        %v2679 = vlaneseq
        %v2680 = vshrl.u32 %v2679, 7
        %v2681 = vsub.s32 %v2678, %v2680
        %v2682 = vrot.slane %v2674, %v2681
        %v2684 = vunpack.c.l.s4 1934713408
        %v2685 = vunpack.c.0.s8 %v2684
        %v2686 = vlaneseq
        %v2687 = vshrl.u32 %v2686, 7
        %v2688 = vsub.s32 %v2685, %v2687
        %v2689 = vrot.slane %v2675, %v2688
        %v2690 = vcombine.low %v2665, %v2673
        %v2691 = vcombine.high %v2665, %v2673
        %v2693 = vunpack.c.l.s4 1934713408
        %v2694 = vunpack.c.0.s8 %v2693
        %v2695 = vlaneseq
        %v2696 = vshrl.u32 %v2695, 7
        %v2697 = vsub.s32 %v2694, %v2696
        %v2698 = vrot.slane %v2690, %v2697
        %v2700 = vunpack.c.l.s4 1934713408
        %v2701 = vunpack.c.0.s8 %v2700
        %v2702 = vlaneseq
        %v2703 = vshrl.u32 %v2702, 7
        %v2704 = vsub.s32 %v2701, %v2703
        %v2705 = vrot.slane %v2691, %v2704
        %v2706 = vcombine.low %v2682, %v2698
        %v2707 = vcombine.high %v2682, %v2698
        %v2708 = vcombine.low %v2689, %v2705
        %v2709 = vcombine.high %v2689, %v2705
        %v2710 = vpack.c.bf16 %v2706, %v2706
        %v2711 = vpack.c.bf16 %v2707, %v2707
        %v2712 = vpack.c.bf16 %v2708, %v2708
        %v2713 = vpack.c.bf16 %v2709, %v2709
        %2715 = vrot.lane.b32.xlu0 %v2507, 120
        %v2716 = vpop.permute.xlu0 %2715
        %2718 = vrot.lane.b32.xlu0 %v2507, 112
        %v2719 = vpop.permute.xlu0 %2718
        %2721 = vrot.lane.b32.xlu0 %v2507, 104
        %v2722 = vpop.permute.xlu0 %2721
        %v2724 = vcombine.low %v2507, %v2719
        %v2725 = vcombine.high %v2507, %v2719
        %v2727 = vunpack.c.l.s4 1983009808
        %v2728 = vunpack.c.0.s8 %v2727
        %v2729 = vlaneseq
        %v2730 = vshrl.u32 %v2729, 7
        %v2731 = vsub.s32 %v2728, %v2730
        %v2732 = vrot.slane %v2724, %v2731
        %v2734 = vunpack.c.l.s4 1983009808
        %v2735 = vunpack.c.0.s8 %v2734
        %v2736 = vlaneseq
        %v2737 = vshrl.u32 %v2736, 7
        %v2738 = vsub.s32 %v2735, %v2737
        %v2739 = vrot.slane %v2725, %v2738
        %v2740 = vcombine.low %v2716, %v2722
        %v2741 = vcombine.high %v2716, %v2722
        %v2743 = vunpack.c.l.s4 1983009808
        %v2744 = vunpack.c.0.s8 %v2743
        %v2745 = vlaneseq
        %v2746 = vshrl.u32 %v2745, 7
        %v2747 = vsub.s32 %v2744, %v2746
        %v2748 = vrot.slane %v2740, %v2747
        %v2750 = vunpack.c.l.s4 1983009808
        %v2751 = vunpack.c.0.s8 %v2750
        %v2752 = vlaneseq
        %v2753 = vshrl.u32 %v2752, 7
        %v2754 = vsub.s32 %v2751, %v2753
        %v2755 = vrot.slane %v2741, %v2754
        %v2756 = vcombine.low %v2732, %v2748
        %v2757 = vcombine.high %v2732, %v2748
        %v2759 = vunpack.c.l.s4 1934713408
        %v2760 = vunpack.c.0.s8 %v2759
        %v2761 = vlaneseq
        %v2762 = vshrl.u32 %v2761, 7
        %v2763 = vsub.s32 %v2760, %v2762
        %v2764 = vrot.slane %v2756, %v2763
        %v2766 = vunpack.c.l.s4 1934713408
        %v2767 = vunpack.c.0.s8 %v2766
        %v2768 = vlaneseq
        %v2769 = vshrl.u32 %v2768, 7
        %v2770 = vsub.s32 %v2767, %v2769
        %v2771 = vrot.slane %v2757, %v2770
        %v2772 = vcombine.low %v2739, %v2755
        %v2773 = vcombine.high %v2739, %v2755
        %v2775 = vunpack.c.l.s4 1934713408
        %v2776 = vunpack.c.0.s8 %v2775
        %v2777 = vlaneseq
        %v2778 = vshrl.u32 %v2777, 7
        %v2779 = vsub.s32 %v2776, %v2778
        %v2780 = vrot.slane %v2772, %v2779
        %v2782 = vunpack.c.l.s4 1934713408
        %v2783 = vunpack.c.0.s8 %v2782
        %v2784 = vlaneseq
        %v2785 = vshrl.u32 %v2784, 7
        %v2786 = vsub.s32 %v2783, %v2785
        %v2787 = vrot.slane %v2773, %v2786
        %v2788 = vcombine.high %v2764, 0.0
        %v2789 = vcombine.high %v2771, 0.0
        %v2790 = vcombine.high %v2780, 0.0
        %v2791 = vcombine.high %v2787, 0.0
        %v2792 = vcombine.low %v2764, %v2771
        %v2794 = vunpack.c.l.s4 1983009808
        %v2795 = vunpack.c.0.s8 %v2794
        %v2796 = vlaneseq
        %v2797 = vshrl.u32 %v2796, 7
        %v2798 = vsub.s32 %v2795, %v2797
        %v2799 = vrot.slane %v2792, %v2798
        %v2800 = vcombine.low %v2788, %v2789
        %v2802 = vunpack.c.l.s4 1983009808
        %v2803 = vunpack.c.0.s8 %v2802
        %v2804 = vlaneseq
        %v2805 = vshrl.u32 %v2804, 7
        %v2806 = vsub.s32 %v2803, %v2805
        %v2807 = vrot.slane %v2800, %v2806
        %v2808 = vcombine.low %v2780, %v2787
        %v2810 = vunpack.c.l.s4 1983009808
        %v2811 = vunpack.c.0.s8 %v2810
        %v2812 = vlaneseq
        %v2813 = vshrl.u32 %v2812, 7
        %v2814 = vsub.s32 %v2811, %v2813
        %v2815 = vrot.slane %v2808, %v2814
        %v2816 = vcombine.low %v2790, %v2791
        %v2818 = vunpack.c.l.s4 1983009808
        %v2819 = vunpack.c.0.s8 %v2818
        %v2820 = vlaneseq
        %v2821 = vshrl.u32 %v2820, 7
        %v2822 = vsub.s32 %v2819, %v2821
        %v2823 = vrot.slane %v2816, %v2822
        %v2824 = vcombine.low %v2799, %v2807
        %v2825 = vcombine.high %v2799, %v2807
        %v2827 = vunpack.c.l.s4 1934713408
        %v2828 = vunpack.c.0.s8 %v2827
        %v2829 = vlaneseq
        %v2830 = vshrl.u32 %v2829, 7
        %v2831 = vsub.s32 %v2828, %v2830
        %v2832 = vrot.slane %v2824, %v2831
        %v2834 = vunpack.c.l.s4 1934713408
        %v2835 = vunpack.c.0.s8 %v2834
        %v2836 = vlaneseq
        %v2837 = vshrl.u32 %v2836, 7
        %v2838 = vsub.s32 %v2835, %v2837
        %v2839 = vrot.slane %v2825, %v2838
        %v2840 = vcombine.low %v2815, %v2823
        %v2841 = vcombine.high %v2815, %v2823
        %v2843 = vunpack.c.l.s4 1934713408
        %v2844 = vunpack.c.0.s8 %v2843
        %v2845 = vlaneseq
        %v2846 = vshrl.u32 %v2845, 7
        %v2847 = vsub.s32 %v2844, %v2846
        %v2848 = vrot.slane %v2840, %v2847
        %v2850 = vunpack.c.l.s4 1934713408
        %v2851 = vunpack.c.0.s8 %v2850
        %v2852 = vlaneseq
        %v2853 = vshrl.u32 %v2852, 7
        %v2854 = vsub.s32 %v2851, %v2853
        %v2855 = vrot.slane %v2841, %v2854
        %v2856 = vcombine.low %v2832, %v2848
        %v2857 = vcombine.high %v2832, %v2848
        %v2858 = vcombine.low %v2839, %v2855
        %v2859 = vcombine.high %v2839, %v2855
        %v2860 = vpack.c.bf16 %v2856, %v2856
        %v2861 = vpack.c.bf16 %v2857, %v2857
        %v2862 = vpack.c.bf16 %v2858, %v2858
        %v2863 = vpack.c.bf16 %v2859, %v2859
        %2865 = vrot.lane.b32.xlu0 %v2559, 120
        %v2866 = vpop.permute.xlu0 %2865
        %2868 = vrot.lane.b32.xlu0 %v2559, 112
        %v2869 = vpop.permute.xlu0 %2868
        %2871 = vrot.lane.b32.xlu0 %v2559, 104
        %v2872 = vpop.permute.xlu0 %2871
        %v2874 = vcombine.low %v2559, %v2869
        %v2875 = vcombine.high %v2559, %v2869
        %v2877 = vunpack.c.l.s4 1983009808
        %v2878 = vunpack.c.0.s8 %v2877
        %v2879 = vlaneseq
        %v2880 = vshrl.u32 %v2879, 7
        %v2881 = vsub.s32 %v2878, %v2880
        %v2882 = vrot.slane %v2874, %v2881
        %v2884 = vunpack.c.l.s4 1983009808
        %v2885 = vunpack.c.0.s8 %v2884
        %v2886 = vlaneseq
        %v2887 = vshrl.u32 %v2886, 7
        %v2888 = vsub.s32 %v2885, %v2887
        %v2889 = vrot.slane %v2875, %v2888
        %v2890 = vcombine.low %v2866, %v2872
        %v2891 = vcombine.high %v2866, %v2872
        %v2893 = vunpack.c.l.s4 1983009808
        %v2894 = vunpack.c.0.s8 %v2893
        %v2895 = vlaneseq
        %v2896 = vshrl.u32 %v2895, 7
        %v2897 = vsub.s32 %v2894, %v2896
        %v2898 = vrot.slane %v2890, %v2897
        %v2900 = vunpack.c.l.s4 1983009808
        %v2901 = vunpack.c.0.s8 %v2900
        %v2902 = vlaneseq
        %v2903 = vshrl.u32 %v2902, 7
        %v2904 = vsub.s32 %v2901, %v2903
        %v2905 = vrot.slane %v2891, %v2904
        %v2906 = vcombine.low %v2882, %v2898
        %v2907 = vcombine.high %v2882, %v2898
        %v2909 = vunpack.c.l.s4 1934713408
        %v2910 = vunpack.c.0.s8 %v2909
        %v2911 = vlaneseq
        %v2912 = vshrl.u32 %v2911, 7
        %v2913 = vsub.s32 %v2910, %v2912
        %v2914 = vrot.slane %v2906, %v2913
        %v2916 = vunpack.c.l.s4 1934713408
        %v2917 = vunpack.c.0.s8 %v2916
        %v2918 = vlaneseq
        %v2919 = vshrl.u32 %v2918, 7
        %v2920 = vsub.s32 %v2917, %v2919
        %v2921 = vrot.slane %v2907, %v2920
        %v2922 = vcombine.low %v2889, %v2905
        %v2923 = vcombine.high %v2889, %v2905
        %v2925 = vunpack.c.l.s4 1934713408
        %v2926 = vunpack.c.0.s8 %v2925
        %v2927 = vlaneseq
        %v2928 = vshrl.u32 %v2927, 7
        %v2929 = vsub.s32 %v2926, %v2928
        %v2930 = vrot.slane %v2922, %v2929
        %v2932 = vunpack.c.l.s4 1934713408
        %v2933 = vunpack.c.0.s8 %v2932
        %v2934 = vlaneseq
        %v2935 = vshrl.u32 %v2934, 7
        %v2936 = vsub.s32 %v2933, %v2935
        %v2937 = vrot.slane %v2923, %v2936
        %v2938 = vcombine.high %v2914, 0.0
        %v2939 = vcombine.high %v2921, 0.0
        %v2940 = vcombine.high %v2930, 0.0
        %v2941 = vcombine.high %v2937, 0.0
        %v2942 = vcombine.low %v2914, %v2921
        %v2944 = vunpack.c.l.s4 1983009808
        %v2945 = vunpack.c.0.s8 %v2944
        %v2946 = vlaneseq
        %v2947 = vshrl.u32 %v2946, 7
        %v2948 = vsub.s32 %v2945, %v2947
        %v2949 = vrot.slane %v2942, %v2948
        %v2950 = vcombine.low %v2938, %v2939
        %v2952 = vunpack.c.l.s4 1983009808
        %v2953 = vunpack.c.0.s8 %v2952
        %v2954 = vlaneseq
        %v2955 = vshrl.u32 %v2954, 7
        %v2956 = vsub.s32 %v2953, %v2955
        %v2957 = vrot.slane %v2950, %v2956
        %v2958 = vcombine.low %v2930, %v2937
        %v2960 = vunpack.c.l.s4 1983009808
        %v2961 = vunpack.c.0.s8 %v2960
        %v2962 = vlaneseq
        %v2963 = vshrl.u32 %v2962, 7
        %v2964 = vsub.s32 %v2961, %v2963
        %v2965 = vrot.slane %v2958, %v2964
        %v2966 = vcombine.low %v2940, %v2941
        %v2968 = vunpack.c.l.s4 1983009808
        %v2969 = vunpack.c.0.s8 %v2968
        %v2970 = vlaneseq
        %v2971 = vshrl.u32 %v2970, 7
        %v2972 = vsub.s32 %v2969, %v2971
        %v2973 = vrot.slane %v2966, %v2972
        %v2974 = vcombine.low %v2949, %v2957
        %v2975 = vcombine.high %v2949, %v2957
        %v2977 = vunpack.c.l.s4 1934713408
        %v2978 = vunpack.c.0.s8 %v2977
        %v2979 = vlaneseq
        %v2980 = vshrl.u32 %v2979, 7
        %v2981 = vsub.s32 %v2978, %v2980
        %v2982 = vrot.slane %v2974, %v2981
        %v2984 = vunpack.c.l.s4 1934713408
        %v2985 = vunpack.c.0.s8 %v2984
        %v2986 = vlaneseq
        %v2987 = vshrl.u32 %v2986, 7
        %v2988 = vsub.s32 %v2985, %v2987
        %v2989 = vrot.slane %v2975, %v2988
        %v2990 = vcombine.low %v2965, %v2973
        %v2991 = vcombine.high %v2965, %v2973
        %v2993 = vunpack.c.l.s4 1934713408
        %v2994 = vunpack.c.0.s8 %v2993
        %v2995 = vlaneseq
        %v2996 = vshrl.u32 %v2995, 7
        %v2997 = vsub.s32 %v2994, %v2996
        %v2998 = vrot.slane %v2990, %v2997
        %v3000 = vunpack.c.l.s4 1934713408
        %v3001 = vunpack.c.0.s8 %v3000
        %v3002 = vlaneseq
        %v3003 = vshrl.u32 %v3002, 7
        %v3004 = vsub.s32 %v3001, %v3003
        %v3005 = vrot.slane %v2991, %v3004
        %v3006 = vcombine.low %v2982, %v2998
        %v3007 = vcombine.high %v2982, %v2998
        %v3008 = vcombine.low %v2989, %v3005
        %v3009 = vcombine.high %v2989, %v3005
        %v3010 = vpack.c.bf16 %v3006, %v3006
        %v3011 = vpack.c.bf16 %v3007, %v3007
        %v3012 = vpack.c.bf16 %v3008, %v3008
        %v3013 = vpack.c.bf16 %v3009, %v3009
        %v3015 = vsel %vm1710, %v2710, 0
        %v3018 = vsel %vm1710, %v2860, 0
        %3020 = vmatprep.subr.bf16.mxu0 0
        %3021 = vmatpush1.bf16.xpose.msra.mxu0 %v3018
        %3022 = vmatprep.subr.bf16.mxu0 0
        %3023 = vmatpush1.bf16.xpose.msra.mxu0 0
        %3024 = vmatprep.subr.bf16.mxu0 0
        %3025 = vmatpush1.bf16.xpose.msra.mxu0 0
        %3026 = vmatprep.subr.bf16.mxu0 0
        %3027 = vmatpush1.bf16.xpose.msra.mxu0 0
        %3028 = vmatprep.subr.bf16.mxu0 0
        %3029 = vmatpush1.bf16.xpose.msra.mxu0 0
        %3030 = vmatprep.subr.bf16.mxu0 0
        %3031 = vmatpush1.bf16.xpose.msra.mxu0 0
        %3032 = vmatprep.subr.bf16.mxu0 0
        %3033 = vmatpush1.bf16.xpose.msra.mxu0 0
        %3034 = vmatprep.subr.bf16.mxu0 0
        %3035 = vmatpush1.bf16.xpose.msra.mxu0 0
        %3036 = vmatprep.subr.bf16.mxu0 0
        %3037 = vmatpush1.bf16.xpose.msra.mxu0 0
        %3038 = vmatprep.subr.bf16.mxu0 0
        %3039 = vmatpush1.bf16.xpose.msra.mxu0 0
        %3040 = vmatprep.subr.bf16.mxu0 0
        %3041 = vmatpush1.bf16.xpose.msra.mxu0 0
        %3042 = vmatprep.subr.bf16.mxu0 0
        %3043 = vmatpush1.bf16.xpose.msra.mxu0 0
        %3044 = vmatprep.subr.bf16.mxu0 0
        %3045 = vmatpush1.bf16.xpose.msra.mxu0 0
        %3046 = vmatprep.subr.bf16.mxu0 0
        %3047 = vmatpush1.bf16.xpose.msra.mxu0 0
        %3048 = vmatprep.subr.bf16.mxu0 0
        %3049 = vmatpush1.bf16.xpose.msra.mxu0 0
        %3050 = vmatprep.subr.bf16.mxu0 0
        %3051 = vmatpush1.bf16.xpose.msra.mxu0 0
        %3052 = vmatprep.mubr.bf16.mxu0 0
        %3053 = vmatmul.mubr.bf16.gmra.mrb[0].mxu0 %v3015
        %v3054 = vpop.f32.mrb[0].mxu0
        %v3055 = vadd.f32 0.0, %v3054
        %v3056 = vpop.f32.mrb[0].mxu0
        %v3057 = vpop.f32.mrb[0].mxu0
        %v3058 = vpop.f32.mrb[0].mxu0
        %3059 = vdwg.mxu0
        %v3061 = vsel %vm1710, %v2711, 0
        %v3064 = vsel %vm1710, %v2861, 0
        %3066 = vmatprep.subr.bf16.mxu0 0
        %3067 = vmatpush1.bf16.xpose.msra.mxu0 %v3064
        %3068 = vmatprep.subr.bf16.mxu0 0
        %3069 = vmatpush1.bf16.xpose.msra.mxu0 0
        %3070 = vmatprep.subr.bf16.mxu0 0
        %3071 = vmatpush1.bf16.xpose.msra.mxu0 0
        %3072 = vmatprep.subr.bf16.mxu0 0
        %3073 = vmatpush1.bf16.xpose.msra.mxu0 0
        %3074 = vmatprep.subr.bf16.mxu0 0
        %3075 = vmatpush1.bf16.xpose.msra.mxu0 0
        %3076 = vmatprep.subr.bf16.mxu0 0
        %3077 = vmatpush1.bf16.xpose.msra.mxu0 0
        %3078 = vmatprep.subr.bf16.mxu0 0
        %3079 = vmatpush1.bf16.xpose.msra.mxu0 0
        %3080 = vmatprep.subr.bf16.mxu0 0
        %3081 = vmatpush1.bf16.xpose.msra.mxu0 0
        %3082 = vmatprep.subr.bf16.mxu0 0
        %3083 = vmatpush1.bf16.xpose.msra.mxu0 0
        %3084 = vmatprep.subr.bf16.mxu0 0
        %3085 = vmatpush1.bf16.xpose.msra.mxu0 0
        %3086 = vmatprep.subr.bf16.mxu0 0
        %3087 = vmatpush1.bf16.xpose.msra.mxu0 0
        %3088 = vmatprep.subr.bf16.mxu0 0
        %3089 = vmatpush1.bf16.xpose.msra.mxu0 0
        %3090 = vmatprep.subr.bf16.mxu0 0
        %3091 = vmatpush1.bf16.xpose.msra.mxu0 0
        %3092 = vmatprep.subr.bf16.mxu0 0
        %3093 = vmatpush1.bf16.xpose.msra.mxu0 0
        %3094 = vmatprep.subr.bf16.mxu0 0
        %3095 = vmatpush1.bf16.xpose.msra.mxu0 0
        %3096 = vmatprep.subr.bf16.mxu0 0
        %3097 = vmatpush1.bf16.xpose.msra.mxu0 0
        %3098 = vmatprep.mubr.bf16.mxu0 0
        %3099 = vmatmul.mubr.bf16.gmra.mrb[0].mxu0 %v3061
        %v3100 = vpop.f32.mrb[0].mxu0
        %v3101 = vadd.f32 0.0, %v3100
        %v3102 = vpop.f32.mrb[0].mxu0
        %v3103 = vpop.f32.mrb[0].mxu0
        %v3104 = vpop.f32.mrb[0].mxu0
        %3105 = vdwg.mxu0
        %v3107 = vsel %vm1710, %v2712, 0
        %v3110 = vsel %vm1710, %v2862, 0
        %3112 = vmatprep.subr.bf16.mxu0 0
        %3113 = vmatpush1.bf16.xpose.msra.mxu0 %v3110
        %3114 = vmatprep.subr.bf16.mxu0 0
        %3115 = vmatpush1.bf16.xpose.msra.mxu0 0
        %3116 = vmatprep.subr.bf16.mxu0 0
        %3117 = vmatpush1.bf16.xpose.msra.mxu0 0
        %3118 = vmatprep.subr.bf16.mxu0 0
        %3119 = vmatpush1.bf16.xpose.msra.mxu0 0
        %3120 = vmatprep.subr.bf16.mxu0 0
        %3121 = vmatpush1.bf16.xpose.msra.mxu0 0
        %3122 = vmatprep.subr.bf16.mxu0 0
        %3123 = vmatpush1.bf16.xpose.msra.mxu0 0
        %3124 = vmatprep.subr.bf16.mxu0 0
        %3125 = vmatpush1.bf16.xpose.msra.mxu0 0
        %3126 = vmatprep.subr.bf16.mxu0 0
        %3127 = vmatpush1.bf16.xpose.msra.mxu0 0
        %3128 = vmatprep.subr.bf16.mxu0 0
        %3129 = vmatpush1.bf16.xpose.msra.mxu0 0
        %3130 = vmatprep.subr.bf16.mxu0 0
        %3131 = vmatpush1.bf16.xpose.msra.mxu0 0
        %3132 = vmatprep.subr.bf16.mxu0 0
        %3133 = vmatpush1.bf16.xpose.msra.mxu0 0
        %3134 = vmatprep.subr.bf16.mxu0 0
        %3135 = vmatpush1.bf16.xpose.msra.mxu0 0
        %3136 = vmatprep.subr.bf16.mxu0 0
        %3137 = vmatpush1.bf16.xpose.msra.mxu0 0
        %3138 = vmatprep.subr.bf16.mxu0 0
        %3139 = vmatpush1.bf16.xpose.msra.mxu0 0
        %3140 = vmatprep.subr.bf16.mxu0 0
        %3141 = vmatpush1.bf16.xpose.msra.mxu0 0
        %3142 = vmatprep.subr.bf16.mxu0 0
        %3143 = vmatpush1.bf16.xpose.msra.mxu0 0
        %3144 = vmatprep.mubr.bf16.mxu0 0
        %3145 = vmatmul.mubr.bf16.gmra.mrb[0].mxu0 %v3107
        %v3146 = vpop.f32.mrb[0].mxu0
        %v3147 = vadd.f32 0.0, %v3146
        %v3148 = vpop.f32.mrb[0].mxu0
        %v3149 = vpop.f32.mrb[0].mxu0
        %v3150 = vpop.f32.mrb[0].mxu0
        %3151 = vdwg.mxu0
        %v3153 = vsel %vm1710, %v2713, 0
        %v3156 = vsel %vm1710, %v2863, 0
        %3158 = vmatprep.subr.bf16.mxu0 0
        %3159 = vmatpush1.bf16.xpose.msra.mxu0 %v3156
        %3160 = vmatprep.subr.bf16.mxu0 0
        %3161 = vmatpush1.bf16.xpose.msra.mxu0 0
        %3162 = vmatprep.subr.bf16.mxu0 0
        %3163 = vmatpush1.bf16.xpose.msra.mxu0 0
        %3164 = vmatprep.subr.bf16.mxu0 0
        %3165 = vmatpush1.bf16.xpose.msra.mxu0 0
        %3166 = vmatprep.subr.bf16.mxu0 0
        %3167 = vmatpush1.bf16.xpose.msra.mxu0 0
        %3168 = vmatprep.subr.bf16.mxu0 0
        %3169 = vmatpush1.bf16.xpose.msra.mxu0 0
        %3170 = vmatprep.subr.bf16.mxu0 0
        %3171 = vmatpush1.bf16.xpose.msra.mxu0 0
        %3172 = vmatprep.subr.bf16.mxu0 0
        %3173 = vmatpush1.bf16.xpose.msra.mxu0 0
        %3174 = vmatprep.subr.bf16.mxu0 0
        %3175 = vmatpush1.bf16.xpose.msra.mxu0 0
        %3176 = vmatprep.subr.bf16.mxu0 0
        %3177 = vmatpush1.bf16.xpose.msra.mxu0 0
        %3178 = vmatprep.subr.bf16.mxu0 0
        %3179 = vmatpush1.bf16.xpose.msra.mxu0 0
        %3180 = vmatprep.subr.bf16.mxu0 0
        %3181 = vmatpush1.bf16.xpose.msra.mxu0 0
        %3182 = vmatprep.subr.bf16.mxu0 0
        %3183 = vmatpush1.bf16.xpose.msra.mxu0 0
        %3184 = vmatprep.subr.bf16.mxu0 0
        %3185 = vmatpush1.bf16.xpose.msra.mxu0 0
        %3186 = vmatprep.subr.bf16.mxu0 0
        %3187 = vmatpush1.bf16.xpose.msra.mxu0 0
        %3188 = vmatprep.subr.bf16.mxu0 0
        %3189 = vmatpush1.bf16.xpose.msra.mxu0 0
        %3190 = vmatprep.mubr.bf16.mxu0 0
        %3191 = vmatmul.mubr.bf16.gmra.mrb[0].mxu0 %v3153
        %v3192 = vpop.f32.mrb[0].mxu0
        %v3193 = vadd.f32 0.0, %v3192
        %v3194 = vpop.f32.mrb[0].mxu0
        %v3195 = vpop.f32.mrb[0].mxu0
        %v3196 = vpop.f32.mrb[0].mxu0
        %3197 = vdwg.mxu0
        %vm3198 = vnez %v1078
        %v3199 = vsel %vm3198, 16843009, 0
        %v3200 = vunpack.c.0.s8 %v3199
        %vm3201 = vcmp.ne.s32.totalorder %v3200, 0
        %v3202 = vsel %vm3201, 1, 0
        %vm3203 = vcmp.eq.s32.totalorder %v3202, 1
        %v3204 = vsel %vm3203, %v3055, -1e+09
        %v3205 = vsel %vm3203, %v3101, -1e+09
        %v3206 = vsel %vm3203, %v3147, -1e+09
        %v3207 = vsel %vm3203, %v3193, -1e+09
        %v3208 = vsel %vm1710, %v3204, -inf
        %3209 = vmax.xlane.f32.xlu0 %v3208
        %v3210 = vpop.xlane.xlu0 %3209
        %v3211 = vsel %vm1710, %v3205, -inf
        %3212 = vmax.xlane.f32.xlu0 %v3211
        %v3213 = vpop.xlane.xlu0 %3212
        %v3214 = vsel %vm1710, %v3206, -inf
        %3215 = vmax.xlane.f32.xlu0 %v3214
        %v3216 = vpop.xlane.xlu0 %3215
        %v3217 = vsel %vm1710, %v3207, -inf
        %3218 = vmax.xlane.f32.xlu0 %v3217
        %v3219 = vpop.xlane.xlu0 %3218
        %v3220 = vsub.f32 %v3204, %v3210
        %v3221 = vsub.f32 %v3205, %v3213
        %v3222 = vsub.f32 %v3206, %v3216
        %v3223 = vsub.f32 %v3207, %v3219
        %v3224 = vmul.f32 %v3220, 1.442695
        %v3225 = vpow.pop %v3224
        %v3226 = vmul.f32 %v3221, 1.442695
        %v3227 = vpow.pop %v3226
        %v3228 = vmul.f32 %v3222, 1.442695
        %v3229 = vpow.pop %v3228
        %v3230 = vmul.f32 %v3223, 1.442695
        %v3231 = vpow.pop %v3230
        %v3232 = vsel %vm1710, %v3225, 0.0
        %3233 = vadd.xlane.f32.xlu0 %v3232
        %v3234 = vpop.xlane.xlu0 %3233
        %v3235 = vsel %vm1710, %v3227, 0.0
        %3236 = vadd.xlane.f32.xlu0 %v3235
        %v3237 = vpop.xlane.xlu0 %3236
        %v3238 = vsel %vm1710, %v3229, 0.0
        %3239 = vadd.xlane.f32.xlu0 %v3238
        %v3240 = vpop.xlane.xlu0 %3239
        %v3241 = vsel %vm1710, %v3231, 0.0
        %3242 = vadd.xlane.f32.xlu0 %v3241
        %v3243 = vpop.xlane.xlu0 %3242
        %v3244 = vrcp.pop %v3234
        %v3245 = vmul.f32 %v3225, %v3244
        %v3246 = vrcp.pop %v3237
        %v3247 = vmul.f32 %v3227, %v3246
        %v3248 = vrcp.pop %v3240
        %v3249 = vmul.f32 %v3229, %v3248
        %v3250 = vrcp.pop %v3243
        %v3251 = vmul.f32 %v3231, %v3250
        %v3252 = vpack.c.bf16 %v3245, %v3245
        %v3253 = vpack.c.bf16 %v3247, %v3247
        %v3254 = vpack.c.bf16 %v3249, %v3249
        %v3255 = vpack.c.bf16 %v3251, %v3251
        %v3257 = vsel %vm1710, %v3252, 0
        %v3260 = vsel %vm1956, %v3010, 0
        %3262 = vmatprep.subr.bf16.mxu0 0
        %3263 = vmatpush1.bf16.msra.mxu0 %v3260
        %3264 = vmatprep.subr.bf16.mxu0 0
        %3265 = vmatpush1.bf16.msra.mxu0 0
        %3266 = vmatprep.subr.bf16.mxu0 0
        %3267 = vmatpush1.bf16.msra.mxu0 0
        %3268 = vmatprep.subr.bf16.mxu0 0
        %3269 = vmatpush1.bf16.msra.mxu0 0
        %3270 = vmatprep.subr.bf16.mxu0 0
        %3271 = vmatpush1.bf16.msra.mxu0 0
        %3272 = vmatprep.subr.bf16.mxu0 0
        %3273 = vmatpush1.bf16.msra.mxu0 0
        %3274 = vmatprep.subr.bf16.mxu0 0
        %3275 = vmatpush1.bf16.msra.mxu0 0
        %3276 = vmatprep.subr.bf16.mxu0 0
        %3277 = vmatpush1.bf16.msra.mxu0 0
        %3278 = vmatprep.subr.bf16.mxu0 0
        %3279 = vmatpush1.bf16.msra.mxu0 0
        %3280 = vmatprep.subr.bf16.mxu0 0
        %3281 = vmatpush1.bf16.msra.mxu0 0
        %3282 = vmatprep.subr.bf16.mxu0 0
        %3283 = vmatpush1.bf16.msra.mxu0 0
        %3284 = vmatprep.subr.bf16.mxu0 0
        %3285 = vmatpush1.bf16.msra.mxu0 0
        %3286 = vmatprep.subr.bf16.mxu0 0
        %3287 = vmatpush1.bf16.msra.mxu0 0
        %3288 = vmatprep.subr.bf16.mxu0 0
        %3289 = vmatpush1.bf16.msra.mxu0 0
        %3290 = vmatprep.subr.bf16.mxu0 0
        %3291 = vmatpush1.bf16.msra.mxu0 0
        %3292 = vmatprep.subr.bf16.mxu0 0
        %3293 = vmatpush1.bf16.msra.mxu0 0
        %3294 = vmatprep.mubr.bf16.mxu0 0
        %3295 = vmatmul.mubr.bf16.gmra.mrb[0].mxu0 %v3257
        %v3296 = vpop.f32.mrb[0].mxu0
        %v3297 = vadd.f32 0.0, %v3296
        %v3298 = vpop.f32.mrb[0].mxu0
        %v3299 = vpop.f32.mrb[0].mxu0
        %v3300 = vpop.f32.mrb[0].mxu0
        %3301 = vdwg.mxu0
        %v3303 = vsel %vm1710, %v3253, 0
        %v3306 = vsel %vm1956, %v3011, 0
        %3308 = vmatprep.subr.bf16.mxu0 0
        %3309 = vmatpush1.bf16.msra.mxu0 %v3306
        %3310 = vmatprep.subr.bf16.mxu0 0
        %3311 = vmatpush1.bf16.msra.mxu0 0
        %3312 = vmatprep.subr.bf16.mxu0 0
        %3313 = vmatpush1.bf16.msra.mxu0 0
        %3314 = vmatprep.subr.bf16.mxu0 0
        %3315 = vmatpush1.bf16.msra.mxu0 0
        %3316 = vmatprep.subr.bf16.mxu0 0
        %3317 = vmatpush1.bf16.msra.mxu0 0
        %3318 = vmatprep.subr.bf16.mxu0 0
        %3319 = vmatpush1.bf16.msra.mxu0 0
        %3320 = vmatprep.subr.bf16.mxu0 0
        %3321 = vmatpush1.bf16.msra.mxu0 0
        %3322 = vmatprep.subr.bf16.mxu0 0
        %3323 = vmatpush1.bf16.msra.mxu0 0
        %3324 = vmatprep.subr.bf16.mxu0 0
        %3325 = vmatpush1.bf16.msra.mxu0 0
        %3326 = vmatprep.subr.bf16.mxu0 0
        %3327 = vmatpush1.bf16.msra.mxu0 0
        %3328 = vmatprep.subr.bf16.mxu0 0
        %3329 = vmatpush1.bf16.msra.mxu0 0
        %3330 = vmatprep.subr.bf16.mxu0 0
        %3331 = vmatpush1.bf16.msra.mxu0 0
        %3332 = vmatprep.subr.bf16.mxu0 0
        %3333 = vmatpush1.bf16.msra.mxu0 0
        %3334 = vmatprep.subr.bf16.mxu0 0
        %3335 = vmatpush1.bf16.msra.mxu0 0
        %3336 = vmatprep.subr.bf16.mxu0 0
        %3337 = vmatpush1.bf16.msra.mxu0 0
        %3338 = vmatprep.subr.bf16.mxu0 0
        %3339 = vmatpush1.bf16.msra.mxu0 0
        %3340 = vmatprep.mubr.bf16.mxu0 0
        %3341 = vmatmul.mubr.bf16.gmra.mrb[0].mxu0 %v3303
        %v3342 = vpop.f32.mrb[0].mxu0
        %v3343 = vadd.f32 0.0, %v3342
        %v3344 = vpop.f32.mrb[0].mxu0
        %v3345 = vpop.f32.mrb[0].mxu0
        %v3346 = vpop.f32.mrb[0].mxu0
        %3347 = vdwg.mxu0
        %v3349 = vsel %vm1710, %v3254, 0
        %v3352 = vsel %vm1956, %v3012, 0
        %3354 = vmatprep.subr.bf16.mxu0 0
        %3355 = vmatpush1.bf16.msra.mxu0 %v3352
        %3356 = vmatprep.subr.bf16.mxu0 0
        %3357 = vmatpush1.bf16.msra.mxu0 0
        %3358 = vmatprep.subr.bf16.mxu0 0
        %3359 = vmatpush1.bf16.msra.mxu0 0
        %3360 = vmatprep.subr.bf16.mxu0 0
        %3361 = vmatpush1.bf16.msra.mxu0 0
        %3362 = vmatprep.subr.bf16.mxu0 0
        %3363 = vmatpush1.bf16.msra.mxu0 0
        %3364 = vmatprep.subr.bf16.mxu0 0
        %3365 = vmatpush1.bf16.msra.mxu0 0
        %3366 = vmatprep.subr.bf16.mxu0 0
        %3367 = vmatpush1.bf16.msra.mxu0 0
        %3368 = vmatprep.subr.bf16.mxu0 0
        %3369 = vmatpush1.bf16.msra.mxu0 0
        %3370 = vmatprep.subr.bf16.mxu0 0
        %3371 = vmatpush1.bf16.msra.mxu0 0
        %3372 = vmatprep.subr.bf16.mxu0 0
        %3373 = vmatpush1.bf16.msra.mxu0 0
        %3374 = vmatprep.subr.bf16.mxu0 0
        %3375 = vmatpush1.bf16.msra.mxu0 0
        %3376 = vmatprep.subr.bf16.mxu0 0
        %3377 = vmatpush1.bf16.msra.mxu0 0
        %3378 = vmatprep.subr.bf16.mxu0 0
        %3379 = vmatpush1.bf16.msra.mxu0 0
        %3380 = vmatprep.subr.bf16.mxu0 0
        %3381 = vmatpush1.bf16.msra.mxu0 0
        %3382 = vmatprep.subr.bf16.mxu0 0
        %3383 = vmatpush1.bf16.msra.mxu0 0
        %3384 = vmatprep.subr.bf16.mxu0 0
        %3385 = vmatpush1.bf16.msra.mxu0 0
        %3386 = vmatprep.mubr.bf16.mxu0 0
        %3387 = vmatmul.mubr.bf16.gmra.mrb[0].mxu0 %v3349
        %v3388 = vpop.f32.mrb[0].mxu0
        %v3389 = vadd.f32 0.0, %v3388
        %v3390 = vpop.f32.mrb[0].mxu0
        %v3391 = vpop.f32.mrb[0].mxu0
        %v3392 = vpop.f32.mrb[0].mxu0
        %3393 = vdwg.mxu0
        %v3395 = vsel %vm1710, %v3255, 0
        %v3398 = vsel %vm1956, %v3013, 0
        %3400 = vmatprep.subr.bf16.mxu0 0
        %3401 = vmatpush1.bf16.msra.mxu0 %v3398
        %3402 = vmatprep.subr.bf16.mxu0 0
        %3403 = vmatpush1.bf16.msra.mxu0 0
        %3404 = vmatprep.subr.bf16.mxu0 0
        %3405 = vmatpush1.bf16.msra.mxu0 0
        %3406 = vmatprep.subr.bf16.mxu0 0
        %3407 = vmatpush1.bf16.msra.mxu0 0
        %3408 = vmatprep.subr.bf16.mxu0 0
        %3409 = vmatpush1.bf16.msra.mxu0 0
        %3410 = vmatprep.subr.bf16.mxu0 0
        %3411 = vmatpush1.bf16.msra.mxu0 0
        %3412 = vmatprep.subr.bf16.mxu0 0
        %3413 = vmatpush1.bf16.msra.mxu0 0
        %3414 = vmatprep.subr.bf16.mxu0 0
        %3415 = vmatpush1.bf16.msra.mxu0 0
        %3416 = vmatprep.subr.bf16.mxu0 0
        %3417 = vmatpush1.bf16.msra.mxu0 0
        %3418 = vmatprep.subr.bf16.mxu0 0
        %3419 = vmatpush1.bf16.msra.mxu0 0
        %3420 = vmatprep.subr.bf16.mxu0 0
        %3421 = vmatpush1.bf16.msra.mxu0 0
        %3422 = vmatprep.subr.bf16.mxu0 0
        %3423 = vmatpush1.bf16.msra.mxu0 0
        %3424 = vmatprep.subr.bf16.mxu0 0
        %3425 = vmatpush1.bf16.msra.mxu0 0
        %3426 = vmatprep.subr.bf16.mxu0 0
        %3427 = vmatpush1.bf16.msra.mxu0 0
        %3428 = vmatprep.subr.bf16.mxu0 0
        %3429 = vmatpush1.bf16.msra.mxu0 0
        %3430 = vmatprep.subr.bf16.mxu0 0
        %3431 = vmatpush1.bf16.msra.mxu0 0
        %3432 = vmatprep.mubr.bf16.mxu0 0
        %3433 = vmatmul.mubr.bf16.gmra.mrb[0].mxu0 %v3395
        %v3434 = vpop.f32.mrb[0].mxu0
        %v3435 = vadd.f32 0.0, %v3434
        %v3436 = vpop.f32.mrb[0].mxu0
        %v3437 = vpop.f32.mrb[0].mxu0
        %v3438 = vpop.f32.mrb[0].mxu0
        %3439 = vdwg.mxu0
        %v3440 = vcombine.low %v3297, %v3389
        %v3441 = vcombine.high %v3297, %v3389
        %v3443 = vunpack.c.l.s4 1983009808
        %v3444 = vunpack.c.0.s8 %v3443
        %v3445 = vlaneseq
        %v3446 = vshrl.u32 %v3445, 7
        %v3447 = vsub.s32 %v3444, %v3446
        %v3448 = vrot.slane %v3440, %v3447
        %v3450 = vunpack.c.l.s4 1983009808
        %v3451 = vunpack.c.0.s8 %v3450
        %v3452 = vlaneseq
        %v3453 = vshrl.u32 %v3452, 7
        %v3454 = vsub.s32 %v3451, %v3453
        %v3455 = vrot.slane %v3441, %v3454
        %v3456 = vcombine.low %v3343, %v3435
        %v3457 = vcombine.high %v3343, %v3435
        %v3459 = vunpack.c.l.s4 1983009808
        %v3460 = vunpack.c.0.s8 %v3459
        %v3461 = vlaneseq
        %v3462 = vshrl.u32 %v3461, 7
        %v3463 = vsub.s32 %v3460, %v3462
        %v3464 = vrot.slane %v3456, %v3463
        %v3466 = vunpack.c.l.s4 1983009808
        %v3467 = vunpack.c.0.s8 %v3466
        %v3468 = vlaneseq
        %v3469 = vshrl.u32 %v3468, 7
        %v3470 = vsub.s32 %v3467, %v3469
        %v3471 = vrot.slane %v3457, %v3470
        %v3472 = vcombine.low %v3448, %v3464
        %v3473 = vcombine.high %v3448, %v3464
        %v3475 = vunpack.c.l.s4 1934713408
        %v3476 = vunpack.c.0.s8 %v3475
        %v3477 = vlaneseq
        %v3478 = vshrl.u32 %v3477, 7
        %v3479 = vsub.s32 %v3476, %v3478
        %v3480 = vrot.slane %v3472, %v3479
        %v3482 = vunpack.c.l.s4 1934713408
        %v3483 = vunpack.c.0.s8 %v3482
        %v3484 = vlaneseq
        %v3485 = vshrl.u32 %v3484, 7
        %v3486 = vsub.s32 %v3483, %v3485
        %v3487 = vrot.slane %v3473, %v3486
        %v3488 = vcombine.low %v3455, %v3471
        %v3489 = vcombine.high %v3455, %v3471
        %v3491 = vunpack.c.l.s4 1934713408
        %v3492 = vunpack.c.0.s8 %v3491
        %v3493 = vlaneseq
        %v3494 = vshrl.u32 %v3493, 7
        %v3495 = vsub.s32 %v3492, %v3494
        %v3496 = vrot.slane %v3488, %v3495
        %v3498 = vunpack.c.l.s4 1934713408
        %v3499 = vunpack.c.0.s8 %v3498
        %v3500 = vlaneseq
        %v3501 = vshrl.u32 %v3500, 7
        %v3502 = vsub.s32 %v3499, %v3501
        %v3503 = vrot.slane %v3489, %v3502
        %v3504 = vcombine.high %v3480, 0.0
        %v3505 = vcombine.high %v3487, 0.0
        %v3506 = vcombine.high %v3496, 0.0
        %v3507 = vcombine.high %v3503, 0.0
        %v3508 = vcombine.low %v3480, %v3487
        %v3510 = vunpack.c.l.s4 1983009808
        %v3511 = vunpack.c.0.s8 %v3510
        %v3512 = vlaneseq
        %v3513 = vshrl.u32 %v3512, 7
        %v3514 = vsub.s32 %v3511, %v3513
        %v3515 = vrot.slane %v3508, %v3514
        %v3516 = vcombine.low %v3504, %v3505
        %v3518 = vunpack.c.l.s4 1983009808
        %v3519 = vunpack.c.0.s8 %v3518
        %v3520 = vlaneseq
        %v3521 = vshrl.u32 %v3520, 7
        %v3522 = vsub.s32 %v3519, %v3521
        %v3523 = vrot.slane %v3516, %v3522
        %v3524 = vcombine.low %v3496, %v3503
        %v3526 = vunpack.c.l.s4 1983009808
        %v3527 = vunpack.c.0.s8 %v3526
        %v3528 = vlaneseq
        %v3529 = vshrl.u32 %v3528, 7
        %v3530 = vsub.s32 %v3527, %v3529
        %v3531 = vrot.slane %v3524, %v3530
        %v3532 = vcombine.low %v3506, %v3507
        %v3534 = vunpack.c.l.s4 1983009808
        %v3535 = vunpack.c.0.s8 %v3534
        %v3536 = vlaneseq
        %v3537 = vshrl.u32 %v3536, 7
        %v3538 = vsub.s32 %v3535, %v3537
        %v3539 = vrot.slane %v3532, %v3538
        %v3540 = vcombine.low %v3515, %v3523
        %v3541 = vcombine.high %v3515, %v3523
        %v3543 = vunpack.c.l.s4 1934713408
        %v3544 = vunpack.c.0.s8 %v3543
        %v3545 = vlaneseq
        %v3546 = vshrl.u32 %v3545, 7
        %v3547 = vsub.s32 %v3544, %v3546
        %v3548 = vrot.slane %v3540, %v3547
        %v3550 = vunpack.c.l.s4 1934713408
        %v3551 = vunpack.c.0.s8 %v3550
        %v3552 = vlaneseq
        %v3553 = vshrl.u32 %v3552, 7
        %v3554 = vsub.s32 %v3551, %v3553
        %v3555 = vrot.slane %v3541, %v3554
        %v3556 = vcombine.low %v3531, %v3539
        %v3557 = vcombine.high %v3531, %v3539
        %v3559 = vunpack.c.l.s4 1934713408
        %v3560 = vunpack.c.0.s8 %v3559
        %v3561 = vlaneseq
        %v3562 = vshrl.u32 %v3561, 7
        %v3563 = vsub.s32 %v3560, %v3562
        %v3564 = vrot.slane %v3556, %v3563
        %v3566 = vunpack.c.l.s4 1934713408
        %v3567 = vunpack.c.0.s8 %v3566
        %v3568 = vlaneseq
        %v3569 = vshrl.u32 %v3568, 7
        %v3570 = vsub.s32 %v3567, %v3569
        %v3571 = vrot.slane %v3557, %v3570
        %v3572 = vcombine.low %v3548, %v3564
        %v3573 = vcombine.high %v3548, %v3564
        %v3574 = vcombine.low %v3555, %v3571
        %v3575 = vcombine.high %v3555, %v3571
        %3577 = vrot.lane.b32.xlu0 %v3573, 8
        %v3578 = vpop.permute.xlu0 %3577
        %3581 = vrot.lane.b32.xlu0 %v3574, 16
        %v3582 = vpop.permute.xlu0 %3581
        %3585 = vrot.lane.b32.xlu0 %v3575, 24
        %v3586 = vpop.permute.xlu0 %3585
        %v3588 = vsel %vm1710, %v3572, %v3578
        %v3589 = vsel %vm2287, %v3588, %v3582
        %v3590 = vsel %vm2289, %v3589, %v3586
        %v3591 = vpack.c.bf16 %v3590, %v3590
        %v3593 = vlaneseq
        %v3594 = vshrl.u32 %v3593, 7
        %v3595 = vsub.s32 0, %v3594
        %v3596 = vrot.slane %v2400, %v3595
        %v3602 = vunpack.c.l.b16 %v2396
        %v3603 = vunpack.c.l.b16 %v2397
        %v3604 = vunpack.c.l.b16 %v2398
        %v3605 = vunpack.c.l.b16 %v2399
        %v3606 = vpack.c.b16 %v3603, %v3602
        %v3607 = vpack.c.b16 %v3605, %v3604
        %v3611 = vsel %vm1109, %v3591, 0
        %3613 = vmatprep.subr.bf16.mxu0 0
        %3614 = vmatpush1.bf16.msra.mxu0 %v3606
        %3615 = vmatprep.subr.bf16.mxu0 0
        %3616 = vmatpush1.bf16.msra.mxu0 %v3607
        %3617 = vmatprep.subr.bf16.mxu0 0
        %3618 = vmatpush1.bf16.msra.mxu0 0
        %3619 = vmatprep.subr.bf16.mxu0 0
        %3620 = vmatpush1.bf16.msra.mxu0 0
        %3621 = vmatprep.subr.bf16.mxu0 0
        %3622 = vmatpush1.bf16.msra.mxu0 0
        %3623 = vmatprep.subr.bf16.mxu0 0
        %3624 = vmatpush1.bf16.msra.mxu0 0
        %3625 = vmatprep.subr.bf16.mxu0 0
        %3626 = vmatpush1.bf16.msra.mxu0 0
        %3627 = vmatprep.subr.bf16.mxu0 0
        %3628 = vmatpush1.bf16.msra.mxu0 0
        %3629 = vmatprep.subr.bf16.mxu0 0
        %3630 = vmatpush1.bf16.msra.mxu0 0
        %3631 = vmatprep.subr.bf16.mxu0 0
        %3632 = vmatpush1.bf16.msra.mxu0 0
        %3633 = vmatprep.subr.bf16.mxu0 0
        %3634 = vmatpush1.bf16.msra.mxu0 0
        %3635 = vmatprep.subr.bf16.mxu0 0
        %3636 = vmatpush1.bf16.msra.mxu0 0
        %3637 = vmatprep.subr.bf16.mxu0 0
        %3638 = vmatpush1.bf16.msra.mxu0 0
        %3639 = vmatprep.subr.bf16.mxu0 0
        %3640 = vmatpush1.bf16.msra.mxu0 0
        %3641 = vmatprep.subr.bf16.mxu0 0
        %3642 = vmatpush1.bf16.msra.mxu0 0
        %3643 = vmatprep.subr.bf16.mxu0 0
        %3644 = vmatpush1.bf16.msra.mxu0 0
        %3645 = vmatprep.mubr.bf16.mxu0 0
        %3646 = vmatmul.mubr.bf16.gmra.mrb[0].mxu0 %v3611
        %v3647 = vpop.f32.mrb[0].mxu0
        %v3648 = vadd.f32 %v3596, %v3647
        %v3649 = vpop.f32.mrb[0].mxu0
        %v3650 = vpop.f32.mrb[0].mxu0
        %v3651 = vpop.f32.mrb[0].mxu0
        %3652 = vdwg.mxu0
        %v3653 = vadd.f32 %v2383, %v3648
        %v3654 = vld [vmem:[%s21] sm:$0x1]
        %v3655 = vld [vmem:[%s22] sm:$0x1]
        %v3656 = vsel %vm1109, %v3653, 0.0
        %3657 = vadd.xlane.f32.xlu0 %v3656
        %v3658 = vpop.xlane.xlu0 %3657
        %v3659 = vmul.f32 %v3658, %v2359
        %v3660 = vsub.f32 %v3653, %v3659
        %v3661 = vmul.f32 %v3660, %v3660
        %v3662 = vsel %vm1109, %v3661, 0.0
        %3663 = vadd.xlane.f32.xlu0 %v3662
        %v3664 = vpop.xlane.xlu0 %3663
        %v3665 = vmul.f32 %v3664, %v2359
        %v3666 = vadd.f32 %v3665, 0.001
        %v3667 = vrsqrt.pop %v3666
        %v3668 = vmul.f32 %v3660, %v3667
        %v3670 = vlaneseq
        %v3671 = vshrl.u32 %v3670, 7
        %v3672 = vsub.s32 0, %v3671
        %v3673 = vrot.slane %v3654, %v3672
        %v3675 = vmul.f32 %v3668, %v3673
        %v3677 = vlaneseq
        %v3678 = vshrl.u32 %v3677, 7
        %v3679 = vsub.s32 0, %v3678
        %v3680 = vrot.slane %v3655, %v3679
        %v3682 = vadd.f32 %v3675, %v3680
        %v3683 = vpack.c.bf16 %v3682, %v3682
        %v3684 = vld [vmem:[#allocation17] sm:$0xf]
        %v3685 = vld [vmem:[#allocation17 + $0x4] sm:$0xf]
        %v3686 = vld [vmem:[#allocation17 + $0x8] sm:$0xf]
        %v3687 = vld [vmem:[#allocation17 + $0xc] sm:$0xf]
        %v3688 = vld [vmem:[#allocation19] sm:$0x1]
        %v3690 = vlaneseq
        %v3691 = vshrl.u32 %v3690, 7
        %v3692 = vsub.s32 0, %v3691
        %v3693 = vrot.slane %v3688, %v3692
        %v3699 = vunpack.c.l.b16 %v3684
        %v3700 = vunpack.c.l.b16 %v3685
        %v3701 = vunpack.c.l.b16 %v3686
        %v3702 = vunpack.c.l.b16 %v3687
        %v3703 = vpack.c.b16 %v3700, %v3699
        %v3704 = vpack.c.b16 %v3702, %v3701
        %v3708 = vsel %vm1109, %v3683, 0
        %3710 = vmatprep.subr.bf16.mxu0 0
        %3711 = vmatpush1.bf16.msra.mxu0 %v3703
        %3712 = vmatprep.subr.bf16.mxu0 0
        %3713 = vmatpush1.bf16.msra.mxu0 %v3704
        %3714 = vmatprep.subr.bf16.mxu0 0
        %3715 = vmatpush1.bf16.msra.mxu0 0
        %3716 = vmatprep.subr.bf16.mxu0 0
        %3717 = vmatpush1.bf16.msra.mxu0 0
        %3718 = vmatprep.subr.bf16.mxu0 0
        %3719 = vmatpush1.bf16.msra.mxu0 0
        %3720 = vmatprep.subr.bf16.mxu0 0
        %3721 = vmatpush1.bf16.msra.mxu0 0
        %3722 = vmatprep.subr.bf16.mxu0 0
        %3723 = vmatpush1.bf16.msra.mxu0 0
        %3724 = vmatprep.subr.bf16.mxu0 0
        %3725 = vmatpush1.bf16.msra.mxu0 0
        %3726 = vmatprep.subr.bf16.mxu0 0
        %3727 = vmatpush1.bf16.msra.mxu0 0
        %3728 = vmatprep.subr.bf16.mxu0 0
        %3729 = vmatpush1.bf16.msra.mxu0 0
        %3730 = vmatprep.subr.bf16.mxu0 0
        %3731 = vmatpush1.bf16.msra.mxu0 0
        %3732 = vmatprep.subr.bf16.mxu0 0
        %3733 = vmatpush1.bf16.msra.mxu0 0
        %3734 = vmatprep.subr.bf16.mxu0 0
        %3735 = vmatpush1.bf16.msra.mxu0 0
        %3736 = vmatprep.subr.bf16.mxu0 0
        %3737 = vmatpush1.bf16.msra.mxu0 0
        %3738 = vmatprep.subr.bf16.mxu0 0
        %3739 = vmatpush1.bf16.msra.mxu0 0
        %3740 = vmatprep.subr.bf16.mxu0 0
        %3741 = vmatpush1.bf16.msra.mxu0 0
        %3742 = vmatprep.mubr.bf16.mxu0 0
        %3743 = vmatmul.mubr.bf16.gmra.mrb[0].mxu0 %v3708
        %v3744 = vpop.f32.mrb[0].mxu0
        %v3745 = vadd.f32 %v3693, %v3744
        %v3746 = vpop.f32.mrb[0].mxu0
        %v3747 = vpop.f32.mrb[0].mxu0
        %v3748 = vpop.f32.mrb[0].mxu0
        %3749 = vdwg.mxu0
        %v3750 = vmax.f32 %v3745, 0.0
        %v3751 = vpack.c.bf16 %v3750, %v3750
        %v3752 = vld [vmem:[%s17] sm:$0xf]
        %v3753 = vld [vmem:[%s17 + $0x4] sm:$0xf]
        %v3754 = vld [vmem:[%s17 + $0x8] sm:$0xf]
        %v3755 = vld [vmem:[%s17 + $0xc] sm:$0xf]
        %v3756 = vld [vmem:[%s17 + $0x10] sm:$0xf]
        %v3757 = vld [vmem:[%s17 + $0x14] sm:$0xf]
        %v3758 = vld [vmem:[%s17 + $0x18] sm:$0xf]
        %v3759 = vld [vmem:[%s17 + $0x1c] sm:$0xf]
        %v3760 = vld [vmem:[%s18] sm:$0x1]
        %v3762 = vlaneseq
        %v3763 = vshrl.u32 %v3762, 7
        %v3764 = vsub.s32 0, %v3763
        %v3765 = vrot.slane %v3760, %v3764
        %v3775 = vunpack.c.l.b16 %v3752
        %v3776 = vunpack.c.l.b16 %v3753
        %v3777 = vunpack.c.l.b16 %v3754
        %v3778 = vunpack.c.l.b16 %v3755
        %v3779 = vunpack.c.l.b16 %v3756
        %v3780 = vunpack.c.l.b16 %v3757
        %v3781 = vunpack.c.l.b16 %v3758
        %v3782 = vunpack.c.l.b16 %v3759
        %v3783 = vpack.c.b16 %v3776, %v3775
        %v3784 = vpack.c.b16 %v3778, %v3777
        %v3785 = vpack.c.b16 %v3780, %v3779
        %v3786 = vpack.c.b16 %v3782, %v3781
        %vm3791 = vcmask 523264
        %v3793 = vsel %vm3791, %v3751, 0
        %3795 = vmatprep.subr.bf16.mxu0 0
        %3796 = vmatpush1.bf16.msra.mxu0 %v3783
        %3797 = vmatprep.subr.bf16.mxu0 0
        %3798 = vmatpush1.bf16.msra.mxu0 %v3784
        %3799 = vmatprep.subr.bf16.mxu0 0
        %3800 = vmatpush1.bf16.msra.mxu0 %v3785
        %3801 = vmatprep.subr.bf16.mxu0 0
        %3802 = vmatpush1.bf16.msra.mxu0 %v3786
        %3803 = vmatprep.subr.bf16.mxu0 0
        %3804 = vmatpush1.bf16.msra.mxu0 0
        %3805 = vmatprep.subr.bf16.mxu0 0
        %3806 = vmatpush1.bf16.msra.mxu0 0
        %3807 = vmatprep.subr.bf16.mxu0 0
        %3808 = vmatpush1.bf16.msra.mxu0 0
        %3809 = vmatprep.subr.bf16.mxu0 0
        %3810 = vmatpush1.bf16.msra.mxu0 0
        %3811 = vmatprep.subr.bf16.mxu0 0
        %3812 = vmatpush1.bf16.msra.mxu0 0
        %3813 = vmatprep.subr.bf16.mxu0 0
        %3814 = vmatpush1.bf16.msra.mxu0 0
        %3815 = vmatprep.subr.bf16.mxu0 0
        %3816 = vmatpush1.bf16.msra.mxu0 0
        %3817 = vmatprep.subr.bf16.mxu0 0
        %3818 = vmatpush1.bf16.msra.mxu0 0
        %3819 = vmatprep.subr.bf16.mxu0 0
        %3820 = vmatpush1.bf16.msra.mxu0 0
        %3821 = vmatprep.subr.bf16.mxu0 0
        %3822 = vmatpush1.bf16.msra.mxu0 0
        %3823 = vmatprep.subr.bf16.mxu0 0
        %3824 = vmatpush1.bf16.msra.mxu0 0
        %3825 = vmatprep.subr.bf16.mxu0 0
        %3826 = vmatpush1.bf16.msra.mxu0 0
        %3827 = vmatprep.mubr.bf16.mxu0 0
        %3828 = vmatmul.mubr.bf16.gmra.mrb[0].mxu0 %v3793
        %v3829 = vpop.f32.mrb[0].mxu0
        %v3830 = vadd.f32 %v3765, %v3829
        %v3831 = vpop.f32.mrb[0].mxu0
        %v3832 = vpop.f32.mrb[0].mxu0
        %v3833 = vpop.f32.mrb[0].mxu0
        %3834 = vdwg.mxu0
        %v3835 = vadd.f32 %v3682, %v3830
        %v3836 = vld [vmem:[%s23] sm:$0x1]
        %v3837 = vld [vmem:[%s24] sm:$0x1]
        %v3838 = vsel %vm1109, %v3835, 0.0
        %3839 = vadd.xlane.f32.xlu0 %v3838
        %v3840 = vpop.xlane.xlu0 %3839
        %v3841 = vmul.f32 %v3840, %v2359
        %v3842 = vsub.f32 %v3835, %v3841
        %v3843 = vmul.f32 %v3842, %v3842
        %v3844 = vsel %vm1109, %v3843, 0.0
        %3845 = vadd.xlane.f32.xlu0 %v3844
        %v3846 = vpop.xlane.xlu0 %3845
        %v3847 = vmul.f32 %v3846, %v2359
        %v3848 = vadd.f32 %v3847, 0.001
        %v3849 = vrsqrt.pop %v3848
        %v3850 = vmul.f32 %v3842, %v3849
        %v3852 = vlaneseq
        %v3853 = vshrl.u32 %v3852, 7
        %v3854 = vsub.s32 0, %v3853
        %v3855 = vrot.slane %v3836, %v3854
        %v3857 = vmul.f32 %v3850, %v3855
        %v3859 = vlaneseq
        %v3860 = vshrl.u32 %v3859, 7
        %v3861 = vsub.s32 0, %v3860
        %v3862 = vrot.slane %v3837, %v3861
        %v3864 = vadd.f32 %v3857, %v3862
        %3865 = vst.msk [vmem:[%s1056] sm:$0xff] %vm1109, %v3864
        %vm3866 = vcmask 60416
        %3867 = vst.msk [vmem:[%s1063] sm:$0xf] %vm3866, %v3252
        %3868 = vst.msk [vmem:[%s1063 + $0x4] sm:$0xf] %vm3866, %v3253
        %3869 = vst.msk [vmem:[%s1063 + $0x8] sm:$0xf] %vm3866, %v3254
        %3870 = vst.msk [vmem:[%s1063 + $0xc] sm:$0xf] %vm3866, %v3255
        %s3871 = sand.u32 %s634, 1
        %s3872 = scalar_lea.sflag [#allocation4], %s3871
        %s3873 = sand.u32 %s634, 1
        %s3874 = smul.addr %s3873, 8
        %s3875 = scalar_lea.vmem [#allocation20], %s3874
        %s3876 = sand.u32 %s662, 1
        %s3877 = scalar_lea.sflag [#allocation22], %s3876
        %s3878 = sand.u32 %s662, 1
        %s3879 = smul.addr %s3878, 16
        %s3880 = scalar_lea.vmem [#allocation21], %s3879
        // Predicated region
        $region165: #{tpu_custom_call.1} parent=119 // pred_check
          %p3881 = pneg %p644
        $region166: #{tpu_custom_call.1} parent=119 // pred_check_branch
          %3883 = sbr.rel (%p3881) target = $region168
        $region167: #{tpu_custom_call.1} parent=119 // pred_region
          %s3885 = ssub.s32 128, 128
          %3886 = vsyncadd %s3872, %s3885
          %s3887 = sadd.s32 %s61, %s60
          %s3888 = smul.addr %s3887, 128
          %s3889 = scalar_lea.hbm %s25, %s3888
          %s3891 = sshll.u32 %s3875, 4
          %s3892 = int_to_ptr.vmem [resolvable:$true] %s3891
          %3894 = dma.vmem_to_hbm [thread:$0]  %s3892, 128, %s3889, %s3872
        $region168: #{tpu_custom_call.1} parent=119 // pred_fallthru
          _
        // Predicated region
        $region169: #{tpu_custom_call.1} parent=119 // pred_check
          %p3895 = pneg %p672
        $region170: #{tpu_custom_call.1} parent=119 // pred_check_branch
          %3897 = sbr.rel (%p3895) target = $region172
        $region171: #{tpu_custom_call.1} parent=119 // pred_region
          %s3899 = ssub.s32 256, 256
          %3900 = vsyncadd %s3877, %s3899
          %s3901 = smul.addr %s60, 4
          %s3902 = sadd.s32 %s61, %s3901
          %s3903 = smul.addr %s3902, 64
          %s3904 = scalar_lea.hbm %s26, %s3903
          %s3905 = sshll.u32 %s3880, 4
          %s3906 = int_to_ptr.vmem [resolvable:$true] %s3905
          %3911 = dma.vmem_to_hbm [thread:$0]  %s3906, 256, %s3904, %s3877, 64, 64, 4
        $region172: #{tpu_custom_call.1} parent=119 // pred_fallthru
          _
      $region120: #{tpu_custom_call.1} parent=5 // pred_fallthru
        _
      %p3912 = scmp.le.s32.totalorder 2, %s51
      // Predicated region
      $region173: #{tpu_custom_call.1} parent=5 // pred_check
        %p3913 = pneg %p3912
      $region174: #{tpu_custom_call.1} parent=5 // pred_check_branch
        %3915 = sbr.rel (%p3913) target = $region176
      $region175: #{tpu_custom_call.1} parent=5 // pred_region
        %s3916 = ssub.s32 %s51, 2
        // Predicated region
        $region177: #{tpu_custom_call.1} parent=175 // pred_check
          %p3917 = pneg %p650
        $region178: #{tpu_custom_call.1} parent=175 // pred_check_branch
          %3919 = sbr.rel (%p3917) target = $region180
        $region179: #{tpu_custom_call.1} parent=175 // pred_region
          %s3920 = sand.u32 %s635, 1
          %s3921 = scalar_lea.sflag [#allocation4], %s3920
          %s3922 = sand.u32 %s635, 1
          %s3923 = smul.addr %s3922, 8
          %s3924 = scalar_lea.vmem [#allocation20], %s3923
          %3925 = dma.done %s3921, 128
        $region180: #{tpu_custom_call.1} parent=175 // pred_fallthru
          _
        // Predicated region
        $region181: #{tpu_custom_call.1} parent=175 // pred_check
          %p3926 = pneg %p678
        $region182: #{tpu_custom_call.1} parent=175 // pred_check_branch
          %3928 = sbr.rel (%p3926) target = $region184
        $region183: #{tpu_custom_call.1} parent=175 // pred_region
          %s3929 = sand.u32 %s663, 1
          %s3930 = scalar_lea.sflag [#allocation22], %s3929
          %s3931 = sand.u32 %s663, 1
          %s3932 = smul.addr %s3931, 16
          %s3933 = scalar_lea.vmem [#allocation21], %s3932
          %3934 = dma.done %s3930, 256
        $region184: #{tpu_custom_call.1} parent=175 // pred_fallthru
          _
      $region176: #{tpu_custom_call.1} parent=5 // pred_fallthru
        _
    $region6: #{tpu_custom_call.1} parent=1 // loop_footer
      %s55 = sadd.s32 1, %s51
    $region7: #{tpu_custom_call.1} parent=1 // loop_footer_branch
      %50 = sbr.rel target = $region3
    $region8: #{tpu_custom_call.1} parent=1 // loop_exit
      _
    %3935 = vsyncpa [#allocation3], 1
    %s3936 = scalar_lea.sflag [#allocation3], 1
    %3937 = vsyncpa %s3936, 1
    %3938 = vsyncpa [#allocation6], 1
    %s3939 = scalar_lea.sflag [#allocation6], 1
    %3940 = vsyncpa %s3939, 1
    %3941 = vsyncpa [#allocation9], 1
    %s3942 = scalar_lea.sflag [#allocation9], 1
    %3943 = vsyncpa %s3942, 1
    %3944 = vsyncpa [#allocation12], 1
    %3945 = vsyncpa [#allocation15], 1
    %3946 = vsyncpa [#allocation18], 1
    %3947 = vsyncpa [#allocation4], 1
    %s3948 = scalar_lea.sflag [#allocation4], 1
    %3949 = vsyncpa %s3948, 1
    %3950 = vsyncpa [#allocation22], 1
    %s3951 = scalar_lea.sflag [#allocation22], 1
    %3952 = vsyncpa %s3951, 1

</llo_original>
